<compile_context>
chip_gen: v7x
topology: tpu7x:2x2x1
jax: 0.10.0
libtpu: 0.0.40
codegen_flags: <defaults>
</compile_context>

<pallas_src>
from functools import partial

import jax
import jax.numpy as jnp
from jax import lax
from jax.experimental import pallas as pl
from jax.experimental.pallas import tpu as pltpu


def _round_up(x, m):
    return ((x + m - 1) // m) * m


# ------------------------------ fused layer kernel ------------------------- #

def _gat_layer_kernel(heads, c_out, last,
                      smap_ref, cnt_ref,                 # scalar prefetch (SMEM)
                      xdst_ref, xsrc_ref, adj_ref, wc_ref,
                      asrct_ref, adst_ref, emat_ref, hmix_ref,
                      ws_ref, b_ref,
                      o_ref,
                      m_sc, l_sc, acc_sc):
    # xdst_ref : [TD, Dp]      xsrc_ref : [TS, Dp]      adj_ref : [TD, TS] int8
    # wc_ref   : [Dp, HCp]     asrct_ref: [Hp, Dp]      adst_ref: [Dp, Hp]
    # emat_ref : [Hp, HCp]     hmix_ref : [HCp, Np]     ws_ref  : [Dp, Np]
    # b_ref    : [1, Np]       o_ref    : [TD, Np]
    # scratch  : m_sc/l_sc [TD, Hp], acc_sc [TD, HCp]  (persist across src axis)
    i = pl.program_id(0)
    j = pl.program_id(1)

    @pl.when(j == 0)
    def _init():
        m_sc[...] = jnp.full_like(m_sc, -1e30)
        l_sc[...] = jnp.zeros_like(l_sc)
        acc_sc[...] = jnp.zeros_like(acc_sc)

    # Block-sparse skip: only process src tiles that hold edges for this dst tile.
    @pl.when(j < cnt_ref[i])
    def _block():
        x_src = xsrc_ref[...]
        x_dst = xdst_ref[...]
        on_edge = adj_ref[...] != 0                               # [TD, TS]

        # GATConv shared linear projection of this src tile (MXU).
        x_lin = jnp.dot(x_src, wc_ref[...],
                        preferred_element_type=jnp.float32)       # [TS, HCp]
        # Attention logits produced directly in the orientation they are used
        # (row-oriented for src, column-oriented for dst) -> no transposes.
        alpha_s = lax.dot_general(asrct_ref[...], x_src,
                                  dimension_numbers=(((1,), (1,)), ((), ())),
                                  preferred_element_type=jnp.float32)  # [Hp, TS]
        alpha_d = jnp.dot(x_dst, adst_ref[...],
                          preferred_element_type=jnp.float32)          # [TD, Hp]

        for h in range(heads):                                    # static unroll
            e = alpha_d[:, h:h + 1] + alpha_s[h:h + 1, :]         # [TD, TS]
            e = jnp.where(e > 0, e, 0.2 * e)                      # leaky_relu(0.2)
            e = jnp.where(on_edge, e, -1e30)                      # mask via select
            m_old = m_sc[:, h:h + 1]
            m_new = jnp.maximum(m_old, jnp.max(e, axis=-1, keepdims=True))
            a = jnp.exp(m_old - m_new)                            # online-softmax fix
            p = jnp.exp(e - m_new)                                # masked lanes -> 0
            l_sc[:, h:h + 1] = a * l_sc[:, h:h + 1] + jnp.sum(p, -1, keepdims=True)
            cs = slice(h * c_out, (h + 1) * c_out)
            acc_sc[:, cs] = a * acc_sc[:, cs] + jnp.dot(
                p, x_lin[:, cs], preferred_element_type=jnp.float32)
            m_sc[:, h:h + 1] = m_new

    @pl.when(j == pl.num_programs(1) - 1)
    def _finalize():
        l = jnp.maximum(l_sc[...], 1e-20)                         # [TD, Hp]
        inv = (1.0 / l) if last else pl.reciprocal(l, approx=True)
        # Expand per-head 1/l across that head's channels, normalize, then mix
        # heads (concat -> identity block, mean -> 1/H matrix).  Everything
        # stays lane-dense: no concatenates, unmasked 128-wide store below.
        inv_full = jnp.dot(inv, emat_ref[...],
                           preferred_element_type=jnp.float32)    # [TD, HCp]
        conv = jnp.dot(acc_sc[...] * inv_full, hmix_ref[...],
                       preferred_element_type=jnp.float32)        # [TD, Np]
        skip = jnp.dot(xdst_ref[...], ws_ref[...],
                       preferred_element_type=jnp.float32)        # [TD, Np]
        y = conv + skip + b_ref[...]
        if last:
            col = lax.broadcasted_iota(jnp.int32, y.shape, 1)
            y = jnp.where(col < c_out, y, -1e30)                  # keep pad lanes out
            m = jnp.max(y, axis=-1, keepdims=True)
            z = y - m
            y = z - jnp.log(jnp.sum(jnp.exp(z), axis=-1, keepdims=True))
        else:
            y = jnp.where(y > 0, y, jnp.exp(jnp.minimum(y, 0.0)) - 1.0)   # ELU
            # TODO(synk): F.dropout(p=0.5) omitted -- eval-mode semantics (identity).
        o_ref[...] = y


# ------------------------------ layer wrapper ------------------------------ #

def _block_diag_att(att):
    # att [H, C] -> [H*C, H] with bd[h*C + c, h] = att[h, c]
    H, C = att.shape
    eye = jnp.eye(H, dtype=att.dtype)
    return (att[:, :, None] * eye[:, None, :]).reshape(H * C, H)


def gat_layer(x, adj, p, *, heads, c_out, last, dst_blk=64, src_blk=128):
    """One fused GAT layer.

    Data-layout contract (matching the PyG NeighborSampler): x[:adj.shape[0]]
    are exactly the destination nodes of this layer.
    """
    n_dst, n_src = adj.shape
    assert n_dst <= x.shape[0], "first n_dst rows of x must be the dst nodes"
    d_in = x.shape[1]
    hc = heads * c_out
    n_out = c_out if last else hc

    # (8,128)-aligned padded sizes / tile sizes.  For real GAT_ogb neighborhood
    # sizes, re-derive dst_blk/src_blk from the VMEM budget (smaller on v7x).
    din_p = _round_up(d_in, 128)
    hc_p = _round_up(hc, 128)
    h_p = _round_up(heads, 8)
    nout_p = _round_up(n_out, 128)
    td = min(dst_blk, _round_up(n_dst, 8))
    ts = min(src_blk, _round_up(n_src, 128))
    nd_p = _round_up(n_dst, td)
    ns_p = _round_up(n_src, ts)
    gd, gs = nd_p // td, ns_p // ts

    f32 = jnp.float32
    x_src = jnp.zeros((ns_p, din_p), f32).at[:n_src, :d_in].set(x)
    x_dst = jnp.zeros((nd_p, din_p), f32).at[:n_dst, :d_in].set(x[:n_dst])
    adj_p = jnp.zeros((nd_p, ns_p), jnp.int8).at[:n_dst, :n_src].set(
        adj.astype(jnp.int8))

    # Parameter-side folds (no node data involved; tiny).
    wc = jnp.zeros((din_p, hc_p), f32).at[:d_in, :hc].set(p["w_conv"])
    asrc = p["w_conv"] @ _block_diag_att(p["att_src"])            # [d_in, H]
    adst = p["w_conv"] @ _block_diag_att(p["att_dst"])            # [d_in, H]
    asrct = jnp.zeros((h_p, din_p), f32).at[:heads, :d_in].set(asrc.T)
    adstp = jnp.zeros((din_p, h_p), f32).at[:d_in, :heads].set(adst)
    ws = jnp.zeros((din_p, nout_p), f32).at[:d_in, :n_out].set(p["w_skip"])
    b = jnp.zeros((1, nout_p), f32).at[0, :n_out].set(p["b_conv"] + p["b_skip"])

    # Per-head 1/l expander and head-mixing (concat / mean) matrices.
    col = jnp.arange(hc_p)
    emat = ((col[None, :] // c_out == jnp.arange(h_p)[:, None])
            & (col[None, :] < hc)).astype(f32)                    # [Hp, HCp]
    ocol = jnp.arange(nout_p)
    if last:
        hmix = (((col % c_out)[:, None] == ocol[None, :])
                & (col[:, None] < hc) & (ocol[None, :] < c_out)
                ).astype(f32) / heads                             # head mean
    else:
        hmix = ((col[:, None] == ocol[None, :])
                & (col[:, None] < hc)).astype(f32)                # head concat

    # Block-sparse schedule: per dst tile, the list of non-empty src tiles.
    blk_nnz = adj_p.astype(jnp.int32).reshape(gd, td, gs, ts).sum(axis=(1, 3))
    nonempty = blk_nnz > 0                                        # [gd, gs]
    counts = nonempty.sum(axis=1).astype(jnp.int32)               # [gd]
    key = jnp.where(nonempty, 0, 1) * gs + jnp.arange(gs)[None, :]
    order = jnp.argsort(key, axis=1).astype(jnp.int32)            # non-empty first
    lastv = jnp.take_along_axis(order, jnp.maximum(counts - 1, 0)[:, None], 1)
    smap = jnp.where(jnp.arange(gs)[None, :] < counts[:, None],
                     order, lastv).astype(jnp.int32)              # repeat last -> no extra DMA
    nmax = max(1, int(jnp.max(counts)))                           # src-axis grid length

    edge_blocks = gd * nmax
    cost = pl.CostEstimate(
        flops=int(2 * edge_blocks * (ts * din_p * (hc_p + h_p) + td * din_p * h_p
                                     + heads * td * ts * (c_out + 4))
                  + 2 * gd * td * (din_p * nout_p + h_p * hc_p + hc_p * nout_p)),
        transcendentals=int(edge_blocks * heads * td * ts),
        bytes_accessed=int(adj_p.size + 4 * (edge_blocks * ts * din_p
                                             + gd * td * (din_p + nout_p)
                                             + wc.size + ws.size)))

    grid_spec = pltpu.PrefetchScalarGridSpec(
        num_scalar_prefetch=2,
        grid=(gd, nmax),
        in_specs=[
            pl.BlockSpec((td, din_p), lambda i, j, sm, cn: (i, 0)),         # x_dst
            pl.BlockSpec((ts, din_p), lambda i, j, sm, cn: (sm[i, j], 0)),  # x_src
            pl.BlockSpec((td, ts), lambda i, j, sm, cn: (i, sm[i, j])),     # adj (int8)
            pl.BlockSpec((din_p, hc_p), lambda i, j, sm, cn: (0, 0)),       # w_conv
            pl.BlockSpec((h_p, din_p), lambda i, j, sm, cn: (0, 0)),        # att_src fold^T
            pl.BlockSpec((din_p, h_p), lambda i, j, sm, cn: (0, 0)),        # att_dst fold
            pl.BlockSpec((h_p, hc_p), lambda i, j, sm, cn: (0, 0)),         # 1/l expander
            pl.BlockSpec((hc_p, nout_p), lambda i, j, sm, cn: (0, 0)),      # head mix
            pl.BlockSpec((din_p, nout_p), lambda i, j, sm, cn: (0, 0)),     # w_skip
            pl.BlockSpec((1, nout_p), lambda i, j, sm, cn: (0, 0)),         # bias
        ],
        out_specs=pl.BlockSpec((td, nout_p), lambda i, j, sm, cn: (i, 0)),
        scratch_shapes=[pltpu.VMEM((td, h_p), jnp.float32),    # running max
                        pltpu.VMEM((td, h_p), jnp.float32),    # running sum
                        pltpu.VMEM((td, hc_p), jnp.float32)])  # running aggregate

    out_p = pl.pallas_call(
        partial(_gat_layer_kernel, heads, c_out, last),
        out_shape=jax.ShapeDtypeStruct((nd_p, nout_p), jnp.float32),
        grid_spec=grid_spec,
        compiler_params=pltpu.CompilerParams(
            dimension_semantics=("parallel", "arbitrary"),
            vmem_limit_bytes=32 * 1024 * 1024),
        cost_estimate=cost,
    )(smap, counts, x_dst, x_src, adj_p, wc, asrct, adstp, emat, hmix, ws, b)

    return out_p[:n_dst, :n_out]


# ------------------------------ model wrapper ------------------------------ #

def init_gat_params(key, in_channels, hidden, out_channels, num_layers, heads):
    params = []
    for i in range(num_layers):
        d_in = in_channels if i == 0 else heads * hidden
        last = i == num_layers - 1
        c = out_channels if last else hidden                  # per-head channels
        n_out = out_channels if last else heads * hidden
        key, k1, k2, k3, k4, k5, k6 = jax.random.split(key, 7)
        params.append(dict(
            w_conv=jax.random.normal(k1, (d_in, heads * c), jnp.float32) * 0.1,
            att_src=jax.random.normal(k2, (heads, c), jnp.float32) * 0.1,
            att_dst=jax.random.normal(k3, (heads, c), jnp.float32) * 0.1,
            b_conv=jax.random.normal(k4, (n_out,), jnp.float32) * 0.01,
            w_skip=jax.random.normal(k5, (d_in, n_out), jnp.float32) * 0.1,
            b_skip=jax.random.normal(k6, (n_out,), jnp.float32) * 0.01,
        ))
    return params


def gat_forward(x, adjs, params, heads, num_layers):
    for i, adj in enumerate(adjs):
        p = params[i]
        last = i == num_layers - 1
        c = p["att_src"].shape[1]
        x = gat_layer(x, adj, p, heads=heads, c_out=c, last=last)
    return x


def gat_forward_ref(x, adjs, params, heads, num_layers):
    # Pure-JAX dense-mask reference (same semantics as the torch module with
    # the bipartite graph expressed as a dense adjacency incl. self-loops).
    for i, adj in enumerate(adjs):
        p = params[i]
        last = i == num_layers - 1
        c = p["att_src"].shape[1]
        n_dst = adj.shape[0]
        x_dst = x[:n_dst]
        xl = (x @ p["w_conv"]).reshape(x.shape[0], heads, c)
        a_src = (xl * p["att_src"][None]).sum(-1)                 # [Ns, H]
        a_dst = ((x_dst @ p["w_conv"]).reshape(n_dst, heads, c)
                 * p["att_dst"][None]).sum(-1)                    # [Nd, H]
        e = a_dst[:, None, :] + a_src[None, :, :]                 # [Nd, Ns, H]
        e = jnp.where(e > 0, e, 0.2 * e)
        e = jnp.where((adj != 0)[:, :, None], e, -jnp.inf)
        alpha = jax.nn.softmax(e, axis=1)
        out = jnp.einsum("dsh,shc->dhc", alpha, xl)               # [Nd, H, C]
        conv = out.mean(axis=1) if last else out.reshape(n_dst, heads * c)
        y = conv + x_dst @ p["w_skip"] + p["b_conv"] + p["b_skip"]
        x = jax.nn.log_softmax(y, axis=-1) if last else jax.nn.elu(y)
    return x


# ---------------------------------- main ----------------------------------- #

if __name__ == "__main__":
    in_channels, hidden, out_channels, num_layers, heads = 100, 8, 4, 2, 4
    n0, n1, n2 = 384, 192, 64   # sampled node counts: hop-0 srcs, hop-0 dsts, hop-1 dsts

    key = jax.random.PRNGKey(0)
    k_x, k_a0, k_a1, k_p = jax.random.split(key, 4)
    x = jax.random.normal(k_x, (n0, in_channels), jnp.float32)

    def make_adj(k, nd, ns):
        # Random sampled bipartite graph (int8).  Edges only land in the first
        # half of the src set so some adjacency blocks are empty (exercises the
        # block-sparse skip path).  Self-loops added (PyG add_self_loops=True).
        m = jax.random.uniform(k, (nd, ns)) < 0.04
        m = jnp.logical_and(m, jnp.arange(ns)[None, :] < ns // 2)
        m = m.at[jnp.arange(nd), jnp.arange(nd)].set(True)
        return m.astype(jnp.int8)

    adjs = [make_adj(k_a0, n1, n0), make_adj(k_a1, n2, n1)]
    params = init_gat_params(k_p, in_channels, hidden, out_channels,
                             num_layers, heads)

    out = gat_forward(x, adjs, params, heads, num_layers)
    out = jax.block_until_ready(out)
    assert out.shape == (n2, out_channels)
    assert bool(jnp.all(jnp.isfinite(out)))

    ref = gat_forward_ref(x, adjs, params, heads, num_layers)
    assert bool(jnp.allclose(out, ref, atol=2e-2, rtol=2e-2)), \
        float(jnp.max(jnp.abs(out - ref)))
    print("KERNEL_OK")
</pallas_src>

<mosaic_0001>
module attributes {stable_mosaic.version = 11 : i64} {
  func.func @_gat_layer_kernel(%arg0: i32, %arg1: i32, %arg2: memref<3x3xi32, #tpu.memory_space<smem>>, %arg3: memref<3xi32, #tpu.memory_space<smem>>, %arg4: memref<64x128xf32, #tpu.memory_space<vmem>>, %arg5: memref<128x128xf32, #tpu.memory_space<vmem>>, %arg6: memref<64x128xi8, #tpu.memory_space<vmem>>, %arg7: memref<128x128xf32, #tpu.memory_space<vmem>>, %arg8: memref<8x128xf32, #tpu.memory_space<vmem>>, %arg9: memref<128x8xf32, #tpu.memory_space<vmem>>, %arg10: memref<8x128xf32, #tpu.memory_space<vmem>>, %arg11: memref<128x128xf32, #tpu.memory_space<vmem>>, %arg12: memref<128x128xf32, #tpu.memory_space<vmem>>, %arg13: memref<1x128xf32, #tpu.memory_space<vmem>>, %arg14: memref<64x128xf32, #tpu.memory_space<vmem>>, %arg15: memref<64x8xf32, #tpu.memory_space<vmem>>, %arg16: memref<64x8xf32, #tpu.memory_space<vmem>>, %arg17: memref<64x128xf32, #tpu.memory_space<vmem>>) attributes {dimension_semantics = [#tpu.dimension_semantics<parallel>, #tpu.dimension_semantics<arbitrary>], iteration_bounds = array<i64: 3, 2>, scalar_prefetch = 2 : i64, scratch_operands = 3 : i64, tpu.core_type = #tpu.core_type<tc>, window_params = [{transform_indices = @transform_0, window_bounds = array<i64: 64, 128>}, {transform_indices = @transform_1, window_bounds = array<i64: 128, 128>}, {transform_indices = @transform_2, window_bounds = array<i64: 64, 128>}, {pipeline_mode = #tpu.pipeline_mode<synchronous>, transform_indices = @transform_3, window_bounds = array<i64: 128, 128>}, {pipeline_mode = #tpu.pipeline_mode<synchronous>, transform_indices = @transform_4, window_bounds = array<i64: 8, 128>}, {pipeline_mode = #tpu.pipeline_mode<synchronous>, transform_indices = @transform_5, window_bounds = array<i64: 128, 8>}, {pipeline_mode = #tpu.pipeline_mode<synchronous>, transform_indices = @transform_6, window_bounds = array<i64: 8, 128>}, {pipeline_mode = #tpu.pipeline_mode<synchronous>, transform_indices = @transform_7, window_bounds = array<i64: 128, 128>}, {pipeline_mode = #tpu.pipeline_mode<synchronous>, transform_indices = @transform_8, window_bounds = array<i64: 128, 128>}, {pipeline_mode = #tpu.pipeline_mode<synchronous>, transform_indices = @transform_9, window_bounds = array<i64: 1, 128>}, {transform_indices = @transform_10, window_bounds = array<i64: 64, 128>}]} {
    %c0_i32 = arith.constant 0 : i32
    %0 = arith.cmpi eq, %arg1, %c0_i32 : i32
    %1 = arith.extui %0 : i1 to i32
    %c0_i32_0 = arith.constant 0 : i32
    %2 = arith.cmpi ne, %1, %c0_i32_0 : i32
    scf.if %2 {
      %cst = arith.constant -1.000000e+30 : f32
      %11 = vector.broadcast %cst : f32 to vector<64x8xf32>
      %c0 = arith.constant 0 : index
      %c0_3 = arith.constant 0 : index
      %12 = vector.load %arg15[%c0, %c0_3] : memref<64x8xf32, #tpu.memory_space<vmem>>, vector<64x8xf32>
      tpu.vector_store %arg15[%c0, %c0_3], %11 {strides = array<i32>} : memref<64x8xf32, #tpu.memory_space<vmem>>, vector<64x8xf32>,
      %cst_4 = arith.constant 0.000000e+00 : f32
      %13 = vector.broadcast %cst_4 : f32 to vector<64x8xf32>
      %c0_5 = arith.constant 0 : index
      %c0_6 = arith.constant 0 : index
      %14 = vector.load %arg16[%c0_5, %c0_6] : memref<64x8xf32, #tpu.memory_space<vmem>>, vector<64x8xf32>
      tpu.vector_store %arg16[%c0_5, %c0_6], %13 {strides = array<i32>} : memref<64x8xf32, #tpu.memory_space<vmem>>, vector<64x8xf32>,
      %cst_7 = arith.constant 0.000000e+00 : f32
      %15 = vector.broadcast %cst_7 : f32 to vector<64x128xf32>
      %c0_8 = arith.constant 0 : index
      %c0_9 = arith.constant 0 : index
      %16 = vector.load %arg17[%c0_8, %c0_9] : memref<64x128xf32, #tpu.memory_space<vmem>>, vector<64x128xf32>
      tpu.vector_store %arg17[%c0_8, %c0_9], %15 {strides = array<i32>} : memref<64x128xf32, #tpu.memory_space<vmem>>, vector<64x128xf32>,
    } else {
    }
    %3 = arith.index_cast %arg0 : i32 to index
    %4 = memref.load %arg3[%3] : memref<3xi32, #tpu.memory_space<smem>>
    %5 = arith.cmpi slt, %arg1, %4 : i32
    %6 = arith.extui %5 : i1 to i32
    %c0_i32_1 = arith.constant 0 : i32
    %7 = arith.cmpi ne, %6, %c0_i32_1 : i32
    scf.if %7 {
      %c0 = arith.constant 0 : index
      %c0_3 = arith.constant 0 : index
      %11 = vector.load %arg5[%c0, %c0_3] : memref<128x128xf32, #tpu.memory_space<vmem>>, vector<128x128xf32>
      %c0_4 = arith.constant 0 : index
      %c0_5 = arith.constant 0 : index
      %12 = vector.load %arg4[%c0_4, %c0_5] : memref<64x128xf32, #tpu.memory_space<vmem>>, vector<64x128xf32>
      %c0_6 = arith.constant 0 : index
      %c0_7 = arith.constant 0 : index
      %13 = vector.load %arg6[%c0_6, %c0_7] : memref<64x128xi8, #tpu.memory_space<vmem>>, vector<64x128xi8>
      %c0_i8 = arith.constant 0 : i8
      %14 = vector.broadcast %c0_i8 : i8 to vector<64x128xi8>
      %15 = arith.cmpi ne, %13, %14 : vector<64x128xi8>
      %c0_8 = arith.constant 0 : index
      %c0_9 = arith.constant 0 : index
      %16 = vector.load %arg7[%c0_8, %c0_9] : memref<128x128xf32, #tpu.memory_space<vmem>>, vector<128x128xf32>
      %cst = arith.constant dense<0.000000e+00> : vector<128x128xf32>
      %17 = tpu.matmul %11, %16, %cst {dimension_numbers = #tpu.dot_dimension_numbers<[1], [0], [0], [1], [0, 0, 1, 1], [], []>} : vector<128x128xf32>, vector<128x128xf32>, vector<128x128xf32> -> vector<128x128xf32>
      %c0_10 = arith.constant 0 : index
      %c0_11 = arith.constant 0 : index
      %18 = vector.load %arg8[%c0_10, %c0_11] : memref<8x128xf32, #tpu.memory_space<vmem>>, vector<8x128xf32>
      %cst_12 = arith.constant dense<0.000000e+00> : vector<8x128xf32>
      %19 = tpu.matmul %18, %11, %cst_12 {dimension_numbers = #tpu.dot_dimension_numbers<[1], [1], [0], [0], [0, 0, 1, 0], [], []>} : vector<8x128xf32>, vector<128x128xf32>, vector<8x128xf32> -> vector<8x128xf32>
      %c0_13 = arith.constant 0 : index
      %c0_14 = arith.constant 0 : index
      %20 = vector.load %arg9[%c0_13, %c0_14] : memref<128x8xf32, #tpu.memory_space<vmem>>, vector<128x8xf32>
      %cst_15 = arith.constant dense<0.000000e+00> : vector<64x8xf32>
      %21 = tpu.matmul %12, %20, %cst_15 {dimension_numbers = #tpu.dot_dimension_numbers<[1], [0], [0], [1], [0, 0, 1, 1], [], []>} : vector<64x128xf32>, vector<128x8xf32>, vector<64x8xf32> -> vector<64x8xf32>
      %22 = vector.extract_strided_slice %21 {offsets = [0, 0], sizes = [64, 1], strides = [1, 1]} : vector<64x8xf32> to vector<64x1xf32>
      %23 = vector.extract_strided_slice %19 {offsets = [0, 0], sizes = [1, 128], strides = [1, 1]} : vector<8x128xf32> to vector<1x128xf32>
      %24 = vector.broadcast %22 : vector<64x1xf32> to vector<64x128xf32>
      %25 = vector.broadcast %23 : vector<1x128xf32> to vector<64x128xf32>
      %26 = arith.addf %24, %25 : vector<64x128xf32>
      %cst_16 = arith.constant 0.000000e+00 : f32
      %27 = vector.broadcast %cst_16 : f32 to vector<64x128xf32>
      %28 = arith.cmpf ogt, %26, %27 : vector<64x128xf32>
      %cst_17 = arith.constant 2.000000e-01 : f32
      %29 = vector.broadcast %cst_17 : f32 to vector<64x128xf32>
      %30 = arith.mulf %29, %26 : vector<64x128xf32>
      %31 = arith.select %28, %26, %30 : vector<64x128xi1>, vector<64x128xf32>
      %cst_18 = arith.constant -1.000000e+30 : f32
      %32 = vector.broadcast %cst_18 : f32 to vector<64x128xf32>
      %33 = arith.select %15, %31, %32 : vector<64x128xi1>, vector<64x128xf32>
      %c0_19 = arith.constant 0 : index
      %c0_20 = arith.constant 0 : index
      %34 = vector.load %arg15[%c0_19, %c0_20] : memref<64x8xf32, #tpu.memory_space<vmem>>, vector<64x1xf32>
      %cst_21 = arith.constant dense<0xFF800000> : vector<64xf32>
      %35 = vector.multi_reduction <maximumf>, %33, %cst_21 [1] : vector<64x128xf32> to vector<64xf32>
      %36 = vector.shape_cast %35 : vector<64xf32> to vector<64x1xf32>
      %37 = arith.maximumf %34, %36 : vector<64x1xf32>
      %38 = arith.subf %34, %37 : vector<64x1xf32>
      %39 = math.exp %38 : vector<64x1xf32>
      %40 = vector.broadcast %37 : vector<64x1xf32> to vector<64x128xf32>
      %41 = arith.subf %33, %40 : vector<64x128xf32>
      %42 = math.exp %41 : vector<64x128xf32>
      %c0_22 = arith.constant 0 : index
      %c0_23 = arith.constant 0 : index
      %43 = vector.load %arg16[%c0_22, %c0_23] : memref<64x8xf32, #tpu.memory_space<vmem>>, vector<64x1xf32>
      %44 = arith.mulf %39, %43 : vector<64x1xf32>
      %cst_24 = arith.constant dense<0.000000e+00> : vector<64xf32>
      %45 = vector.multi_reduction <add>, %42, %cst_24 [1] : vector<64x128xf32> to vector<64xf32>
      %46 = vector.shape_cast %45 : vector<64xf32> to vector<64x1xf32>
      %47 = arith.addf %44, %46 : vector<64x1xf32>
      %c0_25 = arith.constant 0 : index
      %c0_26 = arith.constant 0 : index
      %48 = vector.load %arg16[%c0_25, %c0_26] : memref<64x8xf32, #tpu.memory_space<vmem>>, vector<64x1xf32>
      tpu.vector_store %arg16[%c0_25, %c0_26], %47 {strides = array<i32>} : memref<64x8xf32, #tpu.memory_space<vmem>>, vector<64x1xf32>,
      %c0_27 = arith.constant 0 : index
      %c0_28 = arith.constant 0 : index
      %49 = vector.load %arg17[%c0_27, %c0_28] : memref<64x128xf32, #tpu.memory_space<vmem>>, vector<64x8xf32>
      %50 = vector.broadcast %39 : vector<64x1xf32> to vector<64x8xf32>
      %51 = arith.mulf %50, %49 : vector<64x8xf32>
      %52 = vector.extract_strided_slice %17 {offsets = [0, 0], sizes = [128, 8], strides = [1, 1]} : vector<128x128xf32> to vector<128x8xf32>
      %cst_29 = arith.constant dense<0.000000e+00> : vector<64x8xf32>
      %53 = tpu.matmul %42, %52, %cst_29 {dimension_numbers = #tpu.dot_dimension_numbers<[1], [0], [0], [1], [0, 0, 1, 1], [], []>} : vector<64x128xf32>, vector<128x8xf32>, vector<64x8xf32> -> vector<64x8xf32>
      %54 = arith.addf %51, %53 : vector<64x8xf32>
      %c0_30 = arith.constant 0 : index
      %c0_31 = arith.constant 0 : index
      %55 = vector.load %arg17[%c0_30, %c0_31] : memref<64x128xf32, #tpu.memory_space<vmem>>, vector<64x8xf32>
      tpu.vector_store %arg17[%c0_30, %c0_31], %54 {strides = array<i32>} : memref<64x128xf32, #tpu.memory_space<vmem>>, vector<64x8xf32>,
      %c0_32 = arith.constant 0 : index
      %c0_33 = arith.constant 0 : index
      %56 = vector.load %arg15[%c0_32, %c0_33] : memref<64x8xf32, #tpu.memory_space<vmem>>, vector<64x1xf32>
      tpu.vector_store %arg15[%c0_32, %c0_33], %37 {strides = array<i32>} : memref<64x8xf32, #tpu.memory_space<vmem>>, vector<64x1xf32>,
      %57 = vector.extract_strided_slice %21 {offsets = [0, 1], sizes = [64, 1], strides = [1, 1]} : vector<64x8xf32> to vector<64x1xf32>
      %58 = vector.extract_strided_slice %19 {offsets = [1, 0], sizes = [1, 128], strides = [1, 1]} : vector<8x128xf32> to vector<1x128xf32>
      %59 = vector.broadcast %57 : vector<64x1xf32> to vector<64x128xf32>
      %60 = vector.broadcast %58 : vector<1x128xf32> to vector<64x128xf32>
      %61 = arith.addf %59, %60 : vector<64x128xf32>
      %cst_34 = arith.constant 0.000000e+00 : f32
      %62 = vector.broadcast %cst_34 : f32 to vector<64x128xf32>
      %63 = arith.cmpf ogt, %61, %62 : vector<64x128xf32>
      %cst_35 = arith.constant 2.000000e-01 : f32
      %64 = vector.broadcast %cst_35 : f32 to vector<64x128xf32>
      %65 = arith.mulf %64, %61 : vector<64x128xf32>
      %66 = arith.select %63, %61, %65 : vector<64x128xi1>, vector<64x128xf32>
      %cst_36 = arith.constant -1.000000e+30 : f32
      %67 = vector.broadcast %cst_36 : f32 to vector<64x128xf32>
      %68 = arith.select %15, %66, %67 : vector<64x128xi1>, vector<64x128xf32>
      %c0_37 = arith.constant 0 : index
      %c1 = arith.constant 1 : index
      %69 = vector.load %arg15[%c0_37, %c1] : memref<64x8xf32, #tpu.memory_space<vmem>>, vector<64x1xf32>
      %cst_38 = arith.constant dense<0xFF800000> : vector<64xf32>
      %70 = vector.multi_reduction <maximumf>, %68, %cst_38 [1] : vector<64x128xf32> to vector<64xf32>
      %71 = vector.shape_cast %70 : vector<64xf32> to vector<64x1xf32>
      %72 = arith.maximumf %69, %71 : vector<64x1xf32>
      %73 = arith.subf %69, %72 : vector<64x1xf32>
      %74 = math.exp %73 : vector<64x1xf32>
      %75 = vector.broadcast %72 : vector<64x1xf32> to vector<64x128xf32>
      %76 = arith.subf %68, %75 : vector<64x128xf32>
      %77 = math.exp %76 : vector<64x128xf32>
      %c0_39 = arith.constant 0 : index
      %c1_40 = arith.constant 1 : index
      %78 = vector.load %arg16[%c0_39, %c1_40] : memref<64x8xf32, #tpu.memory_space<vmem>>, vector<64x1xf32>
      %79 = arith.mulf %74, %78 : vector<64x1xf32>
      %cst_41 = arith.constant dense<0.000000e+00> : vector<64xf32>
      %80 = vector.multi_reduction <add>, %77, %cst_41 [1] : vector<64x128xf32> to vector<64xf32>
      %81 = vector.shape_cast %80 : vector<64xf32> to vector<64x1xf32>
      %82 = arith.addf %79, %81 : vector<64x1xf32>
      %c0_42 = arith.constant 0 : index
      %c1_43 = arith.constant 1 : index
      %83 = vector.load %arg16[%c0_42, %c1_43] : memref<64x8xf32, #tpu.memory_space<vmem>>, vector<64x1xf32>
      tpu.vector_store %arg16[%c0_42, %c1_43], %82 {strides = array<i32>} : memref<64x8xf32, #tpu.memory_space<vmem>>, vector<64x1xf32>,
      %c0_44 = arith.constant 0 : index
      %c8 = arith.constant 8 : index
      %84 = vector.load %arg17[%c0_44, %c8] : memref<64x128xf32, #tpu.memory_space<vmem>>, vector<64x8xf32>
      %85 = vector.broadcast %74 : vector<64x1xf32> to vector<64x8xf32>
      %86 = arith.mulf %85, %84 : vector<64x8xf32>
      %87 = vector.extract_strided_slice %17 {offsets = [0, 8], sizes = [128, 8], strides = [1, 1]} : vector<128x128xf32> to vector<128x8xf32>
      %cst_45 = arith.constant dense<0.000000e+00> : vector<64x8xf32>
      %88 = tpu.matmul %77, %87, %cst_45 {dimension_numbers = #tpu.dot_dimension_numbers<[1], [0], [0], [1], [0, 0, 1, 1], [], []>} : vector<64x128xf32>, vector<128x8xf32>, vector<64x8xf32> -> vector<64x8xf32>
      %89 = arith.addf %86, %88 : vector<64x8xf32>
      %c0_46 = arith.constant 0 : index
      %c8_47 = arith.constant 8 : index
      %90 = vector.load %arg17[%c0_46, %c8_47] : memref<64x128xf32, #tpu.memory_space<vmem>>, vector<64x8xf32>
      tpu.vector_store %arg17[%c0_46, %c8_47], %89 {strides = array<i32>} : memref<64x128xf32, #tpu.memory_space<vmem>>, vector<64x8xf32>,
      %c0_48 = arith.constant 0 : index
      %c1_49 = arith.constant 1 : index
      %91 = vector.load %arg15[%c0_48, %c1_49] : memref<64x8xf32, #tpu.memory_space<vmem>>, vector<64x1xf32>
      tpu.vector_store %arg15[%c0_48, %c1_49], %72 {strides = array<i32>} : memref<64x8xf32, #tpu.memory_space<vmem>>, vector<64x1xf32>,
      %92 = vector.extract_strided_slice %21 {offsets = [0, 2], sizes = [64, 1], strides = [1, 1]} : vector<64x8xf32> to vector<64x1xf32>
      %93 = vector.extract_strided_slice %19 {offsets = [2, 0], sizes = [1, 128], strides = [1, 1]} : vector<8x128xf32> to vector<1x128xf32>
      %94 = vector.broadcast %92 : vector<64x1xf32> to vector<64x128xf32>
      %95 = vector.broadcast %93 : vector<1x128xf32> to vector<64x128xf32>
      %96 = arith.addf %94, %95 : vector<64x128xf32>
      %cst_50 = arith.constant 0.000000e+00 : f32
      %97 = vector.broadcast %cst_50 : f32 to vector<64x128xf32>
      %98 = arith.cmpf ogt, %96, %97 : vector<64x128xf32>
      %cst_51 = arith.constant 2.000000e-01 : f32
      %99 = vector.broadcast %cst_51 : f32 to vector<64x128xf32>
      %100 = arith.mulf %99, %96 : vector<64x128xf32>
      %101 = arith.select %98, %96, %100 : vector<64x128xi1>, vector<64x128xf32>
      %cst_52 = arith.constant -1.000000e+30 : f32
      %102 = vector.broadcast %cst_52 : f32 to vector<64x128xf32>
      %103 = arith.select %15, %101, %102 : vector<64x128xi1>, vector<64x128xf32>
      %c0_53 = arith.constant 0 : index
      %c2 = arith.constant 2 : index
      %104 = vector.load %arg15[%c0_53, %c2] : memref<64x8xf32, #tpu.memory_space<vmem>>, vector<64x1xf32>
      %cst_54 = arith.constant dense<0xFF800000> : vector<64xf32>
      %105 = vector.multi_reduction <maximumf>, %103, %cst_54 [1] : vector<64x128xf32> to vector<64xf32>
      %106 = vector.shape_cast %105 : vector<64xf32> to vector<64x1xf32>
      %107 = arith.maximumf %104, %106 : vector<64x1xf32>
      %108 = arith.subf %104, %107 : vector<64x1xf32>
      %109 = math.exp %108 : vector<64x1xf32>
      %110 = vector.broadcast %107 : vector<64x1xf32> to vector<64x128xf32>
      %111 = arith.subf %103, %110 : vector<64x128xf32>
      %112 = math.exp %111 : vector<64x128xf32>
      %c0_55 = arith.constant 0 : index
      %c2_56 = arith.constant 2 : index
      %113 = vector.load %arg16[%c0_55, %c2_56] : memref<64x8xf32, #tpu.memory_space<vmem>>, vector<64x1xf32>
      %114 = arith.mulf %109, %113 : vector<64x1xf32>
      %cst_57 = arith.constant dense<0.000000e+00> : vector<64xf32>
      %115 = vector.multi_reduction <add>, %112, %cst_57 [1] : vector<64x128xf32> to vector<64xf32>
      %116 = vector.shape_cast %115 : vector<64xf32> to vector<64x1xf32>
      %117 = arith.addf %114, %116 : vector<64x1xf32>
      %c0_58 = arith.constant 0 : index
      %c2_59 = arith.constant 2 : index
      %118 = vector.load %arg16[%c0_58, %c2_59] : memref<64x8xf32, #tpu.memory_space<vmem>>, vector<64x1xf32>
      tpu.vector_store %arg16[%c0_58, %c2_59], %117 {strides = array<i32>} : memref<64x8xf32, #tpu.memory_space<vmem>>, vector<64x1xf32>,
      %c0_60 = arith.constant 0 : index
      %c16 = arith.constant 16 : index
      %119 = vector.load %arg17[%c0_60, %c16] : memref<64x128xf32, #tpu.memory_space<vmem>>, vector<64x8xf32>
      %120 = vector.broadcast %109 : vector<64x1xf32> to vector<64x8xf32>
      %121 = arith.mulf %120, %119 : vector<64x8xf32>
      %122 = vector.extract_strided_slice %17 {offsets = [0, 16], sizes = [128, 8], strides = [1, 1]} : vector<128x128xf32> to vector<128x8xf32>
      %cst_61 = arith.constant dense<0.000000e+00> : vector<64x8xf32>
      %123 = tpu.matmul %112, %122, %cst_61 {dimension_numbers = #tpu.dot_dimension_numbers<[1], [0], [0], [1], [0, 0, 1, 1], [], []>} : vector<64x128xf32>, vector<128x8xf32>, vector<64x8xf32> -> vector<64x8xf32>
      %124 = arith.addf %121, %123 : vector<64x8xf32>
      %c0_62 = arith.constant 0 : index
      %c16_63 = arith.constant 16 : index
      %125 = vector.load %arg17[%c0_62, %c16_63] : memref<64x128xf32, #tpu.memory_space<vmem>>, vector<64x8xf32>
      tpu.vector_store %arg17[%c0_62, %c16_63], %124 {strides = array<i32>} : memref<64x128xf32, #tpu.memory_space<vmem>>, vector<64x8xf32>,
      %c0_64 = arith.constant 0 : index
      %c2_65 = arith.constant 2 : index
      %126 = vector.load %arg15[%c0_64, %c2_65] : memref<64x8xf32, #tpu.memory_space<vmem>>, vector<64x1xf32>
      tpu.vector_store %arg15[%c0_64, %c2_65], %107 {strides = array<i32>} : memref<64x8xf32, #tpu.memory_space<vmem>>, vector<64x1xf32>,
      %127 = vector.extract_strided_slice %21 {offsets = [0, 3], sizes = [64, 1], strides = [1, 1]} : vector<64x8xf32> to vector<64x1xf32>
      %128 = vector.extract_strided_slice %19 {offsets = [3, 0], sizes = [1, 128], strides = [1, 1]} : vector<8x128xf32> to vector<1x128xf32>
      %129 = vector.broadcast %127 : vector<64x1xf32> to vector<64x128xf32>
      %130 = vector.broadcast %128 : vector<1x128xf32> to vector<64x128xf32>
      %131 = arith.addf %129, %130 : vector<64x128xf32>
      %cst_66 = arith.constant 0.000000e+00 : f32
      %132 = vector.broadcast %cst_66 : f32 to vector<64x128xf32>
      %133 = arith.cmpf ogt, %131, %132 : vector<64x128xf32>
      %cst_67 = arith.constant 2.000000e-01 : f32
      %134 = vector.broadcast %cst_67 : f32 to vector<64x128xf32>
      %135 = arith.mulf %134, %131 : vector<64x128xf32>
      %136 = arith.select %133, %131, %135 : vector<64x128xi1>, vector<64x128xf32>
      %cst_68 = arith.constant -1.000000e+30 : f32
      %137 = vector.broadcast %cst_68 : f32 to vector<64x128xf32>
      %138 = arith.select %15, %136, %137 : vector<64x128xi1>, vector<64x128xf32>
      %c0_69 = arith.constant 0 : index
      %c3 = arith.constant 3 : index
      %139 = vector.load %arg15[%c0_69, %c3] : memref<64x8xf32, #tpu.memory_space<vmem>>, vector<64x1xf32>
      %cst_70 = arith.constant dense<0xFF800000> : vector<64xf32>
      %140 = vector.multi_reduction <maximumf>, %138, %cst_70 [1] : vector<64x128xf32> to vector<64xf32>
      %141 = vector.shape_cast %140 : vector<64xf32> to vector<64x1xf32>
      %142 = arith.maximumf %139, %141 : vector<64x1xf32>
      %143 = arith.subf %139, %142 : vector<64x1xf32>
      %144 = math.exp %143 : vector<64x1xf32>
      %145 = vector.broadcast %142 : vector<64x1xf32> to vector<64x128xf32>
      %146 = arith.subf %138, %145 : vector<64x128xf32>
      %147 = math.exp %146 : vector<64x128xf32>
      %c0_71 = arith.constant 0 : index
      %c3_72 = arith.constant 3 : index
      %148 = vector.load %arg16[%c0_71, %c3_72] : memref<64x8xf32, #tpu.memory_space<vmem>>, vector<64x1xf32>
      %149 = arith.mulf %144, %148 : vector<64x1xf32>
      %cst_73 = arith.constant dense<0.000000e+00> : vector<64xf32>
      %150 = vector.multi_reduction <add>, %147, %cst_73 [1] : vector<64x128xf32> to vector<64xf32>
      %151 = vector.shape_cast %150 : vector<64xf32> to vector<64x1xf32>
      %152 = arith.addf %149, %151 : vector<64x1xf32>
      %c0_74 = arith.constant 0 : index
      %c3_75 = arith.constant 3 : index
      %153 = vector.load %arg16[%c0_74, %c3_75] : memref<64x8xf32, #tpu.memory_space<vmem>>, vector<64x1xf32>
      tpu.vector_store %arg16[%c0_74, %c3_75], %152 {strides = array<i32>} : memref<64x8xf32, #tpu.memory_space<vmem>>, vector<64x1xf32>,
      %c0_76 = arith.constant 0 : index
      %c24 = arith.constant 24 : index
      %154 = vector.load %arg17[%c0_76, %c24] : memref<64x128xf32, #tpu.memory_space<vmem>>, vector<64x8xf32>
      %155 = vector.broadcast %144 : vector<64x1xf32> to vector<64x8xf32>
      %156 = arith.mulf %155, %154 : vector<64x8xf32>
      %157 = vector.extract_strided_slice %17 {offsets = [0, 24], sizes = [128, 8], strides = [1, 1]} : vector<128x128xf32> to vector<128x8xf32>
      %cst_77 = arith.constant dense<0.000000e+00> : vector<64x8xf32>
      %158 = tpu.matmul %147, %157, %cst_77 {dimension_numbers = #tpu.dot_dimension_numbers<[1], [0], [0], [1], [0, 0, 1, 1], [], []>} : vector<64x128xf32>, vector<128x8xf32>, vector<64x8xf32> -> vector<64x8xf32>
      %159 = arith.addf %156, %158 : vector<64x8xf32>
      %c0_78 = arith.constant 0 : index
      %c24_79 = arith.constant 24 : index
      %160 = vector.load %arg17[%c0_78, %c24_79] : memref<64x128xf32, #tpu.memory_space<vmem>>, vector<64x8xf32>
      tpu.vector_store %arg17[%c0_78, %c24_79], %159 {strides = array<i32>} : memref<64x128xf32, #tpu.memory_space<vmem>>, vector<64x8xf32>,
      %c0_80 = arith.constant 0 : index
      %c3_81 = arith.constant 3 : index
      %161 = vector.load %arg15[%c0_80, %c3_81] : memref<64x8xf32, #tpu.memory_space<vmem>>, vector<64x1xf32>
      tpu.vector_store %arg15[%c0_80, %c3_81], %142 {strides = array<i32>} : memref<64x8xf32, #tpu.memory_space<vmem>>, vector<64x1xf32>,
    } else {
    }
    %c1_i32 = arith.constant 1 : i32
    %8 = arith.cmpi eq, %arg1, %c1_i32 : i32
    %9 = arith.extui %8 : i1 to i32
    %c0_i32_2 = arith.constant 0 : i32
    %10 = arith.cmpi ne, %9, %c0_i32_2 : i32
    scf.if %10 {
      %c0 = arith.constant 0 : index
      %c0_3 = arith.constant 0 : index
      %11 = vector.load %arg16[%c0, %c0_3] : memref<64x8xf32, #tpu.memory_space<vmem>>, vector<64x8xf32>
      %cst = arith.constant 9.99999968E-21 : f32
      %12 = vector.broadcast %cst : f32 to vector<64x8xf32>
      %13 = arith.maximumf %11, %12 : vector<64x8xf32>
      %14 = tpu.reciprocal %13 {approx = true} : vector<64x8xf32> -> vector<64x8xf32>
      %c0_4 = arith.constant 0 : index
      %c0_5 = arith.constant 0 : index
      %15 = vector.load %arg10[%c0_4, %c0_5] : memref<8x128xf32, #tpu.memory_space<vmem>>, vector<8x128xf32>
      %cst_6 = arith.constant dense<0.000000e+00> : vector<64x128xf32>
      %16 = tpu.matmul %14, %15, %cst_6 {dimension_numbers = #tpu.dot_dimension_numbers<[1], [0], [0], [1], [0, 0, 1, 1], [], []>} : vector<64x8xf32>, vector<8x128xf32>, vector<64x128xf32> -> vector<64x128xf32>
      %c0_7 = arith.constant 0 : index
      %c0_8 = arith.constant 0 : index
      %17 = vector.load %arg17[%c0_7, %c0_8] : memref<64x128xf32, #tpu.memory_space<vmem>>, vector<64x128xf32>
      %18 = arith.mulf %17, %16 : vector<64x128xf32>
      %c0_9 = arith.constant 0 : index
      %c0_10 = arith.constant 0 : index
      %19 = vector.load %arg11[%c0_9, %c0_10] : memref<128x128xf32, #tpu.memory_space<vmem>>, vector<128x128xf32>
      %cst_11 = arith.constant dense<0.000000e+00> : vector<64x128xf32>
      %20 = tpu.matmul %18, %19, %cst_11 {dimension_numbers = #tpu.dot_dimension_numbers<[1], [0], [0], [1], [0, 0, 1, 1], [], []>} : vector<64x128xf32>, vector<128x128xf32>, vector<64x128xf32> -> vector<64x128xf32>
      %c0_12 = arith.constant 0 : index
      %c0_13 = arith.constant 0 : index
      %21 = vector.load %arg4[%c0_12, %c0_13] : memref<64x128xf32, #tpu.memory_space<vmem>>, vector<64x128xf32>
      %c0_14 = arith.constant 0 : index
      %c0_15 = arith.constant 0 : index
      %22 = vector.load %arg12[%c0_14, %c0_15] : memref<128x128xf32, #tpu.memory_space<vmem>>, vector<128x128xf32>
      %cst_16 = arith.constant dense<0.000000e+00> : vector<64x128xf32>
      %23 = tpu.matmul %21, %22, %cst_16 {dimension_numbers = #tpu.dot_dimension_numbers<[1], [0], [0], [1], [0, 0, 1, 1], [], []>} : vector<64x128xf32>, vector<128x128xf32>, vector<64x128xf32> -> vector<64x128xf32>
      %24 = arith.addf %20, %23 : vector<64x128xf32>
      %c0_17 = arith.constant 0 : index
      %c0_18 = arith.constant 0 : index
      %25 = vector.load %arg13[%c0_17, %c0_18] : memref<1x128xf32, #tpu.memory_space<vmem>>, vector<1x128xf32>
      %26 = vector.broadcast %25 : vector<1x128xf32> to vector<64x128xf32>
      %27 = arith.addf %24, %26 : vector<64x128xf32>
      %cst_19 = arith.constant 0.000000e+00 : f32
      %28 = vector.broadcast %cst_19 : f32 to vector<64x128xf32>
      %29 = arith.cmpf ogt, %27, %28 : vector<64x128xf32>
      %cst_20 = arith.constant 0.000000e+00 : f32
      %30 = vector.broadcast %cst_20 : f32 to vector<64x128xf32>
      %31 = arith.minimumf %27, %30 : vector<64x128xf32>
      %32 = math.exp %31 : vector<64x128xf32>
      %cst_21 = arith.constant 1.000000e+00 : f32
      %33 = vector.broadcast %cst_21 : f32 to vector<64x128xf32>
      %34 = arith.subf %32, %33 : vector<64x128xf32>
      %35 = arith.select %29, %27, %34 : vector<64x128xi1>, vector<64x128xf32>
      %c0_22 = arith.constant 0 : index
      %c0_23 = arith.constant 0 : index
      %36 = vector.load %arg14[%c0_22, %c0_23] : memref<64x128xf32, #tpu.memory_space<vmem>>, vector<64x128xf32>
      tpu.vector_store %arg14[%c0_22, %c0_23], %35 {strides = array<i32>} : memref<64x128xf32, #tpu.memory_space<vmem>>, vector<64x128xf32>,
    } else {
    }
    return
  }
  func.func @transform_0(%arg0: i32, %arg1: i32, %arg2: memref<3x3xi32, #tpu.memory_space<smem>>, %arg3: memref<3xi32, #tpu.memory_space<smem>>) -> (i32, i32) {
    %c0_i32 = arith.constant 0 : i32
    %c0_i32_0 = arith.constant 0 : i32
    return %arg0, %c0_i32 : i32, i32
  }
  func.func @transform_1(%arg0: i32, %arg1: i32, %arg2: memref<3x3xi32, #tpu.memory_space<smem>>, %arg3: memref<3xi32, #tpu.memory_space<smem>>) -> (i32, i32) {
    %0 = arith.index_cast %arg0 : i32 to index
    %1 = arith.index_cast %arg1 : i32 to index
    %2 = memref.load %arg2[%0, %1] : memref<3x3xi32, #tpu.memory_space<smem>>
    %c0_i32 = arith.constant 0 : i32
    %c0_i32_0 = arith.constant 0 : i32
    return %2, %c0_i32 : i32, i32
  }
  func.func @transform_2(%arg0: i32, %arg1: i32, %arg2: memref<3x3xi32, #tpu.memory_space<smem>>, %arg3: memref<3xi32, #tpu.memory_space<smem>>) -> (i32, i32) {
    %0 = arith.index_cast %arg0 : i32 to index
    %1 = arith.index_cast %arg1 : i32 to index
    %2 = memref.load %arg2[%0, %1] : memref<3x3xi32, #tpu.memory_space<smem>>
    %c0_i32 = arith.constant 0 : i32
    return %arg0, %2 : i32, i32
  }
  func.func @transform_3(%arg0: i32, %arg1: i32, %arg2: memref<3x3xi32, #tpu.memory_space<smem>>, %arg3: memref<3xi32, #tpu.memory_space<smem>>) -> (i32, i32) {
    %c0_i32 = arith.constant 0 : i32
    %c0_i32_0 = arith.constant 0 : i32
    %c0_i32_1 = arith.constant 0 : i32
    return %c0_i32, %c0_i32_0 : i32, i32
  }
  func.func @transform_4(%arg0: i32, %arg1: i32, %arg2: memref<3x3xi32, #tpu.memory_space<smem>>, %arg3: memref<3xi32, #tpu.memory_space<smem>>) -> (i32, i32) {
    %c0_i32 = arith.constant 0 : i32
    %c0_i32_0 = arith.constant 0 : i32
    %c0_i32_1 = arith.constant 0 : i32
    return %c0_i32, %c0_i32_0 : i32, i32
  }
  func.func @transform_5(%arg0: i32, %arg1: i32, %arg2: memref<3x3xi32, #tpu.memory_space<smem>>, %arg3: memref<3xi32, #tpu.memory_space<smem>>) -> (i32, i32) {
    %c0_i32 = arith.constant 0 : i32
    %c0_i32_0 = arith.constant 0 : i32
    %c0_i32_1 = arith.constant 0 : i32
    return %c0_i32, %c0_i32_0 : i32, i32
  }
  func.func @transform_6(%arg0: i32, %arg1: i32, %arg2: memref<3x3xi32, #tpu.memory_space<smem>>, %arg3: memref<3xi32, #tpu.memory_space<smem>>) -> (i32, i32) {
    %c0_i32 = arith.constant 0 : i32
    %c0_i32_0 = arith.constant 0 : i32
    %c0_i32_1 = arith.constant 0 : i32
    return %c0_i32, %c0_i32_0 : i32, i32
  }
  func.func @transform_7(%arg0: i32, %arg1: i32, %arg2: memref<3x3xi32, #tpu.memory_space<smem>>, %arg3: memref<3xi32, #tpu.memory_space<smem>>) -> (i32, i32) {
    %c0_i32 = arith.constant 0 : i32
    %c0_i32_0 = arith.constant 0 : i32
    %c0_i32_1 = arith.constant 0 : i32
    return %c0_i32, %c0_i32_0 : i32, i32
  }
  func.func @transform_8(%arg0: i32, %arg1: i32, %arg2: memref<3x3xi32, #tpu.memory_space<smem>>, %arg3: memref<3xi32, #tpu.memory_space<smem>>) -> (i32, i32) {
    %c0_i32 = arith.constant 0 : i32
    %c0_i32_0 = arith.constant 0 : i32
    %c0_i32_1 = arith.constant 0 : i32
    return %c0_i32, %c0_i32_0 : i32, i32
  }
  func.func @transform_9(%arg0: i32, %arg1: i32, %arg2: memref<3x3xi32, #tpu.memory_space<smem>>, %arg3: memref<3xi32, #tpu.memory_space<smem>>) -> (i32, i32) {
    %c0_i32 = arith.constant 0 : i32
    %c0_i32_0 = arith.constant 0 : i32
    %c0_i32_1 = arith.constant 0 : i32
    return %c0_i32, %c0_i32_0 : i32, i32
  }
  func.func @transform_10(%arg0: i32, %arg1: i32, %arg2: memref<3x3xi32, #tpu.memory_space<smem>>, %arg3: memref<3xi32, #tpu.memory_space<smem>>) -> (i32, i32) {
    %c0_i32 = arith.constant 0 : i32
    %c0_i32_0 = arith.constant 0 : i32
    return %arg0, %c0_i32 : i32, i32
  }
}

</mosaic_0001>

<llo_original>
// kernel: tpu_custom_call.1
$region0: #{tpu_custom_call.1}
  #allocation0 [shape = 'u32[]', space=smem, size = 0x4, offset = 0x4, fixed_abs, tag = 'smem constant byte address 0x4 - core index']
  #allocation1 [shape = 'u32[144,128]{1,0:T(1,128)}', space=vmem, size = 0x12000, scoped, tag = 'internal scratch']
  #allocation2 [shape = 'f32[64,8]{1,0:T(8,128)}', space=vmem, size = 0x8000, scoped, tag = 'scratch operand']
  #allocation3 [shape = 'f32[64,8]{1,0:T(8,128)}', space=vmem, size = 0x8000, scoped, tag = 'scratch operand']
  #allocation4 [shape = 'f32[64,128]{1,0:T(8,128)}', space=vmem, size = 0x8000, scoped, tag = 'scratch operand']
  #allocation5 [shape = 's32[1]{0}', space=sflag, size = 0x4, scoped, tag = 'scoped memory for tpu_custom_call.1']
  #allocation6 [shape = 'u8[2048]{0}', space=smem, size = 0x800, scoped, tag = 'prefetched SMEM operand 0']
  #allocation7 [shape = 'u8[512]{0}', space=smem, size = 0x200, scoped, tag = 'prefetched SMEM operand 1']
  %s0 = inlined_call_operand.hbm [shape: s32[3,3], index: 0, kind: input, shape index: {}]
  %s1 = inlined_call_operand.vmem [shape: s32[3], index: 1, kind: input, shape index: {}]
  %s2 = inlined_call_operand.hbm [shape: f32[192,128], index: 2, kind: input, shape index: {}]
  %s3 = inlined_call_operand.hbm [shape: f32[384,128], index: 3, kind: input, shape index: {}]
  %s4 = inlined_call_operand.vmem [shape: s8[192,384], index: 4, kind: input, shape index: {}]
  %s5 = inlined_call_operand.hbm [shape: f32[128,128], index: 5, kind: input, shape index: {}]
  %s6 = inlined_call_operand.vmem [shape: f32[8,128], index: 6, kind: input, shape index: {}]
  %s7 = inlined_call_operand.vmem [shape: f32[128,8], index: 7, kind: input, shape index: {}]
  %s8 = inlined_call_operand.vmem [shape: f32[8,128], index: 8, kind: input, shape index: {}]
  %s9 = inlined_call_operand.hbm [shape: f32[128,128], index: 9, kind: input, shape index: {}]
  %s10 = inlined_call_operand.hbm [shape: f32[128,128], index: 10, kind: input, shape index: {}]
  %s11 = inlined_call_operand.vmem [shape: f32[1,128], index: 11, kind: input, shape index: {}]
  %s12 = inlined_call_operand.hbm [shape: f32[192,128], index: 12, kind: output, shape index: {}]
  %s13 = sld [smem:[#allocation0]]
  $region143: #{tpu_custom_call.1} parent=0
    _
  %s15 = ssub.s32 1, %s13
  %s16 = scalar_select 0, %s15, %s13
  %18 = dma.hbm_to_smem %s0, 64, [#allocation6], [#allocation5]
  %s19 = sshll.u32 %s1, 4
  %s20 = int_to_ptr.vmem [resolvable:$true] %s19
  %22 = dma.vmem_to_smem %s20, 16, [#allocation7], [#allocation5]
  %23 = dma.done [#allocation5], 80
  %24 = sfence
  $region1: #{tpu_custom_call.1} parent=0
    #allocation8 [shape = 'u8[65536]{0}', space=vmem, size = 0x10000, scoped, tag = 'input window, operand 2']
    #allocation9 [shape = 's32[2]{0}', space=sflag, size = 0x8, scoped, tag = 'scoped memory for tpu_custom_call.1']
    #allocation10 [shape = 's32[2]{0}', space=sflag, size = 0x8, scoped, tag = 'scoped memory for tpu_custom_call.1']
    #allocation11 [shape = 'u8[131072]{0}', space=vmem, size = 0x20000, scoped, tag = 'input window, operand 3']
    #allocation12 [shape = 's32[2]{0}', space=sflag, size = 0x8, scoped, tag = 'scoped memory for tpu_custom_call.1']
    #allocation13 [shape = 'u8[16384]{0}', space=vmem, size = 0x4000, scoped, tag = 'input window, operand 4']
    #allocation14 [shape = 'u8[65536]{0}', space=vmem, size = 0x10000, scoped, tag = 'input window, operand 5, single buffered']
    #allocation15 [shape = 'u8[65536]{0}', space=vmem, size = 0x10000, scoped, tag = 'input window, operand 9, single buffered']
    #allocation16 [shape = 's32[1]{0}', space=sflag, size = 0x4, scoped, tag = 'scoped memory for tpu_custom_call.1']
    #allocation17 [shape = 'u8[65536]{0}', space=vmem, size = 0x10000, scoped, tag = 'input window, operand 10, single buffered']
    #allocation18 [shape = 'u8[65536]{0}', space=vmem, size = 0x10000, scoped, tag = 'output window, operand 0']
    %25 = vsyncpa [#allocation9], 0
    %s26 = scalar_lea.sflag [#allocation9], 1
    %27 = vsyncpa %s26, 0
    %28 = vsyncpa [#allocation12], 0
    %s29 = scalar_lea.sflag [#allocation12], 1
    %30 = vsyncpa %s29, 0
    %31 = vsyncpa [#allocation16], 0
    %32 = vsyncpa [#allocation10], 0
    %s33 = scalar_lea.sflag [#allocation10], 1
    %34 = vsyncpa %s33, 0
    loop: start=0, step=1, limit=8
    $region2: #{tpu_custom_call.1} parent=1 // loop_pre_header
      _
    $region3: #{tpu_custom_call.1} parent=1 // loop_header
      %s36 = sphi 0, %s40
      %p37 = scmp.ge.s32.totalorder %s36, 8
      %s43 = sphi 0, %s55
      %s44 = sphi 0, %s51
      %s45 = sphi 0, %s43
      %s46 = sphi 0, %s44
      %s47 = sphi 0, %s45
      %s48 = sphi 0, %s46
      %s58 = sphi 0, %s60
      %s61 = sphi 0, %s58
      %s62 = sphi 0, %s61
      %s78 = sphi 0, %s62
      %s100 = sphi 0, %s102
      %s103 = sphi 0, %s100
      %s104 = sphi 0, %s103
      %s120 = sphi 0, %s104
      %s144 = sphi 0, %s146
      %s147 = sphi 0, %s144
      %s148 = sphi 0, %s147
      %s164 = sphi 0, %s148
      %s168 = sphi 0, %s168
      %s170 = sphi 0, %s168
      %s171 = sphi 0, %s170
      %s185 = sphi 0, %s171
      %s189 = sphi 0, %s189
      %s191 = sphi 0, %s189
      %s192 = sphi 0, %s191
      %s206 = sphi 0, %s192
      %s210 = sphi 0, %s210
      %s212 = sphi 0, %s210
      %s213 = sphi 0, %s212
      %s227 = sphi 0, %s213
      %s231 = sphi 0, %s231
      %s233 = sphi 0, %s231
      %s234 = sphi 0, %s233
      %s248 = sphi 0, %s234
      %s252 = sphi 0, %s252
      %s254 = sphi 0, %s252
      %s255 = sphi 0, %s254
      %s269 = sphi 0, %s255
      %s273 = sphi 0, %s273
      %s275 = sphi 0, %s273
      %s276 = sphi 0, %s275
      %s290 = sphi 0, %s276
      %s294 = sphi 0, %s294
      %s296 = sphi 0, %s294
      %s297 = sphi 0, %s296
      %s311 = sphi 0, %s297
      %s317 = sphi 0, %s319
      %s320 = sphi 0, %s317
      %s321 = sphi 0, %s320
      %s337 = sphi 0, %s321
    $region4: #{tpu_custom_call.1} parent=1 // loop_header_branch
      %39 = sbr.rel (%p37) target = $region8
    $region5: #{tpu_custom_call.1} parent=1 // loop_body
      %s41 = ssub.s32 %s36, 1
      %s42 = ssub.s32 %s36, 2
      %s49 = sadd.s32 1, %s44
      %p50 = scmp.ge.s32.totalorder %s49, 2
      %s51 = scalar_select %p50, 0, %s49
      %s52 = sadd.s32 1, %s43
      %s53 = scalar_select %p50, %s52, %s43
      %p54 = scmp.ge.s32.totalorder %s53, 3
      %s55 = scalar_select %p54, 0, %s53
      %s56 = ssub.s32 %s43, %s55
      %p57 = scmp.eq.s32.totalorder %s56, 0
      %s59 = sadd.s32 %s58, 1
      %s60 = scalar_select %p57, %s58, %s59
      %p63 = pneg %p57
      %p64 = scmp.eq.s32.totalorder %s36, 5
      %p65 = por %p63, %p64
      %p66 = scmp.ne.s32.totalorder %s58, %s61
      %p67 = scmp.eq.s32.totalorder %s36, 0
      %p68 = por %p66, %p67
      %p69 = scmp.ne.s32.totalorder %s58, %s61
      %p70 = scmp.eq.s32.totalorder %s41, 5
      %p71 = por %p69, %p70
      %p72 = scmp.ne.s32.totalorder %s61, %s62
      %p73 = scmp.eq.s32.totalorder %s41, 0
      %p74 = por %p72, %p73
      %p75 = scmp.ne.s32.totalorder %s61, %s62
      %p76 = scmp.eq.s32.totalorder %s42, 5
      %p77 = por %p75, %p76
      %p79 = scmp.ne.s32.totalorder %s62, %s78
      %p80 = scmp.eq.s32.totalorder %s42, 0
      %p81 = por %p79, %p80
      %s82 = sshra.s32 %s44, 7
      %s83 = sand.u32 %s44, 127
      %s84 = sadd.s32 %s82, %s43
      %s85 = smul.u32 %s84, 128
      %s86 = sshra.s32 %s44, 7
      %s87 = sand.u32 %s44, 127
      %s88 = sadd.s32 %s85, %s87
      %s89 = sld [smem:[#allocation6 + %s88]]
      %s90 = sshra.s32 %s51, 7
      %s91 = sand.u32 %s51, 127
      %s92 = sadd.s32 %s90, %s55
      %s93 = smul.u32 %s92, 128
      %s94 = sshra.s32 %s51, 7
      %s95 = sand.u32 %s51, 127
      %s96 = sadd.s32 %s93, %s95
      %s97 = sld [smem:[#allocation6 + %s96]]
      %s98 = ssub.s32 %s89, %s97
      %p99 = scmp.eq.s32.totalorder %s98, 0
      %s101 = sadd.s32 %s100, 1
      %s102 = scalar_select %p99, %s100, %s101
      %p105 = pneg %p99
      %p106 = scmp.eq.s32.totalorder %s36, 5
      %p107 = por %p105, %p106
      %p108 = scmp.ne.s32.totalorder %s100, %s103
      %p109 = scmp.eq.s32.totalorder %s36, 0
      %p110 = por %p108, %p109
      %p111 = scmp.ne.s32.totalorder %s100, %s103
      %p112 = scmp.eq.s32.totalorder %s41, 5
      %p113 = por %p111, %p112
      %p114 = scmp.ne.s32.totalorder %s103, %s104
      %p115 = scmp.eq.s32.totalorder %s41, 0
      %p116 = por %p114, %p115
      %p117 = scmp.ne.s32.totalorder %s103, %s104
      %p118 = scmp.eq.s32.totalorder %s42, 5
      %p119 = por %p117, %p118
      %p121 = scmp.ne.s32.totalorder %s104, %s120
      %p122 = scmp.eq.s32.totalorder %s42, 0
      %p123 = por %p121, %p122
      %s124 = sshra.s32 %s44, 7
      %s125 = sand.u32 %s44, 127
      %s126 = sadd.s32 %s124, %s43
      %s127 = smul.u32 %s126, 128
      %s128 = sshra.s32 %s44, 7
      %s129 = sand.u32 %s44, 127
      %s130 = sadd.s32 %s127, %s129
      %s131 = sld [smem:[#allocation6 + %s130]]
      %s132 = sshra.s32 %s51, 7
      %s133 = sand.u32 %s51, 127
      %s134 = sadd.s32 %s132, %s55
      %s135 = smul.u32 %s134, 128
      %s136 = sshra.s32 %s51, 7
      %s137 = sand.u32 %s51, 127
      %s138 = sadd.s32 %s135, %s137
      %s139 = sld [smem:[#allocation6 + %s138]]
      %s140 = ssub.s32 %s43, %s55
      %s141 = ssub.s32 %s131, %s139
      %s142 = sor.u32 %s140, %s141
      %p143 = scmp.eq.s32.totalorder %s142, 0
      %s145 = sadd.s32 %s144, 1
      %s146 = scalar_select %p143, %s144, %s145
      %p149 = pneg %p143
      %p150 = scmp.eq.s32.totalorder %s36, 5
      %p151 = por %p149, %p150
      %p152 = scmp.ne.s32.totalorder %s144, %s147
      %p153 = scmp.eq.s32.totalorder %s36, 0
      %p154 = por %p152, %p153
      %p155 = scmp.ne.s32.totalorder %s144, %s147
      %p156 = scmp.eq.s32.totalorder %s41, 5
      %p157 = por %p155, %p156
      %p158 = scmp.ne.s32.totalorder %s147, %s148
      %p159 = scmp.eq.s32.totalorder %s41, 0
      %p160 = por %p158, %p159
      %p161 = scmp.ne.s32.totalorder %s147, %s148
      %p162 = scmp.eq.s32.totalorder %s42, 5
      %p163 = por %p161, %p162
      %p165 = scmp.ne.s32.totalorder %s148, %s164
      %p166 = scmp.eq.s32.totalorder %s42, 0
      %p167 = por %p165, %p166
      %s169 = sadd.s32 %s168, 1
      %p172 = scmp.eq.s32.totalorder %s36, 5
      %p173 = scmp.ne.s32.totalorder %s168, %s170
      %p174 = scmp.eq.s32.totalorder %s36, 0
      %p175 = por %p173, %p174
      %p176 = scmp.ne.s32.totalorder %s168, %s170
      %p177 = scmp.eq.s32.totalorder %s41, 5
      %p178 = por %p176, %p177
      %p179 = scmp.ne.s32.totalorder %s170, %s171
      %p180 = scmp.eq.s32.totalorder %s41, 0
      %p181 = por %p179, %p180
      %p182 = scmp.ne.s32.totalorder %s170, %s171
      %p183 = scmp.eq.s32.totalorder %s42, 5
      %p184 = por %p182, %p183
      %p186 = scmp.ne.s32.totalorder %s171, %s185
      %p187 = scmp.eq.s32.totalorder %s42, 0
      %p188 = por %p186, %p187
      %s190 = sadd.s32 %s189, 1
      %p193 = scmp.eq.s32.totalorder %s36, 5
      %p194 = scmp.ne.s32.totalorder %s189, %s191
      %p195 = scmp.eq.s32.totalorder %s36, 0
      %p196 = por %p194, %p195
      %p197 = scmp.ne.s32.totalorder %s189, %s191
      %p198 = scmp.eq.s32.totalorder %s41, 5
      %p199 = por %p197, %p198
      %p200 = scmp.ne.s32.totalorder %s191, %s192
      %p201 = scmp.eq.s32.totalorder %s41, 0
      %p202 = por %p200, %p201
      %p203 = scmp.ne.s32.totalorder %s191, %s192
      %p204 = scmp.eq.s32.totalorder %s42, 5
      %p205 = por %p203, %p204
      %p207 = scmp.ne.s32.totalorder %s192, %s206
      %p208 = scmp.eq.s32.totalorder %s42, 0
      %p209 = por %p207, %p208
      %s211 = sadd.s32 %s210, 1
      %p214 = scmp.eq.s32.totalorder %s36, 5
      %p215 = scmp.ne.s32.totalorder %s210, %s212
      %p216 = scmp.eq.s32.totalorder %s36, 0
      %p217 = por %p215, %p216
      %p218 = scmp.ne.s32.totalorder %s210, %s212
      %p219 = scmp.eq.s32.totalorder %s41, 5
      %p220 = por %p218, %p219
      %p221 = scmp.ne.s32.totalorder %s212, %s213
      %p222 = scmp.eq.s32.totalorder %s41, 0
      %p223 = por %p221, %p222
      %p224 = scmp.ne.s32.totalorder %s212, %s213
      %p225 = scmp.eq.s32.totalorder %s42, 5
      %p226 = por %p224, %p225
      %p228 = scmp.ne.s32.totalorder %s213, %s227
      %p229 = scmp.eq.s32.totalorder %s42, 0
      %p230 = por %p228, %p229
      %s232 = sadd.s32 %s231, 1
      %p235 = scmp.eq.s32.totalorder %s36, 5
      %p236 = scmp.ne.s32.totalorder %s231, %s233
      %p237 = scmp.eq.s32.totalorder %s36, 0
      %p238 = por %p236, %p237
      %p239 = scmp.ne.s32.totalorder %s231, %s233
      %p240 = scmp.eq.s32.totalorder %s41, 5
      %p241 = por %p239, %p240
      %p242 = scmp.ne.s32.totalorder %s233, %s234
      %p243 = scmp.eq.s32.totalorder %s41, 0
      %p244 = por %p242, %p243
      %p245 = scmp.ne.s32.totalorder %s233, %s234
      %p246 = scmp.eq.s32.totalorder %s42, 5
      %p247 = por %p245, %p246
      %p249 = scmp.ne.s32.totalorder %s234, %s248
      %p250 = scmp.eq.s32.totalorder %s42, 0
      %p251 = por %p249, %p250
      %s253 = sadd.s32 %s252, 1
      %p256 = scmp.eq.s32.totalorder %s36, 5
      %p257 = scmp.ne.s32.totalorder %s252, %s254
      %p258 = scmp.eq.s32.totalorder %s36, 0
      %p259 = por %p257, %p258
      %p260 = scmp.ne.s32.totalorder %s252, %s254
      %p261 = scmp.eq.s32.totalorder %s41, 5
      %p262 = por %p260, %p261
      %p263 = scmp.ne.s32.totalorder %s254, %s255
      %p264 = scmp.eq.s32.totalorder %s41, 0
      %p265 = por %p263, %p264
      %p266 = scmp.ne.s32.totalorder %s254, %s255
      %p267 = scmp.eq.s32.totalorder %s42, 5
      %p268 = por %p266, %p267
      %p270 = scmp.ne.s32.totalorder %s255, %s269
      %p271 = scmp.eq.s32.totalorder %s42, 0
      %p272 = por %p270, %p271
      %s274 = sadd.s32 %s273, 1
      %p277 = scmp.eq.s32.totalorder %s36, 5
      %p278 = scmp.ne.s32.totalorder %s273, %s275
      %p279 = scmp.eq.s32.totalorder %s36, 0
      %p280 = por %p278, %p279
      %p281 = scmp.ne.s32.totalorder %s273, %s275
      %p282 = scmp.eq.s32.totalorder %s41, 5
      %p283 = por %p281, %p282
      %p284 = scmp.ne.s32.totalorder %s275, %s276
      %p285 = scmp.eq.s32.totalorder %s41, 0
      %p286 = por %p284, %p285
      %p287 = scmp.ne.s32.totalorder %s275, %s276
      %p288 = scmp.eq.s32.totalorder %s42, 5
      %p289 = por %p287, %p288
      %p291 = scmp.ne.s32.totalorder %s276, %s290
      %p292 = scmp.eq.s32.totalorder %s42, 0
      %p293 = por %p291, %p292
      %s295 = sadd.s32 %s294, 1
      %p298 = scmp.eq.s32.totalorder %s36, 5
      %p299 = scmp.ne.s32.totalorder %s294, %s296
      %p300 = scmp.eq.s32.totalorder %s36, 0
      %p301 = por %p299, %p300
      %p302 = scmp.ne.s32.totalorder %s294, %s296
      %p303 = scmp.eq.s32.totalorder %s41, 5
      %p304 = por %p302, %p303
      %p305 = scmp.ne.s32.totalorder %s296, %s297
      %p306 = scmp.eq.s32.totalorder %s41, 0
      %p307 = por %p305, %p306
      %p308 = scmp.ne.s32.totalorder %s296, %s297
      %p309 = scmp.eq.s32.totalorder %s42, 5
      %p310 = por %p308, %p309
      %p312 = scmp.ne.s32.totalorder %s297, %s311
      %p313 = scmp.eq.s32.totalorder %s42, 0
      %p314 = por %p312, %p313
      %s315 = ssub.s32 %s43, %s55
      %p316 = scmp.eq.s32.totalorder %s315, 0
      %s318 = sadd.s32 %s317, 1
      %s319 = scalar_select %p316, %s317, %s318
      %p322 = pneg %p316
      %p323 = scmp.eq.s32.totalorder %s36, 5
      %p324 = por %p322, %p323
      %p325 = scmp.ne.s32.totalorder %s317, %s320
      %p326 = scmp.eq.s32.totalorder %s36, 0
      %p327 = por %p325, %p326
      %p328 = scmp.ne.s32.totalorder %s317, %s320
      %p329 = scmp.eq.s32.totalorder %s41, 5
      %p330 = por %p328, %p329
      %p331 = scmp.ne.s32.totalorder %s320, %s321
      %p332 = scmp.eq.s32.totalorder %s41, 0
      %p333 = por %p331, %p332
      %p334 = scmp.ne.s32.totalorder %s320, %s321
      %p335 = scmp.eq.s32.totalorder %s42, 5
      %p336 = por %p334, %p335
      %p338 = scmp.ne.s32.totalorder %s321, %s337
      %p339 = scmp.eq.s32.totalorder %s42, 0
      %p340 = por %p338, %p339
      %p341 = scmp.le.s32.totalorder 1, %s36
      %p342 = scmp.lt.s32.totalorder %s36, 7
      %p343 = pnand %p341, %p342
      %p344 = pneg %p343
      // Predicated region
      $region9: #{tpu_custom_call.1} parent=5 // pred_check
        _
      $region10: #{tpu_custom_call.1} parent=5 // pred_check_branch
        %346 = sbr.rel (%p343) target = $region12
      $region11: #{tpu_custom_call.1} parent=5 // pred_region
        %s347 = ssub.s32 %s36, 1
        // Predicated region
        $region13: #{tpu_custom_call.1} parent=11 // pred_check
          %p348 = pneg %p181
        $region14: #{tpu_custom_call.1} parent=11 // pred_check_branch
          %350 = sbr.rel (%p348) target = $region16
        $region15: #{tpu_custom_call.1} parent=11 // pred_region
          %s352 = ssub.s32 2048, 2048
          %353 = vsyncadd [#allocation12], %s352
          %s354 = sshll.u32 [#allocation14], 4
          %s355 = int_to_ptr.vmem [resolvable:$true] %s354
          %360 = dma.hbm_to_vmem [thread:$0]  %s5, 2048, %s355, [#allocation12], 128, 128, 8
        $region16: #{tpu_custom_call.1} parent=11 // pred_fallthru
          _
        // Predicated region
        $region17: #{tpu_custom_call.1} parent=11 // pred_check
          %p361 = pneg %p202
        $region18: #{tpu_custom_call.1} parent=11 // pred_check_branch
          %363 = sbr.rel (%p361) target = $region20
        $region19: #{tpu_custom_call.1} parent=11 // pred_region
          _
        $region20: #{tpu_custom_call.1} parent=11 // pred_fallthru
          _
        // Predicated region
        $region21: #{tpu_custom_call.1} parent=11 // pred_check
          %p364 = pneg %p223
        $region22: #{tpu_custom_call.1} parent=11 // pred_check_branch
          %366 = sbr.rel (%p364) target = $region24
        $region23: #{tpu_custom_call.1} parent=11 // pred_region
          _
        $region24: #{tpu_custom_call.1} parent=11 // pred_fallthru
          _
        // Predicated region
        $region25: #{tpu_custom_call.1} parent=11 // pred_check
          %p367 = pneg %p244
        $region26: #{tpu_custom_call.1} parent=11 // pred_check_branch
          %369 = sbr.rel (%p367) target = $region28
        $region27: #{tpu_custom_call.1} parent=11 // pred_region
          _
        $region28: #{tpu_custom_call.1} parent=11 // pred_fallthru
          _
        // Predicated region
        $region29: #{tpu_custom_call.1} parent=11 // pred_check
          %p370 = pneg %p265
        $region30: #{tpu_custom_call.1} parent=11 // pred_check_branch
          %372 = sbr.rel (%p370) target = $region32
        $region31: #{tpu_custom_call.1} parent=11 // pred_region
          %s374 = ssub.s32 2048, 2048
          %375 = vsyncadd [#allocation16], %s374
          %s376 = sshll.u32 [#allocation15], 4
          %s377 = int_to_ptr.vmem [resolvable:$true] %s376
          %382 = dma.hbm_to_vmem [thread:$0]  %s9, 2048, %s377, [#allocation16], 128, 128, 8
        $region32: #{tpu_custom_call.1} parent=11 // pred_fallthru
          _
        // Predicated region
        $region33: #{tpu_custom_call.1} parent=11 // pred_check
          %p383 = pneg %p286
        $region34: #{tpu_custom_call.1} parent=11 // pred_check_branch
          %385 = sbr.rel (%p383) target = $region36
        $region35: #{tpu_custom_call.1} parent=11 // pred_region
          %s387 = ssub.s32 2048, 2048
          %388 = vsyncadd [#allocation16], %s387
          %s389 = sshll.u32 [#allocation17], 4
          %s390 = int_to_ptr.vmem [resolvable:$true] %s389
          %395 = dma.hbm_to_vmem [thread:$0]  %s10, 2048, %s390, [#allocation16], 128, 128, 8
        $region36: #{tpu_custom_call.1} parent=11 // pred_fallthru
          _
        // Predicated region
        $region37: #{tpu_custom_call.1} parent=11 // pred_check
          %p396 = pneg %p307
        $region38: #{tpu_custom_call.1} parent=11 // pred_check_branch
          %398 = sbr.rel (%p396) target = $region40
        $region39: #{tpu_custom_call.1} parent=11 // pred_region
          _
        $region40: #{tpu_custom_call.1} parent=11 // pred_fallthru
          _
      $region12: #{tpu_custom_call.1} parent=5 // pred_fallthru
        _
      %p399 = scmp.lt.s32.totalorder %s36, 6
      // Predicated region
      $region41: #{tpu_custom_call.1} parent=5 // pred_check
        %p400 = pneg %p399
      $region42: #{tpu_custom_call.1} parent=5 // pred_check_branch
        %402 = sbr.rel (%p400) target = $region44
      $region43: #{tpu_custom_call.1} parent=5 // pred_region
        // Predicated region
        $region45: #{tpu_custom_call.1} parent=43 // pred_check
          %p403 = pneg %p68
        $region46: #{tpu_custom_call.1} parent=43 // pred_check_branch
          %405 = sbr.rel (%p403) target = $region48
        $region47: #{tpu_custom_call.1} parent=43 // pred_region
          %s406 = sand.u32 %s58, 1
          %s407 = scalar_lea.sflag [#allocation9], %s406
          %s408 = sand.u32 %s58, 1
          %s409 = smul.addr %s408, 64
          %s410 = scalar_lea.vmem [#allocation8], %s409
          %s411 = smul.u32 8, %s43
          %s413 = ssub.s32 1024, 1024
          %414 = vsyncadd %s407, %s413
          %s415 = smul.addr %s411, 128
          %s416 = scalar_lea.hbm %s2, %s415
          %s417 = sshll.u32 %s410, 4
          %s418 = int_to_ptr.vmem [resolvable:$true] %s417
          %423 = dma.hbm_to_vmem [thread:$0]  %s416, 1024, %s418, %s407, 128, 128, 8
        $region48: #{tpu_custom_call.1} parent=43 // pred_fallthru
          _
        // Predicated region
        $region49: #{tpu_custom_call.1} parent=43 // pred_check
          %p424 = pneg %p110
        $region50: #{tpu_custom_call.1} parent=43 // pred_check_branch
          %426 = sbr.rel (%p424) target = $region52
        $region51: #{tpu_custom_call.1} parent=43 // pred_region
          %s427 = sand.u32 %s36, 1
          %s428 = scalar_lea.sflag [#allocation12], %s427
          %s429 = sand.u32 %s100, 1
          %s430 = smul.addr %s429, 128
          %s431 = scalar_lea.vmem [#allocation11], %s430
          %s432 = sshra.s32 %s44, 7
          %s433 = sand.u32 %s44, 127
          %s434 = sadd.s32 %s432, %s43
          %s435 = smul.u32 %s434, 128
          %s436 = sshra.s32 %s44, 7
          %s437 = sand.u32 %s44, 127
          %s438 = sadd.s32 %s435, %s437
          %s439 = sld [smem:[#allocation6 + %s438]]
          %s440 = smul.u32 16, %s439
          %s442 = ssub.s32 2048, 2048
          %443 = vsyncadd %s428, %s442
          %s444 = smul.addr %s440, 128
          %s445 = scalar_lea.hbm %s3, %s444
          %s446 = sshll.u32 %s431, 4
          %s447 = int_to_ptr.vmem [resolvable:$true] %s446
          %452 = dma.hbm_to_vmem [thread:$0]  %s445, 2048, %s447, %s428, 128, 128, 8
        $region52: #{tpu_custom_call.1} parent=43 // pred_fallthru
          _
        // Predicated region
        $region53: #{tpu_custom_call.1} parent=43 // pred_check
          %p453 = pneg %p154
        $region54: #{tpu_custom_call.1} parent=43 // pred_check_branch
          %455 = sbr.rel (%p453) target = $region56
        $region55: #{tpu_custom_call.1} parent=43 // pred_region
          %s456 = sand.u32 %s144, 1
          %s457 = sand.u32 %s144, 1
          %s458 = smul.addr %s457, 16
          %s459 = scalar_lea.vmem [#allocation13], %s458
          %s460 = sshra.s32 %s44, 7
          %s461 = sand.u32 %s44, 127
          %s462 = sadd.s32 %s460, %s43
          %s463 = smul.u32 %s462, 128
          %s464 = sshra.s32 %s44, 7
          %s465 = sand.u32 %s44, 127
          %s466 = sadd.s32 %s463, %s465
          %s467 = sld [smem:[#allocation6 + %s466]]
          %s468 = smul.u32 2, %s43
          %s469 = smul.addr %s468, 3
          %s470 = sadd.s32 %s467, %s469
          %s471 = smul.addr %s470, 8
          %s472 = scalar_lea.vmem %s4, %s471
          // Predicated region
          $region57: #{tpu_custom_call.1} parent=55 // pred_check
            _
          $region58: #{tpu_custom_call.1} parent=55 // pred_check_branch
            %474 = sbr.rel (0) target = $region60
          $region59: #{tpu_custom_call.1} parent=55 // pred_region
            // Predicated region
            $region61: #{tpu_custom_call.1} parent=59 // pred_check
              _
            $region62: #{tpu_custom_call.1} parent=59 // pred_check_branch
              %476 = sbr.rel (0) target = $region64
            $region63: #{tpu_custom_call.1} parent=59 // pred_region
              // Predicated region
              $region76: #{tpu_custom_call.1} parent=63 // pred_check
                _
              $region77: #{tpu_custom_call.1} parent=63 // pred_check_branch
                %493 = sbr.rel (0) target = $region79
              $region78: #{tpu_custom_call.1} parent=63 // pred_region
                loop: start=0, step=1, limit=1
                $region80: #{tpu_custom_call.1} parent=78 // loop_pre_header
                  _
                $region81: #{tpu_custom_call.1} parent=78 // loop_header
                  %s495 = sphi 0, %s499
                  %p496 = scmp.ge.s32.totalorder %s495, 1
                  %s500 = sphi %s472, %s472
                  %s501 = sphi %s459, %s459
                $region82: #{tpu_custom_call.1} parent=78 // loop_header_branch
                  %498 = sbr.rel (%p496) target = $region86
                $region83: #{tpu_custom_call.1} parent=78 // loop_body
                  %v502 = vld [vmem:[%s500] sm:$0xff]
                  %503 = vst [vmem:[%s501] sm:$0xff] %v502
                  %v504 = vld [vmem:[%s500 + $0x18] sm:$0xff]
                  %505 = vst [vmem:[%s501 + $0x8] sm:$0xff] %v504
                $region84: #{tpu_custom_call.1} parent=78 // loop_footer
                  %s499 = sadd.s32 1, %s495
                $region85: #{tpu_custom_call.1} parent=78 // loop_footer_branch
                  %494 = sbr.rel target = $region81
                $region86: #{tpu_custom_call.1} parent=78 // loop_exit
                  _
              $region79: #{tpu_custom_call.1} parent=63 // pred_fallthru
                _
              // Predicated region
              $region87: #{tpu_custom_call.1} parent=63 // pred_check
                _
              $region88: #{tpu_custom_call.1} parent=63 // pred_check_branch
                %507 = sbr.rel target = $region90
              $region89: #{tpu_custom_call.1} parent=63 // pred_region
                _
              $region90: #{tpu_custom_call.1} parent=63 // pred_fallthru
                _
            $region64: #{tpu_custom_call.1} parent=59 // pred_fallthru
              _
            // Predicated region
            $region65: #{tpu_custom_call.1} parent=59 // pred_check
              _
            $region66: #{tpu_custom_call.1} parent=59 // pred_check_branch
              %478 = sbr.rel target = $region68
            $region67: #{tpu_custom_call.1} parent=59 // pred_region
              loop: start=0, step=1, limit=1
              $region69: #{tpu_custom_call.1} parent=67 // loop_pre_header
                _
              $region70: #{tpu_custom_call.1} parent=67 // loop_header
                %s481 = sphi 0, %s485
                %p482 = scmp.ge.s32.totalorder %s481, 1
                %s486 = sphi %s472, %s472
                %s487 = sphi %s459, %s459
              $region71: #{tpu_custom_call.1} parent=67 // loop_header_branch
                %484 = sbr.rel (%p482) target = $region75
              $region72: #{tpu_custom_call.1} parent=67 // loop_body
                %v488 = vld [vmem:[%s486] sm:$0xff]
                %489 = vst [vmem:[%s487] sm:$0xff] %v488
                %v490 = vld [vmem:[%s486 + $0x18] sm:$0xff]
                %491 = vst [vmem:[%s487 + $0x8] sm:$0xff] %v490
              $region73: #{tpu_custom_call.1} parent=67 // loop_footer
                %s485 = sadd.s32 1, %s481
              $region74: #{tpu_custom_call.1} parent=67 // loop_footer_branch
                %480 = sbr.rel target = $region70
              $region75: #{tpu_custom_call.1} parent=67 // loop_exit
                _
            $region68: #{tpu_custom_call.1} parent=59 // pred_fallthru
              _
          $region60: #{tpu_custom_call.1} parent=55 // pred_fallthru
            _
          %508 = vnop
        $region56: #{tpu_custom_call.1} parent=43 // pred_fallthru
          _
      $region44: #{tpu_custom_call.1} parent=5 // pred_fallthru
        _
      %p509 = scmp.le.s32.totalorder 1, %s36
      %p510 = scmp.lt.s32.totalorder %s36, 7
      %p511 = pnand %p509, %p510
      %p512 = pneg %p511
      // Predicated region
      $region91: #{tpu_custom_call.1} parent=5 // pred_check
        _
      $region92: #{tpu_custom_call.1} parent=5 // pred_check_branch
        %514 = sbr.rel (%p511) target = $region94
      $region93: #{tpu_custom_call.1} parent=5 // pred_region
        %s515 = ssub.s32 %s36, 1
        %s516 = sand.u32 %s61, 1
        %s517 = scalar_lea.sflag [#allocation9], %s516
        %s518 = sand.u32 %s61, 1
        %s519 = smul.addr %s518, 64
        %s520 = scalar_lea.vmem [#allocation8], %s519
        // Predicated region
        $region95: #{tpu_custom_call.1} parent=93 // pred_check
          %p521 = pneg %p74
        $region96: #{tpu_custom_call.1} parent=93 // pred_check_branch
          %523 = sbr.rel (%p521) target = $region98
        $region97: #{tpu_custom_call.1} parent=93 // pred_region
          %524 = dma.done %s517, 1024
        $region98: #{tpu_custom_call.1} parent=93 // pred_fallthru
          _
        %s525 = sand.u32 %s41, 1
        %s526 = scalar_lea.sflag [#allocation12], %s525
        %s527 = sand.u32 %s103, 1
        %s528 = smul.addr %s527, 128
        %s529 = scalar_lea.vmem [#allocation11], %s528
        // Predicated region
        $region99: #{tpu_custom_call.1} parent=93 // pred_check
          %p530 = pneg %p116
        $region100: #{tpu_custom_call.1} parent=93 // pred_check_branch
          %532 = sbr.rel (%p530) target = $region102
        $region101: #{tpu_custom_call.1} parent=93 // pred_region
          %533 = dma.done %s526, 2048
        $region102: #{tpu_custom_call.1} parent=93 // pred_fallthru
          _
        %s534 = sand.u32 %s147, 1
        %s535 = sand.u32 %s147, 1
        %s536 = smul.addr %s535, 16
        %s537 = scalar_lea.vmem [#allocation13], %s536
        // Predicated region
        $region103: #{tpu_custom_call.1} parent=93 // pred_check
          %p538 = pneg %p160
        $region104: #{tpu_custom_call.1} parent=93 // pred_check_branch
          %540 = sbr.rel (%p538) target = $region106
        $region105: #{tpu_custom_call.1} parent=93 // pred_region
          _
        $region106: #{tpu_custom_call.1} parent=93 // pred_fallthru
          _
        // Predicated region
        $region107: #{tpu_custom_call.1} parent=93 // pred_check
          %p541 = pneg %p181
        $region108: #{tpu_custom_call.1} parent=93 // pred_check_branch
          %543 = sbr.rel (%p541) target = $region110
        $region109: #{tpu_custom_call.1} parent=93 // pred_region
          %544 = dma.done [#allocation12], 2048
        $region110: #{tpu_custom_call.1} parent=93 // pred_fallthru
          _
        // Predicated region
        $region111: #{tpu_custom_call.1} parent=93 // pred_check
          %p545 = pneg %p265
        $region112: #{tpu_custom_call.1} parent=93 // pred_check_branch
          %547 = sbr.rel (%p545) target = $region114
        $region113: #{tpu_custom_call.1} parent=93 // pred_region
          %548 = dma.done [#allocation16], 2048
        $region114: #{tpu_custom_call.1} parent=93 // pred_fallthru
          _
        // Predicated region
        $region115: #{tpu_custom_call.1} parent=93 // pred_check
          %p549 = pneg %p286
        $region116: #{tpu_custom_call.1} parent=93 // pred_check_branch
          %551 = sbr.rel (%p549) target = $region118
        $region117: #{tpu_custom_call.1} parent=93 // pred_region
          %552 = dma.done [#allocation16], 2048
        $region118: #{tpu_custom_call.1} parent=93 // pred_fallthru
          _
        %s553 = sand.u32 %s61, 1
        %s554 = scalar_lea.sflag [#allocation9], %s553
        %s555 = sand.u32 %s61, 1
        %s556 = smul.addr %s555, 64
        %s557 = scalar_lea.vmem [#allocation8], %s556
        %p558 = pneg %p74
        %p559 = pneg %p71
        %s560 = sand.u32 %s41, 1
        %s561 = scalar_lea.sflag [#allocation12], %s560
        %s562 = sand.u32 %s103, 1
        %s563 = smul.addr %s562, 128
        %s564 = scalar_lea.vmem [#allocation11], %s563
        %p565 = pneg %p116
        %p566 = pneg %p113
        %s567 = sand.u32 %s147, 1
        %s568 = sand.u32 %s147, 1
        %s569 = smul.addr %s568, 16
        %s570 = scalar_lea.vmem [#allocation13], %s569
        %p571 = pneg %p160
        %p572 = pneg %p157
        %p573 = pneg %p181
        %p574 = pneg %p178
        %p575 = pneg %p202
        %p576 = pneg %p199
        %p577 = pneg %p223
        %p578 = pneg %p220
        %p579 = pneg %p244
        %p580 = pneg %p241
        %p581 = pneg %p265
        %p582 = pneg %p262
        %p583 = pneg %p286
        %p584 = pneg %p283
        %p585 = pneg %p307
        %p586 = pneg %p304
        %p587 = pneg %p333
        %p588 = pneg %p330
        %s589 = sand.u32 %s320, 1
        %s590 = scalar_lea.sflag [#allocation10], %s589
        %s591 = sand.u32 %s320, 1
        %s592 = smul.addr %s591, 64
        %s593 = scalar_lea.vmem [#allocation18], %s592
        %s594 = smul.u32 8, %s45
        %s595 = sshra.s32 %s46, 7
        %s596 = sand.u32 %s46, 127
        %s597 = sadd.s32 %s595, %s45
        %s598 = smul.u32 %s597, 128
        %s599 = sshra.s32 %s46, 7
        %s600 = sand.u32 %s46, 127
        %s601 = sadd.s32 %s598, %s600
        %s602 = sld [smem:[#allocation6 + %s601]]
        %s603 = smul.u32 16, %s602
        %s604 = sshra.s32 %s46, 7
        %s605 = sand.u32 %s46, 127
        %s606 = sadd.s32 %s604, %s45
        %s607 = smul.u32 %s606, 128
        %s608 = sshra.s32 %s46, 7
        %s609 = sand.u32 %s46, 127
        %s610 = sadd.s32 %s607, %s609
        %s611 = sld [smem:[#allocation6 + %s610]]
        %s612 = smul.u32 2, %s45
        %s613 = smul.u32 8, %s45
        %p616 = scmp.eq.s32.totalorder %s46, 0
        // Predicated region
        $region119: #{tpu_custom_call.1} parent=93 // pred_check
          %p617 = pneg %p616
        $region120: #{tpu_custom_call.1} parent=93 // pred_check_branch
          %619 = sbr.rel (%p617) target = $region122
        $region121: #{tpu_custom_call.1} parent=93 // pred_region
          %vm620 = vcmask 64512
          %621 = vst.msk [vmem:[#allocation2] sm:$0xff] %vm620, -1e+30
          %622 = vst.msk [vmem:[#allocation2 + $0x8] sm:$0xff] %vm620, -1e+30
          %623 = vst.msk [vmem:[#allocation2 + $0x10] sm:$0xff] %vm620, -1e+30
          %624 = vst.msk [vmem:[#allocation2 + $0x18] sm:$0xff] %vm620, -1e+30
          %625 = vst.msk [vmem:[#allocation2 + $0x20] sm:$0xff] %vm620, -1e+30
          %626 = vst.msk [vmem:[#allocation2 + $0x28] sm:$0xff] %vm620, -1e+30
          %627 = vst.msk [vmem:[#allocation2 + $0x30] sm:$0xff] %vm620, -1e+30
          %628 = vst.msk [vmem:[#allocation2 + $0x38] sm:$0xff] %vm620, -1e+30
          %629 = vst.msk [vmem:[#allocation3] sm:$0xff] %vm620, 0.0
          %630 = vst.msk [vmem:[#allocation3 + $0x8] sm:$0xff] %vm620, 0.0
          %631 = vst.msk [vmem:[#allocation3 + $0x10] sm:$0xff] %vm620, 0.0
          %632 = vst.msk [vmem:[#allocation3 + $0x18] sm:$0xff] %vm620, 0.0
          %633 = vst.msk [vmem:[#allocation3 + $0x20] sm:$0xff] %vm620, 0.0
          %634 = vst.msk [vmem:[#allocation3 + $0x28] sm:$0xff] %vm620, 0.0
          %635 = vst.msk [vmem:[#allocation3 + $0x30] sm:$0xff] %vm620, 0.0
          %636 = vst.msk [vmem:[#allocation3 + $0x38] sm:$0xff] %vm620, 0.0
          %637 = vst [vmem:[#allocation4] sm:$0xff] 0.0
          %638 = vst [vmem:[#allocation4 + $0x8] sm:$0xff] 0.0
          %639 = vst [vmem:[#allocation4 + $0x10] sm:$0xff] 0.0
          %640 = vst [vmem:[#allocation4 + $0x18] sm:$0xff] 0.0
          %641 = vst [vmem:[#allocation4 + $0x20] sm:$0xff] 0.0
          %642 = vst [vmem:[#allocation4 + $0x28] sm:$0xff] 0.0
          %643 = vst [vmem:[#allocation4 + $0x30] sm:$0xff] 0.0
          %644 = vst [vmem:[#allocation4 + $0x38] sm:$0xff] 0.0
        $region122: #{tpu_custom_call.1} parent=93 // pred_fallthru
          _
        %s645 = sld [smem:[#allocation7 + %s45]]
        %p646 = scmp.lt.s32.totalorder %s46, %s645
        // Predicated region
        $region123: #{tpu_custom_call.1} parent=93 // pred_check
          %p647 = pneg %p646
        $region124: #{tpu_custom_call.1} parent=93 // pred_check_branch
          %649 = sbr.rel (%p647) target = $region126
        $region125: #{tpu_custom_call.1} parent=93 // pred_region
          %v650 = vld [vmem:[%s529] sm:$0xff]
          %v651 = vld [vmem:[%s529 + $0x8] sm:$0xff]
          %v652 = vld [vmem:[%s529 + $0x10] sm:$0xff]
          %v653 = vld [vmem:[%s529 + $0x18] sm:$0xff]
          %v654 = vld [vmem:[%s529 + $0x20] sm:$0xff]
          %v655 = vld [vmem:[%s529 + $0x28] sm:$0xff]
          %v656 = vld [vmem:[%s529 + $0x30] sm:$0xff]
          %v657 = vld [vmem:[%s529 + $0x38] sm:$0xff]
          %v658 = vld [vmem:[%s529 + $0x40] sm:$0xff]
          %v659 = vld [vmem:[%s529 + $0x48] sm:$0xff]
          %v660 = vld [vmem:[%s529 + $0x50] sm:$0xff]
          %v661 = vld [vmem:[%s529 + $0x58] sm:$0xff]
          %v662 = vld [vmem:[%s529 + $0x60] sm:$0xff]
          %v663 = vld [vmem:[%s529 + $0x68] sm:$0xff]
          %v664 = vld [vmem:[%s529 + $0x70] sm:$0xff]
          %v665 = vld [vmem:[%s529 + $0x78] sm:$0xff]
          %v666 = vld [vmem:[%s520] sm:$0xff]
          %v667 = vld [vmem:[%s520 + $0x8] sm:$0xff]
          %v668 = vld [vmem:[%s520 + $0x10] sm:$0xff]
          %v669 = vld [vmem:[%s520 + $0x18] sm:$0xff]
          %v670 = vld [vmem:[%s520 + $0x20] sm:$0xff]
          %v671 = vld [vmem:[%s520 + $0x28] sm:$0xff]
          %v672 = vld [vmem:[%s520 + $0x30] sm:$0xff]
          %v673 = vld [vmem:[%s520 + $0x38] sm:$0xff]
          %v674 = vld [vmem:[%s537] sm:$0xff]
          %v675 = vld [vmem:[%s537 + $0x8] sm:$0xff]
          %vm676 = vnez %v674
          %vm677 = vnez %v675
          %v678 = vld [vmem:[#allocation14] sm:$0xff]
          %v679 = vld [vmem:[#allocation14 + $0x8] sm:$0xff]
          %v680 = vld [vmem:[#allocation14 + $0x10] sm:$0xff]
          %v681 = vld [vmem:[#allocation14 + $0x18] sm:$0xff]
          %v682 = vld [vmem:[#allocation14 + $0x20] sm:$0xff]
          %v683 = vld [vmem:[#allocation14 + $0x28] sm:$0xff]
          %v684 = vld [vmem:[#allocation14 + $0x30] sm:$0xff]
          %v685 = vld [vmem:[#allocation14 + $0x38] sm:$0xff]
          %v686 = vld [vmem:[#allocation14 + $0x40] sm:$0xff]
          %v687 = vld [vmem:[#allocation14 + $0x48] sm:$0xff]
          %v688 = vld [vmem:[#allocation14 + $0x50] sm:$0xff]
          %v689 = vld [vmem:[#allocation14 + $0x58] sm:$0xff]
          %v690 = vld [vmem:[#allocation14 + $0x60] sm:$0xff]
          %v691 = vld [vmem:[#allocation14 + $0x68] sm:$0xff]
          %v692 = vld [vmem:[#allocation14 + $0x70] sm:$0xff]
          %v693 = vld [vmem:[#allocation14 + $0x78] sm:$0xff]
          %694 = vmatprep.subr.mxu0 0.0
          %695 = vmatpush1.msra.mxu0 %v678
          %696 = vmatprep.subr.mxu0 0.0
          %697 = vmatpush1.msra.mxu0 %v679
          %698 = vmatprep.subr.mxu0 0.0
          %699 = vmatpush1.msra.mxu0 %v680
          %700 = vmatprep.subr.mxu0 0.0
          %701 = vmatpush1.msra.mxu0 %v681
          %702 = vmatprep.subr.mxu0 0.0
          %703 = vmatpush1.msra.mxu0 %v682
          %704 = vmatprep.subr.mxu0 0.0
          %705 = vmatpush1.msra.mxu0 %v683
          %706 = vmatprep.subr.mxu0 0.0
          %707 = vmatpush1.msra.mxu0 %v684
          %708 = vmatprep.subr.mxu0 0.0
          %709 = vmatpush1.msra.mxu0 %v685
          %710 = vmatprep.subr.mxu0 0.0
          %711 = vmatpush1.msra.mxu0 %v686
          %712 = vmatprep.subr.mxu0 0.0
          %713 = vmatpush1.msra.mxu0 %v687
          %714 = vmatprep.subr.mxu0 0.0
          %715 = vmatpush1.msra.mxu0 %v688
          %716 = vmatprep.subr.mxu0 0.0
          %717 = vmatpush1.msra.mxu0 %v689
          %718 = vmatprep.subr.mxu0 0.0
          %719 = vmatpush1.msra.mxu0 %v690
          %720 = vmatprep.subr.mxu0 0.0
          %721 = vmatpush1.msra.mxu0 %v691
          %722 = vmatprep.subr.mxu0 0.0
          %723 = vmatpush1.msra.mxu0 %v692
          %724 = vmatprep.subr.mxu0 0.0
          %725 = vmatpush1.msra.mxu0 %v693
          %726 = vmatprep.subr.mxu0 0.0
          %727 = vmatpush1.msra.mxu0 0.0
          %728 = vmatprep.subr.mxu0 0.0
          %729 = vmatpush1.msra.mxu0 0.0
          %730 = vmatprep.subr.mxu0 0.0
          %731 = vmatpush1.msra.mxu0 0.0
          %732 = vmatprep.subr.mxu0 0.0
          %733 = vmatpush1.msra.mxu0 0.0
          %734 = vmatprep.subr.mxu0 0.0
          %735 = vmatpush1.msra.mxu0 0.0
          %736 = vmatprep.subr.mxu0 0.0
          %737 = vmatpush1.msra.mxu0 0.0
          %738 = vmatprep.subr.mxu0 0.0
          %739 = vmatpush1.msra.mxu0 0.0
          %740 = vmatprep.subr.mxu0 0.0
          %741 = vmatpush1.msra.mxu0 0.0
          %742 = vmatprep.subr.mxu0 0.0
          %743 = vmatpush1.msra.mxu0 0.0
          %744 = vmatprep.subr.mxu0 0.0
          %745 = vmatpush1.msra.mxu0 0.0
          %746 = vmatprep.subr.mxu0 0.0
          %747 = vmatpush1.msra.mxu0 0.0
          %748 = vmatprep.subr.mxu0 0.0
          %749 = vmatpush1.msra.mxu0 0.0
          %750 = vmatprep.subr.mxu0 0.0
          %751 = vmatpush1.msra.mxu0 0.0
          %752 = vmatprep.subr.mxu0 0.0
          %753 = vmatpush1.msra.mxu0 0.0
          %754 = vmatprep.subr.mxu0 0.0
          %755 = vmatpush1.msra.mxu0 0.0
          %756 = vmatprep.subr.mxu0 0.0
          %757 = vmatpush1.msra.mxu0 0.0
          %758 = vmatprep.mubr.f32.mxu0 0.0
          %759 = vmatmul.mubr.f32.gmra.mrb[0].mxu0 %v650
          %v760 = vpop.f32.mrb[0].mxu0
          %v761 = vadd.f32 0.0, %v760
          %v762 = vpop.f32.mrb[0].mxu0
          %763 = vmatprep.mubr.f32.mxu0 0.0
          %764 = vmatmul.mubr.f32.gmra.mrb[0].mxu0 %v651
          %v765 = vpop.f32.mrb[0].mxu0
          %v766 = vadd.f32 0.0, %v765
          %v767 = vpop.f32.mrb[0].mxu0
          %768 = vmatprep.mubr.f32.mxu0 0.0
          %769 = vmatmul.mubr.f32.gmra.mrb[0].mxu0 %v652
          %v770 = vpop.f32.mrb[0].mxu0
          %v771 = vadd.f32 0.0, %v770
          %v772 = vpop.f32.mrb[0].mxu0
          %773 = vmatprep.mubr.f32.mxu0 0.0
          %774 = vmatmul.mubr.f32.gmra.mrb[0].mxu0 %v653
          %v775 = vpop.f32.mrb[0].mxu0
          %v776 = vadd.f32 0.0, %v775
          %v777 = vpop.f32.mrb[0].mxu0
          %778 = vmatprep.mubr.f32.mxu0 0.0
          %779 = vmatmul.mubr.f32.gmra.mrb[0].mxu0 %v654
          %v780 = vpop.f32.mrb[0].mxu0
          %v781 = vadd.f32 0.0, %v780
          %v782 = vpop.f32.mrb[0].mxu0
          %783 = vmatprep.mubr.f32.mxu0 0.0
          %784 = vmatmul.mubr.f32.gmra.mrb[0].mxu0 %v655
          %v785 = vpop.f32.mrb[0].mxu0
          %v786 = vadd.f32 0.0, %v785
          %v787 = vpop.f32.mrb[0].mxu0
          %788 = vmatprep.mubr.f32.mxu0 0.0
          %789 = vmatmul.mubr.f32.gmra.mrb[0].mxu0 %v656
          %v790 = vpop.f32.mrb[0].mxu0
          %v791 = vadd.f32 0.0, %v790
          %v792 = vpop.f32.mrb[0].mxu0
          %793 = vmatprep.mubr.f32.mxu0 0.0
          %794 = vmatmul.mubr.f32.gmra.mrb[0].mxu0 %v657
          %v795 = vpop.f32.mrb[0].mxu0
          %v796 = vadd.f32 0.0, %v795
          %v797 = vpop.f32.mrb[0].mxu0
          %798 = vmatprep.mubr.f32.mxu0 0.0
          %799 = vmatmul.mubr.f32.gmra.mrb[0].mxu0 %v658
          %v800 = vpop.f32.mrb[0].mxu0
          %v801 = vadd.f32 0.0, %v800
          %v802 = vpop.f32.mrb[0].mxu0
          %803 = vmatprep.mubr.f32.mxu0 0.0
          %804 = vmatmul.mubr.f32.gmra.mrb[0].mxu0 %v659
          %v805 = vpop.f32.mrb[0].mxu0
          %v806 = vadd.f32 0.0, %v805
          %v807 = vpop.f32.mrb[0].mxu0
          %808 = vmatprep.mubr.f32.mxu0 0.0
          %809 = vmatmul.mubr.f32.gmra.mrb[0].mxu0 %v660
          %v810 = vpop.f32.mrb[0].mxu0
          %v811 = vadd.f32 0.0, %v810
          %v812 = vpop.f32.mrb[0].mxu0
          %813 = vmatprep.mubr.f32.mxu0 0.0
          %814 = vmatmul.mubr.f32.gmra.mrb[0].mxu0 %v661
          %v815 = vpop.f32.mrb[0].mxu0
          %v816 = vadd.f32 0.0, %v815
          %v817 = vpop.f32.mrb[0].mxu0
          %818 = vmatprep.mubr.f32.mxu0 0.0
          %819 = vmatmul.mubr.f32.gmra.mrb[0].mxu0 %v662
          %v820 = vpop.f32.mrb[0].mxu0
          %v821 = vadd.f32 0.0, %v820
          %v822 = vpop.f32.mrb[0].mxu0
          %823 = vmatprep.mubr.f32.mxu0 0.0
          %824 = vmatmul.mubr.f32.gmra.mrb[0].mxu0 %v663
          %v825 = vpop.f32.mrb[0].mxu0
          %v826 = vadd.f32 0.0, %v825
          %v827 = vpop.f32.mrb[0].mxu0
          %828 = vmatprep.mubr.f32.mxu0 0.0
          %829 = vmatmul.mubr.f32.gmra.mrb[0].mxu0 %v664
          %v830 = vpop.f32.mrb[0].mxu0
          %v831 = vadd.f32 0.0, %v830
          %v832 = vpop.f32.mrb[0].mxu0
          %833 = vmatprep.mubr.f32.mxu0 0.0
          %834 = vmatmul.mubr.f32.gmra.mrb[0].mxu0 %v665
          %v835 = vpop.f32.mrb[0].mxu0
          %v836 = vadd.f32 0.0, %v835
          %v837 = vpop.f32.mrb[0].mxu0
          %838 = vdwg.mxu0
          %v839 = vld [vmem:[%s6] sm:$0xff]
          %840 = vmatprep.subr.mxu0 0.0
          %841 = vmatpush1.xpose.msra.mxu0 %v650
          %842 = vmatprep.subr.mxu0 0.0
          %843 = vmatpush1.xpose.msra.mxu0 %v651
          %844 = vmatprep.subr.mxu0 0.0
          %845 = vmatpush1.xpose.msra.mxu0 %v652
          %846 = vmatprep.subr.mxu0 0.0
          %847 = vmatpush1.xpose.msra.mxu0 %v653
          %848 = vmatprep.subr.mxu0 0.0
          %849 = vmatpush1.xpose.msra.mxu0 %v654
          %850 = vmatprep.subr.mxu0 0.0
          %851 = vmatpush1.xpose.msra.mxu0 %v655
          %852 = vmatprep.subr.mxu0 0.0
          %853 = vmatpush1.xpose.msra.mxu0 %v656
          %854 = vmatprep.subr.mxu0 0.0
          %855 = vmatpush1.xpose.msra.mxu0 %v657
          %856 = vmatprep.subr.mxu0 0.0
          %857 = vmatpush1.xpose.msra.mxu0 %v658
          %858 = vmatprep.subr.mxu0 0.0
          %859 = vmatpush1.xpose.msra.mxu0 %v659
          %860 = vmatprep.subr.mxu0 0.0
          %861 = vmatpush1.xpose.msra.mxu0 %v660
          %862 = vmatprep.subr.mxu0 0.0
          %863 = vmatpush1.xpose.msra.mxu0 %v661
          %864 = vmatprep.subr.mxu0 0.0
          %865 = vmatpush1.xpose.msra.mxu0 %v662
          %866 = vmatprep.subr.mxu0 0.0
          %867 = vmatpush1.xpose.msra.mxu0 %v663
          %868 = vmatprep.subr.mxu0 0.0
          %869 = vmatpush1.xpose.msra.mxu0 %v664
          %870 = vmatprep.subr.mxu0 0.0
          %871 = vmatpush1.xpose.msra.mxu0 %v665
          %872 = vmatprep.subr.mxu0 0.0
          %873 = vmatpush1.xpose.msra.mxu0 0.0
          %874 = vmatprep.subr.mxu0 0.0
          %875 = vmatpush1.xpose.msra.mxu0 0.0
          %876 = vmatprep.subr.mxu0 0.0
          %877 = vmatpush1.xpose.msra.mxu0 0.0
          %878 = vmatprep.subr.mxu0 0.0
          %879 = vmatpush1.xpose.msra.mxu0 0.0
          %880 = vmatprep.subr.mxu0 0.0
          %881 = vmatpush1.xpose.msra.mxu0 0.0
          %882 = vmatprep.subr.mxu0 0.0
          %883 = vmatpush1.xpose.msra.mxu0 0.0
          %884 = vmatprep.subr.mxu0 0.0
          %885 = vmatpush1.xpose.msra.mxu0 0.0
          %886 = vmatprep.subr.mxu0 0.0
          %887 = vmatpush1.xpose.msra.mxu0 0.0
          %888 = vmatprep.subr.mxu0 0.0
          %889 = vmatpush1.xpose.msra.mxu0 0.0
          %890 = vmatprep.subr.mxu0 0.0
          %891 = vmatpush1.xpose.msra.mxu0 0.0
          %892 = vmatprep.subr.mxu0 0.0
          %893 = vmatpush1.xpose.msra.mxu0 0.0
          %894 = vmatprep.subr.mxu0 0.0
          %895 = vmatpush1.xpose.msra.mxu0 0.0
          %896 = vmatprep.subr.mxu0 0.0
          %897 = vmatpush1.xpose.msra.mxu0 0.0
          %898 = vmatprep.subr.mxu0 0.0
          %899 = vmatpush1.xpose.msra.mxu0 0.0
          %900 = vmatprep.subr.mxu0 0.0
          %901 = vmatpush1.xpose.msra.mxu0 0.0
          %902 = vmatprep.subr.mxu0 0.0
          %903 = vmatpush1.xpose.msra.mxu0 0.0
          %904 = vmatprep.mubr.f32.mxu0 0.0
          %905 = vmatmul.mubr.f32.gmra.mrb[0].mxu0 %v839
          %v906 = vpop.f32.mrb[0].mxu0
          %v907 = vadd.f32 0.0, %v906
          %v908 = vpop.f32.mrb[0].mxu0
          %909 = vdwg.mxu0
          %v910 = vld [vmem:[%s7] sm:$0xff]
          %v911 = vld [vmem:[%s7 + $0x8] sm:$0xff]
          %v912 = vld [vmem:[%s7 + $0x10] sm:$0xff]
          %v913 = vld [vmem:[%s7 + $0x18] sm:$0xff]
          %v914 = vld [vmem:[%s7 + $0x20] sm:$0xff]
          %v915 = vld [vmem:[%s7 + $0x28] sm:$0xff]
          %v916 = vld [vmem:[%s7 + $0x30] sm:$0xff]
          %v917 = vld [vmem:[%s7 + $0x38] sm:$0xff]
          %v918 = vld [vmem:[%s7 + $0x40] sm:$0xff]
          %v919 = vld [vmem:[%s7 + $0x48] sm:$0xff]
          %v920 = vld [vmem:[%s7 + $0x50] sm:$0xff]
          %v921 = vld [vmem:[%s7 + $0x58] sm:$0xff]
          %v922 = vld [vmem:[%s7 + $0x60] sm:$0xff]
          %v923 = vld [vmem:[%s7 + $0x68] sm:$0xff]
          %v924 = vld [vmem:[%s7 + $0x70] sm:$0xff]
          %v925 = vld [vmem:[%s7 + $0x78] sm:$0xff]
          %926 = vmatprep.subr.mxu0 0.0
          %927 = vmatpush1.msra.mxu0 %v910
          %928 = vmatprep.subr.mxu0 0.0
          %929 = vmatpush1.msra.mxu0 %v911
          %930 = vmatprep.subr.mxu0 0.0
          %931 = vmatpush1.msra.mxu0 %v912
          %932 = vmatprep.subr.mxu0 0.0
          %933 = vmatpush1.msra.mxu0 %v913
          %934 = vmatprep.subr.mxu0 0.0
          %935 = vmatpush1.msra.mxu0 %v914
          %936 = vmatprep.subr.mxu0 0.0
          %937 = vmatpush1.msra.mxu0 %v915
          %938 = vmatprep.subr.mxu0 0.0
          %939 = vmatpush1.msra.mxu0 %v916
          %940 = vmatprep.subr.mxu0 0.0
          %941 = vmatpush1.msra.mxu0 %v917
          %942 = vmatprep.subr.mxu0 0.0
          %943 = vmatpush1.msra.mxu0 %v918
          %944 = vmatprep.subr.mxu0 0.0
          %945 = vmatpush1.msra.mxu0 %v919
          %946 = vmatprep.subr.mxu0 0.0
          %947 = vmatpush1.msra.mxu0 %v920
          %948 = vmatprep.subr.mxu0 0.0
          %949 = vmatpush1.msra.mxu0 %v921
          %950 = vmatprep.subr.mxu0 0.0
          %951 = vmatpush1.msra.mxu0 %v922
          %952 = vmatprep.subr.mxu0 0.0
          %953 = vmatpush1.msra.mxu0 %v923
          %954 = vmatprep.subr.mxu0 0.0
          %955 = vmatpush1.msra.mxu0 %v924
          %956 = vmatprep.subr.mxu0 0.0
          %957 = vmatpush1.msra.mxu0 %v925
          %958 = vmatprep.subr.mxu0 0.0
          %959 = vmatpush1.msra.mxu0 0.0
          %960 = vmatprep.subr.mxu0 0.0
          %961 = vmatpush1.msra.mxu0 0.0
          %962 = vmatprep.subr.mxu0 0.0
          %963 = vmatpush1.msra.mxu0 0.0
          %964 = vmatprep.subr.mxu0 0.0
          %965 = vmatpush1.msra.mxu0 0.0
          %966 = vmatprep.subr.mxu0 0.0
          %967 = vmatpush1.msra.mxu0 0.0
          %968 = vmatprep.subr.mxu0 0.0
          %969 = vmatpush1.msra.mxu0 0.0
          %970 = vmatprep.subr.mxu0 0.0
          %971 = vmatpush1.msra.mxu0 0.0
          %972 = vmatprep.subr.mxu0 0.0
          %973 = vmatpush1.msra.mxu0 0.0
          %974 = vmatprep.subr.mxu0 0.0
          %975 = vmatpush1.msra.mxu0 0.0
          %976 = vmatprep.subr.mxu0 0.0
          %977 = vmatpush1.msra.mxu0 0.0
          %978 = vmatprep.subr.mxu0 0.0
          %979 = vmatpush1.msra.mxu0 0.0
          %980 = vmatprep.subr.mxu0 0.0
          %981 = vmatpush1.msra.mxu0 0.0
          %982 = vmatprep.subr.mxu0 0.0
          %983 = vmatpush1.msra.mxu0 0.0
          %984 = vmatprep.subr.mxu0 0.0
          %985 = vmatpush1.msra.mxu0 0.0
          %986 = vmatprep.subr.mxu0 0.0
          %987 = vmatpush1.msra.mxu0 0.0
          %988 = vmatprep.subr.mxu0 0.0
          %989 = vmatpush1.msra.mxu0 0.0
          %990 = vmatprep.mubr.f32.mxu0 0.0
          %991 = vmatmul.mubr.f32.gmra.mrb[0].mxu0 %v666
          %v992 = vpop.f32.mrb[0].mxu0
          %v993 = vadd.f32 0.0, %v992
          %v994 = vpop.f32.mrb[0].mxu0
          %995 = vmatprep.mubr.f32.mxu0 0.0
          %996 = vmatmul.mubr.f32.gmra.mrb[0].mxu0 %v667
          %v997 = vpop.f32.mrb[0].mxu0
          %v998 = vadd.f32 0.0, %v997
          %v999 = vpop.f32.mrb[0].mxu0
          %1000 = vmatprep.mubr.f32.mxu0 0.0
          %1001 = vmatmul.mubr.f32.gmra.mrb[0].mxu0 %v668
          %v1002 = vpop.f32.mrb[0].mxu0
          %v1003 = vadd.f32 0.0, %v1002
          %v1004 = vpop.f32.mrb[0].mxu0
          %1005 = vmatprep.mubr.f32.mxu0 0.0
          %1006 = vmatmul.mubr.f32.gmra.mrb[0].mxu0 %v669
          %v1007 = vpop.f32.mrb[0].mxu0
          %v1008 = vadd.f32 0.0, %v1007
          %v1009 = vpop.f32.mrb[0].mxu0
          %1010 = vmatprep.mubr.f32.mxu0 0.0
          %1011 = vmatmul.mubr.f32.gmra.mrb[0].mxu0 %v670
          %v1012 = vpop.f32.mrb[0].mxu0
          %v1013 = vadd.f32 0.0, %v1012
          %v1014 = vpop.f32.mrb[0].mxu0
          %1015 = vmatprep.mubr.f32.mxu0 0.0
          %1016 = vmatmul.mubr.f32.gmra.mrb[0].mxu0 %v671
          %v1017 = vpop.f32.mrb[0].mxu0
          %v1018 = vadd.f32 0.0, %v1017
          %v1019 = vpop.f32.mrb[0].mxu0
          %1020 = vmatprep.mubr.f32.mxu0 0.0
          %1021 = vmatmul.mubr.f32.gmra.mrb[0].mxu0 %v672
          %v1022 = vpop.f32.mrb[0].mxu0
          %v1023 = vadd.f32 0.0, %v1022
          %v1024 = vpop.f32.mrb[0].mxu0
          %1025 = vmatprep.mubr.f32.mxu0 0.0
          %1026 = vmatmul.mubr.f32.gmra.mrb[0].mxu0 %v673
          %v1027 = vpop.f32.mrb[0].mxu0
          %v1028 = vadd.f32 0.0, %v1027
          %v1029 = vpop.f32.mrb[0].mxu0
          %1030 = vdwg.mxu0
          %1032 = vset.pattern.permute.xlu0 0
          %1033 = vperm.xlu0 %1032, %v993
          %v1034 = vpop.permute.xlu0 %1033
          %1037 = vset.pattern.permute.xlu0 0
          %1038 = vperm.xlu0 %1037, %v998
          %v1039 = vpop.permute.xlu0 %1038
          %1042 = vset.pattern.permute.xlu0 0
          %1043 = vperm.xlu0 %1042, %v1003
          %v1044 = vpop.permute.xlu0 %1043
          %1047 = vset.pattern.permute.xlu0 0
          %1048 = vperm.xlu0 %1047, %v1008
          %v1049 = vpop.permute.xlu0 %1048
          %1052 = vset.pattern.permute.xlu0 0
          %1053 = vperm.xlu0 %1052, %v1013
          %v1054 = vpop.permute.xlu0 %1053
          %1057 = vset.pattern.permute.xlu0 0
          %1058 = vperm.xlu0 %1057, %v1018
          %v1059 = vpop.permute.xlu0 %1058
          %1062 = vset.pattern.permute.xlu0 0
          %1063 = vperm.xlu0 %1062, %v1023
          %v1064 = vpop.permute.xlu0 %1063
          %1067 = vset.pattern.permute.xlu0 0
          %1068 = vperm.xlu0 %1067, %v1028
          %v1069 = vpop.permute.xlu0 %1068
          %v1071 = vlaneseq
          %v1072 = vshrl.u32 %v1071, 7
          %v1073 = vsub.s32 0, %v1072
          %v1074 = vrot.slane %v907, %v1073
          %v1075 = vadd.f32 %v1034, %v1074
          %v1076 = vadd.f32 %v1039, %v1074
          %v1077 = vadd.f32 %v1044, %v1074
          %v1078 = vadd.f32 %v1049, %v1074
          %v1079 = vadd.f32 %v1054, %v1074
          %v1080 = vadd.f32 %v1059, %v1074
          %v1081 = vadd.f32 %v1064, %v1074
          %v1082 = vadd.f32 %v1069, %v1074
          %vm1083 = vcmp.gt.f32.partialorder %v1075, 0.0
          %vm1084 = vcmp.gt.f32.partialorder %v1076, 0.0
          %vm1085 = vcmp.gt.f32.partialorder %v1077, 0.0
          %vm1086 = vcmp.gt.f32.partialorder %v1078, 0.0
          %vm1087 = vcmp.gt.f32.partialorder %v1079, 0.0
          %vm1088 = vcmp.gt.f32.partialorder %v1080, 0.0
          %vm1089 = vcmp.gt.f32.partialorder %v1081, 0.0
          %vm1090 = vcmp.gt.f32.partialorder %v1082, 0.0
          %v1091 = vmul.f32 %v1075, 0.2
          %v1092 = vmul.f32 %v1076, 0.2
          %v1093 = vmul.f32 %v1077, 0.2
          %v1094 = vmul.f32 %v1078, 0.2
          %v1095 = vmul.f32 %v1079, 0.2
          %v1096 = vmul.f32 %v1080, 0.2
          %v1097 = vmul.f32 %v1081, 0.2
          %v1098 = vmul.f32 %v1082, 0.2
          %v1099 = vsel %vm1083, %v1075, %v1091
          %v1100 = vsel %vm1084, %v1076, %v1092
          %v1101 = vsel %vm1085, %v1077, %v1093
          %v1102 = vsel %vm1086, %v1078, %v1094
          %v1103 = vsel %vm1087, %v1079, %v1095
          %v1104 = vsel %vm1088, %v1080, %v1096
          %v1105 = vsel %vm1089, %v1081, %v1097
          %v1106 = vsel %vm1090, %v1082, %v1098
          %v1107 = vsel %vm676, 16843009, 0
          %v1108 = vsel %vm677, 16843009, 0
          %v1109 = vunpack.c.0.s8 %v1107
          %v1110 = vunpack.c.1.s8 %v1107
          %v1111 = vunpack.c.2.s8 %v1107
          %v1112 = vunpack.c.3.s8 %v1107
          %v1113 = vunpack.c.0.s8 %v1108
          %v1114 = vunpack.c.1.s8 %v1108
          %v1115 = vunpack.c.2.s8 %v1108
          %v1116 = vunpack.c.3.s8 %v1108
          %v1117 = vpack.c.b16 %v1109, %v1109
          %v1118 = vpack.c.b8 %v1117, %v1117
          %v1119 = vpack.c.b16 %v1110, %v1110
          %v1120 = vpack.c.b8 %v1119, %v1119
          %v1121 = vpack.c.b16 %v1111, %v1111
          %v1122 = vpack.c.b8 %v1121, %v1121
          %v1123 = vpack.c.b16 %v1112, %v1112
          %v1124 = vpack.c.b8 %v1123, %v1123
          %v1125 = vpack.c.b16 %v1113, %v1113
          %v1126 = vpack.c.b8 %v1125, %v1125
          %v1127 = vpack.c.b16 %v1114, %v1114
          %v1128 = vpack.c.b8 %v1127, %v1127
          %v1129 = vpack.c.b16 %v1115, %v1115
          %v1130 = vpack.c.b8 %v1129, %v1129
          %v1131 = vpack.c.b16 %v1116, %v1116
          %v1132 = vpack.c.b8 %v1131, %v1131
          %vm1133 = vnez %v1118
          %vm1134 = vnez %v1120
          %vm1135 = vnez %v1122
          %vm1136 = vnez %v1124
          %vm1137 = vnez %v1126
          %vm1138 = vnez %v1128
          %vm1139 = vnez %v1130
          %vm1140 = vnez %v1132
          %v1141 = vsel %vm1133, 16843009, 0
          %v1142 = vsel %vm1134, 16843009, 0
          %v1143 = vsel %vm1135, 16843009, 0
          %v1144 = vsel %vm1136, 16843009, 0
          %v1145 = vsel %vm1137, 16843009, 0
          %v1146 = vsel %vm1138, 16843009, 0
          %v1147 = vsel %vm1139, 16843009, 0
          %v1148 = vsel %vm1140, 16843009, 0
          %v1149 = vunpack.c.0.s8 %v1141
          %v1150 = vunpack.c.0.s8 %v1142
          %v1151 = vunpack.c.0.s8 %v1143
          %v1152 = vunpack.c.0.s8 %v1144
          %v1153 = vunpack.c.0.s8 %v1145
          %v1154 = vunpack.c.0.s8 %v1146
          %v1155 = vunpack.c.0.s8 %v1147
          %v1156 = vunpack.c.0.s8 %v1148
          %vm1157 = vcmp.ne.s32.totalorder %v1149, 0
          %vm1158 = vcmp.ne.s32.totalorder %v1150, 0
          %vm1159 = vcmp.ne.s32.totalorder %v1151, 0
          %vm1160 = vcmp.ne.s32.totalorder %v1152, 0
          %vm1161 = vcmp.ne.s32.totalorder %v1153, 0
          %vm1162 = vcmp.ne.s32.totalorder %v1154, 0
          %vm1163 = vcmp.ne.s32.totalorder %v1155, 0
          %vm1164 = vcmp.ne.s32.totalorder %v1156, 0
          %v1165 = vsel %vm1157, %v1099, -1e+30
          %v1166 = vsel %vm1158, %v1100, -1e+30
          %v1167 = vsel %vm1159, %v1101, -1e+30
          %v1168 = vsel %vm1160, %v1102, -1e+30
          %v1169 = vsel %vm1161, %v1103, -1e+30
          %v1170 = vsel %vm1162, %v1104, -1e+30
          %v1171 = vsel %vm1163, %v1105, -1e+30
          %v1172 = vsel %vm1164, %v1106, -1e+30
          %v1173 = vld [vmem:[#allocation2] sm:$0xff]
          %v1174 = vld [vmem:[#allocation2 + $0x8] sm:$0xff]
          %v1175 = vld [vmem:[#allocation2 + $0x10] sm:$0xff]
          %v1176 = vld [vmem:[#allocation2 + $0x18] sm:$0xff]
          %v1177 = vld [vmem:[#allocation2 + $0x20] sm:$0xff]
          %v1178 = vld [vmem:[#allocation2 + $0x28] sm:$0xff]
          %v1179 = vld [vmem:[#allocation2 + $0x30] sm:$0xff]
          %v1180 = vld [vmem:[#allocation2 + $0x38] sm:$0xff]
          %1181 = vmax.xlane.f32.xlu0 %v1165
          %v1182 = vpop.xlane.xlu0 %1181
          %1183 = vmax.xlane.f32.xlu0 %v1166
          %v1184 = vpop.xlane.xlu0 %1183
          %1185 = vmax.xlane.f32.xlu0 %v1167
          %v1186 = vpop.xlane.xlu0 %1185
          %1187 = vmax.xlane.f32.xlu0 %v1168
          %v1188 = vpop.xlane.xlu0 %1187
          %1189 = vmax.xlane.f32.xlu0 %v1169
          %v1190 = vpop.xlane.xlu0 %1189
          %1191 = vmax.xlane.f32.xlu0 %v1170
          %v1192 = vpop.xlane.xlu0 %1191
          %1193 = vmax.xlane.f32.xlu0 %v1171
          %v1194 = vpop.xlane.xlu0 %1193
          %1195 = vmax.xlane.f32.xlu0 %v1172
          %v1196 = vpop.xlane.xlu0 %1195
          %v1197 = vmax.f32 %v1173, %v1182
          %v1198 = vmax.f32 %v1174, %v1184
          %v1199 = vmax.f32 %v1175, %v1186
          %v1200 = vmax.f32 %v1176, %v1188
          %v1201 = vmax.f32 %v1177, %v1190
          %v1202 = vmax.f32 %v1178, %v1192
          %v1203 = vmax.f32 %v1179, %v1194
          %v1204 = vmax.f32 %v1180, %v1196
          %v1205 = vsub.f32 %v1173, %v1197
          %v1206 = vsub.f32 %v1174, %v1198
          %v1207 = vsub.f32 %v1175, %v1199
          %v1208 = vsub.f32 %v1176, %v1200
          %v1209 = vsub.f32 %v1177, %v1201
          %v1210 = vsub.f32 %v1178, %v1202
          %v1211 = vsub.f32 %v1179, %v1203
          %v1212 = vsub.f32 %v1180, %v1204
          %v1213 = vmul.f32 %v1205, 1.442695
          %v1214 = vpow.pop %v1213
          %v1215 = vmul.f32 %v1206, 1.442695
          %v1216 = vpow.pop %v1215
          %v1217 = vmul.f32 %v1207, 1.442695
          %v1218 = vpow.pop %v1217
          %v1219 = vmul.f32 %v1208, 1.442695
          %v1220 = vpow.pop %v1219
          %v1221 = vmul.f32 %v1209, 1.442695
          %v1222 = vpow.pop %v1221
          %v1223 = vmul.f32 %v1210, 1.442695
          %v1224 = vpow.pop %v1223
          %v1225 = vmul.f32 %v1211, 1.442695
          %v1226 = vpow.pop %v1225
          %v1227 = vmul.f32 %v1212, 1.442695
          %v1228 = vpow.pop %v1227
          %1230 = vset.pattern.permute.xlu0 0
          %1231 = vperm.xlu0 %1230, %v1197
          %v1232 = vpop.permute.xlu0 %1231
          %1235 = vset.pattern.permute.xlu0 0
          %1236 = vperm.xlu0 %1235, %v1198
          %v1237 = vpop.permute.xlu0 %1236
          %1240 = vset.pattern.permute.xlu0 0
          %1241 = vperm.xlu0 %1240, %v1199
          %v1242 = vpop.permute.xlu0 %1241
          %1245 = vset.pattern.permute.xlu0 0
          %1246 = vperm.xlu0 %1245, %v1200
          %v1247 = vpop.permute.xlu0 %1246
          %1250 = vset.pattern.permute.xlu0 0
          %1251 = vperm.xlu0 %1250, %v1201
          %v1252 = vpop.permute.xlu0 %1251
          %1255 = vset.pattern.permute.xlu0 0
          %1256 = vperm.xlu0 %1255, %v1202
          %v1257 = vpop.permute.xlu0 %1256
          %1260 = vset.pattern.permute.xlu0 0
          %1261 = vperm.xlu0 %1260, %v1203
          %v1262 = vpop.permute.xlu0 %1261
          %1265 = vset.pattern.permute.xlu0 0
          %1266 = vperm.xlu0 %1265, %v1204
          %v1267 = vpop.permute.xlu0 %1266
          %v1269 = vsub.f32 %v1165, %v1232
          %v1270 = vsub.f32 %v1166, %v1237
          %v1271 = vsub.f32 %v1167, %v1242
          %v1272 = vsub.f32 %v1168, %v1247
          %v1273 = vsub.f32 %v1169, %v1252
          %v1274 = vsub.f32 %v1170, %v1257
          %v1275 = vsub.f32 %v1171, %v1262
          %v1276 = vsub.f32 %v1172, %v1267
          %v1277 = vmul.f32 %v1269, 1.442695
          %v1278 = vpow.pop %v1277
          %v1279 = vmul.f32 %v1270, 1.442695
          %v1280 = vpow.pop %v1279
          %v1281 = vmul.f32 %v1271, 1.442695
          %v1282 = vpow.pop %v1281
          %v1283 = vmul.f32 %v1272, 1.442695
          %v1284 = vpow.pop %v1283
          %v1285 = vmul.f32 %v1273, 1.442695
          %v1286 = vpow.pop %v1285
          %v1287 = vmul.f32 %v1274, 1.442695
          %v1288 = vpow.pop %v1287
          %v1289 = vmul.f32 %v1275, 1.442695
          %v1290 = vpow.pop %v1289
          %v1291 = vmul.f32 %v1276, 1.442695
          %v1292 = vpow.pop %v1291
          %v1293 = vld [vmem:[#allocation3] sm:$0xff]
          %v1294 = vld [vmem:[#allocation3 + $0x8] sm:$0xff]
          %v1295 = vld [vmem:[#allocation3 + $0x10] sm:$0xff]
          %v1296 = vld [vmem:[#allocation3 + $0x18] sm:$0xff]
          %v1297 = vld [vmem:[#allocation3 + $0x20] sm:$0xff]
          %v1298 = vld [vmem:[#allocation3 + $0x28] sm:$0xff]
          %v1299 = vld [vmem:[#allocation3 + $0x30] sm:$0xff]
          %v1300 = vld [vmem:[#allocation3 + $0x38] sm:$0xff]
          %v1301 = vmul.f32 %v1214, %v1293
          %v1302 = vmul.f32 %v1216, %v1294
          %v1303 = vmul.f32 %v1218, %v1295
          %v1304 = vmul.f32 %v1220, %v1296
          %v1305 = vmul.f32 %v1222, %v1297
          %v1306 = vmul.f32 %v1224, %v1298
          %v1307 = vmul.f32 %v1226, %v1299
          %v1308 = vmul.f32 %v1228, %v1300
          %1309 = vadd.xlane.f32.xlu0 %v1278
          %v1310 = vpop.xlane.xlu0 %1309
          %1311 = vadd.xlane.f32.xlu0 %v1280
          %v1312 = vpop.xlane.xlu0 %1311
          %1313 = vadd.xlane.f32.xlu0 %v1282
          %v1314 = vpop.xlane.xlu0 %1313
          %1315 = vadd.xlane.f32.xlu0 %v1284
          %v1316 = vpop.xlane.xlu0 %1315
          %1317 = vadd.xlane.f32.xlu0 %v1286
          %v1318 = vpop.xlane.xlu0 %1317
          %1319 = vadd.xlane.f32.xlu0 %v1288
          %v1320 = vpop.xlane.xlu0 %1319
          %1321 = vadd.xlane.f32.xlu0 %v1290
          %v1322 = vpop.xlane.xlu0 %1321
          %1323 = vadd.xlane.f32.xlu0 %v1292
          %v1324 = vpop.xlane.xlu0 %1323
          %v1325 = vadd.f32 %v1301, %v1310
          %v1326 = vadd.f32 %v1302, %v1312
          %v1327 = vadd.f32 %v1303, %v1314
          %v1328 = vadd.f32 %v1304, %v1316
          %v1329 = vadd.f32 %v1305, %v1318
          %v1330 = vadd.f32 %v1306, %v1320
          %v1331 = vadd.f32 %v1307, %v1322
          %v1332 = vadd.f32 %v1308, %v1324
          %vm1333 = vcmask 7168
          %1334 = vst.msk [vmem:[#allocation3] sm:$0xff] %vm1333, %v1325
          %1335 = vst.msk [vmem:[#allocation3 + $0x8] sm:$0xff] %vm1333, %v1326
          %1336 = vst.msk [vmem:[#allocation3 + $0x10] sm:$0xff] %vm1333, %v1327
          %1337 = vst.msk [vmem:[#allocation3 + $0x18] sm:$0xff] %vm1333, %v1328
          %1338 = vst.msk [vmem:[#allocation3 + $0x20] sm:$0xff] %vm1333, %v1329
          %1339 = vst.msk [vmem:[#allocation3 + $0x28] sm:$0xff] %vm1333, %v1330
          %1340 = vst.msk [vmem:[#allocation3 + $0x30] sm:$0xff] %vm1333, %v1331
          %1341 = vst.msk [vmem:[#allocation3 + $0x38] sm:$0xff] %vm1333, %v1332
          %v1342 = vld [vmem:[#allocation4] sm:$0xff]
          %v1343 = vld [vmem:[#allocation4 + $0x8] sm:$0xff]
          %v1344 = vld [vmem:[#allocation4 + $0x10] sm:$0xff]
          %v1345 = vld [vmem:[#allocation4 + $0x18] sm:$0xff]
          %v1346 = vld [vmem:[#allocation4 + $0x20] sm:$0xff]
          %v1347 = vld [vmem:[#allocation4 + $0x28] sm:$0xff]
          %v1348 = vld [vmem:[#allocation4 + $0x30] sm:$0xff]
          %v1349 = vld [vmem:[#allocation4 + $0x38] sm:$0xff]
          %1351 = vset.pattern.permute.xlu0 0
          %1352 = vperm.xlu0 %1351, %v1214
          %v1353 = vpop.permute.xlu0 %1352
          %1356 = vset.pattern.permute.xlu0 0
          %1357 = vperm.xlu0 %1356, %v1216
          %v1358 = vpop.permute.xlu0 %1357
          %1361 = vset.pattern.permute.xlu0 0
          %1362 = vperm.xlu0 %1361, %v1218
          %v1363 = vpop.permute.xlu0 %1362
          %1366 = vset.pattern.permute.xlu0 0
          %1367 = vperm.xlu0 %1366, %v1220
          %v1368 = vpop.permute.xlu0 %1367
          %1371 = vset.pattern.permute.xlu0 0
          %1372 = vperm.xlu0 %1371, %v1222
          %v1373 = vpop.permute.xlu0 %1372
          %1376 = vset.pattern.permute.xlu0 0
          %1377 = vperm.xlu0 %1376, %v1224
          %v1378 = vpop.permute.xlu0 %1377
          %1381 = vset.pattern.permute.xlu0 0
          %1382 = vperm.xlu0 %1381, %v1226
          %v1383 = vpop.permute.xlu0 %1382
          %1386 = vset.pattern.permute.xlu0 0
          %1387 = vperm.xlu0 %1386, %v1228
          %v1388 = vpop.permute.xlu0 %1387
          %v1390 = vmul.f32 %v1353, %v1342
          %v1391 = vmul.f32 %v1358, %v1343
          %v1392 = vmul.f32 %v1363, %v1344
          %v1393 = vmul.f32 %v1368, %v1345
          %v1394 = vmul.f32 %v1373, %v1346
          %v1395 = vmul.f32 %v1378, %v1347
          %v1396 = vmul.f32 %v1383, %v1348
          %v1397 = vmul.f32 %v1388, %v1349
          %1398 = vmatprep.subr.mxu0 0.0
          %1399 = vmatpush1.msra.mxu0 %v761
          %1400 = vmatprep.subr.mxu0 0.0
          %1401 = vmatpush1.msra.mxu0 %v766
          %1402 = vmatprep.subr.mxu0 0.0
          %1403 = vmatpush1.msra.mxu0 %v771
          %1404 = vmatprep.subr.mxu0 0.0
          %1405 = vmatpush1.msra.mxu0 %v776
          %1406 = vmatprep.subr.mxu0 0.0
          %1407 = vmatpush1.msra.mxu0 %v781
          %1408 = vmatprep.subr.mxu0 0.0
          %1409 = vmatpush1.msra.mxu0 %v786
          %1410 = vmatprep.subr.mxu0 0.0
          %1411 = vmatpush1.msra.mxu0 %v791
          %1412 = vmatprep.subr.mxu0 0.0
          %1413 = vmatpush1.msra.mxu0 %v796
          %1414 = vmatprep.subr.mxu0 0.0
          %1415 = vmatpush1.msra.mxu0 %v801
          %1416 = vmatprep.subr.mxu0 0.0
          %1417 = vmatpush1.msra.mxu0 %v806
          %1418 = vmatprep.subr.mxu0 0.0
          %1419 = vmatpush1.msra.mxu0 %v811
          %1420 = vmatprep.subr.mxu0 0.0
          %1421 = vmatpush1.msra.mxu0 %v816
          %1422 = vmatprep.subr.mxu0 0.0
          %1423 = vmatpush1.msra.mxu0 %v821
          %1424 = vmatprep.subr.mxu0 0.0
          %1425 = vmatpush1.msra.mxu0 %v826
          %1426 = vmatprep.subr.mxu0 0.0
          %1427 = vmatpush1.msra.mxu0 %v831
          %1428 = vmatprep.subr.mxu0 0.0
          %1429 = vmatpush1.msra.mxu0 %v836
          %1430 = vmatprep.subr.mxu0 0.0
          %1431 = vmatpush1.msra.mxu0 0.0
          %1432 = vmatprep.subr.mxu0 0.0
          %1433 = vmatpush1.msra.mxu0 0.0
          %1434 = vmatprep.subr.mxu0 0.0
          %1435 = vmatpush1.msra.mxu0 0.0
          %1436 = vmatprep.subr.mxu0 0.0
          %1437 = vmatpush1.msra.mxu0 0.0
          %1438 = vmatprep.subr.mxu0 0.0
          %1439 = vmatpush1.msra.mxu0 0.0
          %1440 = vmatprep.subr.mxu0 0.0
          %1441 = vmatpush1.msra.mxu0 0.0
          %1442 = vmatprep.subr.mxu0 0.0
          %1443 = vmatpush1.msra.mxu0 0.0
          %1444 = vmatprep.subr.mxu0 0.0
          %1445 = vmatpush1.msra.mxu0 0.0
          %1446 = vmatprep.subr.mxu0 0.0
          %1447 = vmatpush1.msra.mxu0 0.0
          %1448 = vmatprep.subr.mxu0 0.0
          %1449 = vmatpush1.msra.mxu0 0.0
          %1450 = vmatprep.subr.mxu0 0.0
          %1451 = vmatpush1.msra.mxu0 0.0
          %1452 = vmatprep.subr.mxu0 0.0
          %1453 = vmatpush1.msra.mxu0 0.0
          %1454 = vmatprep.subr.mxu0 0.0
          %1455 = vmatpush1.msra.mxu0 0.0
          %1456 = vmatprep.subr.mxu0 0.0
          %1457 = vmatpush1.msra.mxu0 0.0
          %1458 = vmatprep.subr.mxu0 0.0
          %1459 = vmatpush1.msra.mxu0 0.0
          %1460 = vmatprep.subr.mxu0 0.0
          %1461 = vmatpush1.msra.mxu0 0.0
          %1462 = vmatprep.mubr.f32.mxu0 0.0
          %1463 = vmatmul.mubr.f32.gmra.mrb[0].mxu0 %v1278
          %v1464 = vpop.f32.mrb[0].mxu0
          %v1465 = vadd.f32 0.0, %v1464
          %v1466 = vpop.f32.mrb[0].mxu0
          %1467 = vmatprep.mubr.f32.mxu0 0.0
          %1468 = vmatmul.mubr.f32.gmra.mrb[0].mxu0 %v1280
          %v1469 = vpop.f32.mrb[0].mxu0
          %v1470 = vadd.f32 0.0, %v1469
          %v1471 = vpop.f32.mrb[0].mxu0
          %1472 = vmatprep.mubr.f32.mxu0 0.0
          %1473 = vmatmul.mubr.f32.gmra.mrb[0].mxu0 %v1282
          %v1474 = vpop.f32.mrb[0].mxu0
          %v1475 = vadd.f32 0.0, %v1474
          %v1476 = vpop.f32.mrb[0].mxu0
          %1477 = vmatprep.mubr.f32.mxu0 0.0
          %1478 = vmatmul.mubr.f32.gmra.mrb[0].mxu0 %v1284
          %v1479 = vpop.f32.mrb[0].mxu0
          %v1480 = vadd.f32 0.0, %v1479
          %v1481 = vpop.f32.mrb[0].mxu0
          %1482 = vmatprep.mubr.f32.mxu0 0.0
          %1483 = vmatmul.mubr.f32.gmra.mrb[0].mxu0 %v1286
          %v1484 = vpop.f32.mrb[0].mxu0
          %v1485 = vadd.f32 0.0, %v1484
          %v1486 = vpop.f32.mrb[0].mxu0
          %1487 = vmatprep.mubr.f32.mxu0 0.0
          %1488 = vmatmul.mubr.f32.gmra.mrb[0].mxu0 %v1288
          %v1489 = vpop.f32.mrb[0].mxu0
          %v1490 = vadd.f32 0.0, %v1489
          %v1491 = vpop.f32.mrb[0].mxu0
          %1492 = vmatprep.mubr.f32.mxu0 0.0
          %1493 = vmatmul.mubr.f32.gmra.mrb[0].mxu0 %v1290
          %v1494 = vpop.f32.mrb[0].mxu0
          %v1495 = vadd.f32 0.0, %v1494
          %v1496 = vpop.f32.mrb[0].mxu0
          %1497 = vmatprep.mubr.f32.mxu0 0.0
          %1498 = vmatmul.mubr.f32.gmra.mrb[0].mxu0 %v1292
          %v1499 = vpop.f32.mrb[0].mxu0
          %v1500 = vadd.f32 0.0, %v1499
          %v1501 = vpop.f32.mrb[0].mxu0
          %1502 = vdwg.mxu0
          %v1503 = vadd.f32 %v1390, %v1465
          %v1504 = vadd.f32 %v1391, %v1470
          %v1505 = vadd.f32 %v1392, %v1475
          %v1506 = vadd.f32 %v1393, %v1480
          %v1507 = vadd.f32 %v1394, %v1485
          %v1508 = vadd.f32 %v1395, %v1490
          %v1509 = vadd.f32 %v1396, %v1495
          %v1510 = vadd.f32 %v1397, %v1500
          %vm1511 = vcmask 64512
          %1512 = vst.msk [vmem:[#allocation4] sm:$0xff] %vm1511, %v1503
          %1513 = vst.msk [vmem:[#allocation4 + $0x8] sm:$0xff] %vm1511, %v1504
          %1514 = vst.msk [vmem:[#allocation4 + $0x10] sm:$0xff] %vm1511, %v1505
          %1515 = vst.msk [vmem:[#allocation4 + $0x18] sm:$0xff] %vm1511, %v1506
          %1516 = vst.msk [vmem:[#allocation4 + $0x20] sm:$0xff] %vm1511, %v1507
          %1517 = vst.msk [vmem:[#allocation4 + $0x28] sm:$0xff] %vm1511, %v1508
          %1518 = vst.msk [vmem:[#allocation4 + $0x30] sm:$0xff] %vm1511, %v1509
          %1519 = vst.msk [vmem:[#allocation4 + $0x38] sm:$0xff] %vm1511, %v1510
          %1520 = vst.msk [vmem:[#allocation2] sm:$0xff] %vm1333, %v1197
          %1521 = vst.msk [vmem:[#allocation2 + $0x8] sm:$0xff] %vm1333, %v1198
          %1522 = vst.msk [vmem:[#allocation2 + $0x10] sm:$0xff] %vm1333, %v1199
          %1523 = vst.msk [vmem:[#allocation2 + $0x18] sm:$0xff] %vm1333, %v1200
          %1524 = vst.msk [vmem:[#allocation2 + $0x20] sm:$0xff] %vm1333, %v1201
          %1525 = vst.msk [vmem:[#allocation2 + $0x28] sm:$0xff] %vm1333, %v1202
          %1526 = vst.msk [vmem:[#allocation2 + $0x30] sm:$0xff] %vm1333, %v1203
          %1527 = vst.msk [vmem:[#allocation2 + $0x38] sm:$0xff] %vm1333, %v1204
          %1528 = vset.pattern.permute.xlu0 1
          %1529 = vperm.xlu0 %1528, %v993
          %v1530 = vpop.permute.xlu0 %1529
          %1532 = vset.pattern.permute.xlu0 1
          %1533 = vperm.xlu0 %1532, %v998
          %v1534 = vpop.permute.xlu0 %1533
          %1536 = vset.pattern.permute.xlu0 1
          %1537 = vperm.xlu0 %1536, %v1003
          %v1538 = vpop.permute.xlu0 %1537
          %1540 = vset.pattern.permute.xlu0 1
          %1541 = vperm.xlu0 %1540, %v1008
          %v1542 = vpop.permute.xlu0 %1541
          %1544 = vset.pattern.permute.xlu0 1
          %1545 = vperm.xlu0 %1544, %v1013
          %v1546 = vpop.permute.xlu0 %1545
          %1548 = vset.pattern.permute.xlu0 1
          %1549 = vperm.xlu0 %1548, %v1018
          %v1550 = vpop.permute.xlu0 %1549
          %1552 = vset.pattern.permute.xlu0 1
          %1553 = vperm.xlu0 %1552, %v1023
          %v1554 = vpop.permute.xlu0 %1553
          %1556 = vset.pattern.permute.xlu0 1
          %1557 = vperm.xlu0 %1556, %v1028
          %v1558 = vpop.permute.xlu0 %1557
          %v1560 = vlaneseq
          %v1561 = vshrl.u32 %v1560, 7
          %v1562 = vsub.s32 1, %v1561
          %v1563 = vrot.slane %v907, %v1562
          %v1564 = vadd.f32 %v1530, %v1563
          %v1565 = vadd.f32 %v1534, %v1563
          %v1566 = vadd.f32 %v1538, %v1563
          %v1567 = vadd.f32 %v1542, %v1563
          %v1568 = vadd.f32 %v1546, %v1563
          %v1569 = vadd.f32 %v1550, %v1563
          %v1570 = vadd.f32 %v1554, %v1563
          %v1571 = vadd.f32 %v1558, %v1563
          %vm1572 = vcmp.gt.f32.partialorder %v1564, 0.0
          %vm1573 = vcmp.gt.f32.partialorder %v1565, 0.0
          %vm1574 = vcmp.gt.f32.partialorder %v1566, 0.0
          %vm1575 = vcmp.gt.f32.partialorder %v1567, 0.0
          %vm1576 = vcmp.gt.f32.partialorder %v1568, 0.0
          %vm1577 = vcmp.gt.f32.partialorder %v1569, 0.0
          %vm1578 = vcmp.gt.f32.partialorder %v1570, 0.0
          %vm1579 = vcmp.gt.f32.partialorder %v1571, 0.0
          %v1580 = vmul.f32 %v1564, 0.2
          %v1581 = vmul.f32 %v1565, 0.2
          %v1582 = vmul.f32 %v1566, 0.2
          %v1583 = vmul.f32 %v1567, 0.2
          %v1584 = vmul.f32 %v1568, 0.2
          %v1585 = vmul.f32 %v1569, 0.2
          %v1586 = vmul.f32 %v1570, 0.2
          %v1587 = vmul.f32 %v1571, 0.2
          %v1588 = vsel %vm1572, %v1564, %v1580
          %v1589 = vsel %vm1573, %v1565, %v1581
          %v1590 = vsel %vm1574, %v1566, %v1582
          %v1591 = vsel %vm1575, %v1567, %v1583
          %v1592 = vsel %vm1576, %v1568, %v1584
          %v1593 = vsel %vm1577, %v1569, %v1585
          %v1594 = vsel %vm1578, %v1570, %v1586
          %v1595 = vsel %vm1579, %v1571, %v1587
          %v1596 = vsel %vm1157, %v1588, -1e+30
          %v1597 = vsel %vm1158, %v1589, -1e+30
          %v1598 = vsel %vm1159, %v1590, -1e+30
          %v1599 = vsel %vm1160, %v1591, -1e+30
          %v1600 = vsel %vm1161, %v1592, -1e+30
          %v1601 = vsel %vm1162, %v1593, -1e+30
          %v1602 = vsel %vm1163, %v1594, -1e+30
          %v1603 = vsel %vm1164, %v1595, -1e+30
          %v1604 = vld [vmem:[#allocation2] sm:$0xff]
          %v1605 = vld [vmem:[#allocation2 + $0x8] sm:$0xff]
          %v1606 = vld [vmem:[#allocation2 + $0x10] sm:$0xff]
          %v1607 = vld [vmem:[#allocation2 + $0x18] sm:$0xff]
          %v1608 = vld [vmem:[#allocation2 + $0x20] sm:$0xff]
          %v1609 = vld [vmem:[#allocation2 + $0x28] sm:$0xff]
          %v1610 = vld [vmem:[#allocation2 + $0x30] sm:$0xff]
          %v1611 = vld [vmem:[#allocation2 + $0x38] sm:$0xff]
          %1612 = vmax.xlane.f32.xlu0 %v1596
          %v1613 = vpop.xlane.xlu0 %1612
          %1614 = vmax.xlane.f32.xlu0 %v1597
          %v1615 = vpop.xlane.xlu0 %1614
          %1616 = vmax.xlane.f32.xlu0 %v1598
          %v1617 = vpop.xlane.xlu0 %1616
          %1618 = vmax.xlane.f32.xlu0 %v1599
          %v1619 = vpop.xlane.xlu0 %1618
          %1620 = vmax.xlane.f32.xlu0 %v1600
          %v1621 = vpop.xlane.xlu0 %1620
          %1622 = vmax.xlane.f32.xlu0 %v1601
          %v1623 = vpop.xlane.xlu0 %1622
          %1624 = vmax.xlane.f32.xlu0 %v1602
          %v1625 = vpop.xlane.xlu0 %1624
          %1626 = vmax.xlane.f32.xlu0 %v1603
          %v1627 = vpop.xlane.xlu0 %1626
          %v1628 = vmax.f32 %v1604, %v1613
          %v1629 = vmax.f32 %v1605, %v1615
          %v1630 = vmax.f32 %v1606, %v1617
          %v1631 = vmax.f32 %v1607, %v1619
          %v1632 = vmax.f32 %v1608, %v1621
          %v1633 = vmax.f32 %v1609, %v1623
          %v1634 = vmax.f32 %v1610, %v1625
          %v1635 = vmax.f32 %v1611, %v1627
          %v1636 = vsub.f32 %v1604, %v1628
          %v1637 = vsub.f32 %v1605, %v1629
          %v1638 = vsub.f32 %v1606, %v1630
          %v1639 = vsub.f32 %v1607, %v1631
          %v1640 = vsub.f32 %v1608, %v1632
          %v1641 = vsub.f32 %v1609, %v1633
          %v1642 = vsub.f32 %v1610, %v1634
          %v1643 = vsub.f32 %v1611, %v1635
          %v1644 = vmul.f32 %v1636, 1.442695
          %v1645 = vpow.pop %v1644
          %v1646 = vmul.f32 %v1637, 1.442695
          %v1647 = vpow.pop %v1646
          %v1648 = vmul.f32 %v1638, 1.442695
          %v1649 = vpow.pop %v1648
          %v1650 = vmul.f32 %v1639, 1.442695
          %v1651 = vpow.pop %v1650
          %v1652 = vmul.f32 %v1640, 1.442695
          %v1653 = vpow.pop %v1652
          %v1654 = vmul.f32 %v1641, 1.442695
          %v1655 = vpow.pop %v1654
          %v1656 = vmul.f32 %v1642, 1.442695
          %v1657 = vpow.pop %v1656
          %v1658 = vmul.f32 %v1643, 1.442695
          %v1659 = vpow.pop %v1658
          %1661 = vset.pattern.permute.xlu0 1
          %1662 = vperm.xlu0 %1661, %v1628
          %v1663 = vpop.permute.xlu0 %1662
          %1666 = vset.pattern.permute.xlu0 1
          %1667 = vperm.xlu0 %1666, %v1629
          %v1668 = vpop.permute.xlu0 %1667
          %1671 = vset.pattern.permute.xlu0 1
          %1672 = vperm.xlu0 %1671, %v1630
          %v1673 = vpop.permute.xlu0 %1672
          %1676 = vset.pattern.permute.xlu0 1
          %1677 = vperm.xlu0 %1676, %v1631
          %v1678 = vpop.permute.xlu0 %1677
          %1681 = vset.pattern.permute.xlu0 1
          %1682 = vperm.xlu0 %1681, %v1632
          %v1683 = vpop.permute.xlu0 %1682
          %1686 = vset.pattern.permute.xlu0 1
          %1687 = vperm.xlu0 %1686, %v1633
          %v1688 = vpop.permute.xlu0 %1687
          %1691 = vset.pattern.permute.xlu0 1
          %1692 = vperm.xlu0 %1691, %v1634
          %v1693 = vpop.permute.xlu0 %1692
          %1696 = vset.pattern.permute.xlu0 1
          %1697 = vperm.xlu0 %1696, %v1635
          %v1698 = vpop.permute.xlu0 %1697
          %v1700 = vsub.f32 %v1596, %v1663
          %v1701 = vsub.f32 %v1597, %v1668
          %v1702 = vsub.f32 %v1598, %v1673
          %v1703 = vsub.f32 %v1599, %v1678
          %v1704 = vsub.f32 %v1600, %v1683
          %v1705 = vsub.f32 %v1601, %v1688
          %v1706 = vsub.f32 %v1602, %v1693
          %v1707 = vsub.f32 %v1603, %v1698
          %v1708 = vmul.f32 %v1700, 1.442695
          %v1709 = vpow.pop %v1708
          %v1710 = vmul.f32 %v1701, 1.442695
          %v1711 = vpow.pop %v1710
          %v1712 = vmul.f32 %v1702, 1.442695
          %v1713 = vpow.pop %v1712
          %v1714 = vmul.f32 %v1703, 1.442695
          %v1715 = vpow.pop %v1714
          %v1716 = vmul.f32 %v1704, 1.442695
          %v1717 = vpow.pop %v1716
          %v1718 = vmul.f32 %v1705, 1.442695
          %v1719 = vpow.pop %v1718
          %v1720 = vmul.f32 %v1706, 1.442695
          %v1721 = vpow.pop %v1720
          %v1722 = vmul.f32 %v1707, 1.442695
          %v1723 = vpow.pop %v1722
          %v1724 = vld [vmem:[#allocation3] sm:$0xff]
          %v1725 = vld [vmem:[#allocation3 + $0x8] sm:$0xff]
          %v1726 = vld [vmem:[#allocation3 + $0x10] sm:$0xff]
          %v1727 = vld [vmem:[#allocation3 + $0x18] sm:$0xff]
          %v1728 = vld [vmem:[#allocation3 + $0x20] sm:$0xff]
          %v1729 = vld [vmem:[#allocation3 + $0x28] sm:$0xff]
          %v1730 = vld [vmem:[#allocation3 + $0x30] sm:$0xff]
          %v1731 = vld [vmem:[#allocation3 + $0x38] sm:$0xff]
          %v1732 = vmul.f32 %v1645, %v1724
          %v1733 = vmul.f32 %v1647, %v1725
          %v1734 = vmul.f32 %v1649, %v1726
          %v1735 = vmul.f32 %v1651, %v1727
          %v1736 = vmul.f32 %v1653, %v1728
          %v1737 = vmul.f32 %v1655, %v1729
          %v1738 = vmul.f32 %v1657, %v1730
          %v1739 = vmul.f32 %v1659, %v1731
          %1740 = vadd.xlane.f32.xlu0 %v1709
          %v1741 = vpop.xlane.xlu0 %1740
          %1742 = vadd.xlane.f32.xlu0 %v1711
          %v1743 = vpop.xlane.xlu0 %1742
          %1744 = vadd.xlane.f32.xlu0 %v1713
          %v1745 = vpop.xlane.xlu0 %1744
          %1746 = vadd.xlane.f32.xlu0 %v1715
          %v1747 = vpop.xlane.xlu0 %1746
          %1748 = vadd.xlane.f32.xlu0 %v1717
          %v1749 = vpop.xlane.xlu0 %1748
          %1750 = vadd.xlane.f32.xlu0 %v1719
          %v1751 = vpop.xlane.xlu0 %1750
          %1752 = vadd.xlane.f32.xlu0 %v1721
          %v1753 = vpop.xlane.xlu0 %1752
          %1754 = vadd.xlane.f32.xlu0 %v1723
          %v1755 = vpop.xlane.xlu0 %1754
          %v1756 = vadd.f32 %v1732, %v1741
          %v1757 = vadd.f32 %v1733, %v1743
          %v1758 = vadd.f32 %v1734, %v1745
          %v1759 = vadd.f32 %v1735, %v1747
          %v1760 = vadd.f32 %v1736, %v1749
          %v1761 = vadd.f32 %v1737, %v1751
          %v1762 = vadd.f32 %v1738, %v1753
          %v1763 = vadd.f32 %v1739, %v1755
          %vm1764 = vcmask 15368
          %1765 = vst.msk [vmem:[#allocation3] sm:$0xff] %vm1764, %v1756
          %1766 = vst.msk [vmem:[#allocation3 + $0x8] sm:$0xff] %vm1764, %v1757
          %1767 = vst.msk [vmem:[#allocation3 + $0x10] sm:$0xff] %vm1764, %v1758
          %1768 = vst.msk [vmem:[#allocation3 + $0x18] sm:$0xff] %vm1764, %v1759
          %1769 = vst.msk [vmem:[#allocation3 + $0x20] sm:$0xff] %vm1764, %v1760
          %1770 = vst.msk [vmem:[#allocation3 + $0x28] sm:$0xff] %vm1764, %v1761
          %1771 = vst.msk [vmem:[#allocation3 + $0x30] sm:$0xff] %vm1764, %v1762
          %1772 = vst.msk [vmem:[#allocation3 + $0x38] sm:$0xff] %vm1764, %v1763
          %v1773 = vld [vmem:[#allocation4] sm:$0xff]
          %v1774 = vld [vmem:[#allocation4 + $0x8] sm:$0xff]
          %v1775 = vld [vmem:[#allocation4 + $0x10] sm:$0xff]
          %v1776 = vld [vmem:[#allocation4 + $0x18] sm:$0xff]
          %v1777 = vld [vmem:[#allocation4 + $0x20] sm:$0xff]
          %v1778 = vld [vmem:[#allocation4 + $0x28] sm:$0xff]
          %v1779 = vld [vmem:[#allocation4 + $0x30] sm:$0xff]
          %v1780 = vld [vmem:[#allocation4 + $0x38] sm:$0xff]
          %1782 = vset.pattern.permute.xlu0 1
          %1783 = vperm.xlu0 %1782, %v1645
          %v1784 = vpop.permute.xlu0 %1783
          %1787 = vset.pattern.permute.xlu0 1
          %1788 = vperm.xlu0 %1787, %v1647
          %v1789 = vpop.permute.xlu0 %1788
          %1792 = vset.pattern.permute.xlu0 1
          %1793 = vperm.xlu0 %1792, %v1649
          %v1794 = vpop.permute.xlu0 %1793
          %1797 = vset.pattern.permute.xlu0 1
          %1798 = vperm.xlu0 %1797, %v1651
          %v1799 = vpop.permute.xlu0 %1798
          %1802 = vset.pattern.permute.xlu0 1
          %1803 = vperm.xlu0 %1802, %v1653
          %v1804 = vpop.permute.xlu0 %1803
          %1807 = vset.pattern.permute.xlu0 1
          %1808 = vperm.xlu0 %1807, %v1655
          %v1809 = vpop.permute.xlu0 %1808
          %1812 = vset.pattern.permute.xlu0 1
          %1813 = vperm.xlu0 %1812, %v1657
          %v1814 = vpop.permute.xlu0 %1813
          %1817 = vset.pattern.permute.xlu0 1
          %1818 = vperm.xlu0 %1817, %v1659
          %v1819 = vpop.permute.xlu0 %1818
          %v1821 = vmul.f32 %v1784, %v1773
          %v1822 = vmul.f32 %v1789, %v1774
          %v1823 = vmul.f32 %v1794, %v1775
          %v1824 = vmul.f32 %v1799, %v1776
          %v1825 = vmul.f32 %v1804, %v1777
          %v1826 = vmul.f32 %v1809, %v1778
          %v1827 = vmul.f32 %v1814, %v1779
          %v1828 = vmul.f32 %v1819, %v1780
          %1845 = vrot.lane.b32.xlu0 %v761, 120
          %v1846 = vpop.permute.xlu0 %1845
          %1847 = vrot.lane.b32.xlu0 %v766, 120
          %v1848 = vpop.permute.xlu0 %1847
          %1849 = vrot.lane.b32.xlu0 %v771, 120
          %v1850 = vpop.permute.xlu0 %1849
          %1851 = vrot.lane.b32.xlu0 %v776, 120
          %v1852 = vpop.permute.xlu0 %1851
          %1853 = vrot.lane.b32.xlu0 %v781, 120
          %v1854 = vpop.permute.xlu0 %1853
          %1855 = vrot.lane.b32.xlu0 %v786, 120
          %v1856 = vpop.permute.xlu0 %1855
          %1857 = vrot.lane.b32.xlu0 %v791, 120
          %v1858 = vpop.permute.xlu0 %1857
          %1859 = vrot.lane.b32.xlu0 %v796, 120
          %v1860 = vpop.permute.xlu0 %1859
          %1861 = vrot.lane.b32.xlu0 %v801, 120
          %v1862 = vpop.permute.xlu0 %1861
          %1863 = vrot.lane.b32.xlu0 %v806, 120
          %v1864 = vpop.permute.xlu0 %1863
          %1865 = vrot.lane.b32.xlu0 %v811, 120
          %v1866 = vpop.permute.xlu0 %1865
          %1867 = vrot.lane.b32.xlu0 %v816, 120
          %v1868 = vpop.permute.xlu0 %1867
          %1869 = vrot.lane.b32.xlu0 %v821, 120
          %v1870 = vpop.permute.xlu0 %1869
          %1871 = vrot.lane.b32.xlu0 %v826, 120
          %v1872 = vpop.permute.xlu0 %1871
          %1873 = vrot.lane.b32.xlu0 %v831, 120
          %v1874 = vpop.permute.xlu0 %1873
          %1875 = vrot.lane.b32.xlu0 %v836, 120
          %v1876 = vpop.permute.xlu0 %1875
          %1893 = vmatprep.subr.mxu0 0.0
          %1894 = vmatpush1.msra.mxu0 %v1846
          %1895 = vmatprep.subr.mxu0 0.0
          %1896 = vmatpush1.msra.mxu0 %v1848
          %1897 = vmatprep.subr.mxu0 0.0
          %1898 = vmatpush1.msra.mxu0 %v1850
          %1899 = vmatprep.subr.mxu0 0.0
          %1900 = vmatpush1.msra.mxu0 %v1852
          %1901 = vmatprep.subr.mxu0 0.0
          %1902 = vmatpush1.msra.mxu0 %v1854
          %1903 = vmatprep.subr.mxu0 0.0
          %1904 = vmatpush1.msra.mxu0 %v1856
          %1905 = vmatprep.subr.mxu0 0.0
          %1906 = vmatpush1.msra.mxu0 %v1858
          %1907 = vmatprep.subr.mxu0 0.0
          %1908 = vmatpush1.msra.mxu0 %v1860
          %1909 = vmatprep.subr.mxu0 0.0
          %1910 = vmatpush1.msra.mxu0 %v1862
          %1911 = vmatprep.subr.mxu0 0.0
          %1912 = vmatpush1.msra.mxu0 %v1864
          %1913 = vmatprep.subr.mxu0 0.0
          %1914 = vmatpush1.msra.mxu0 %v1866
          %1915 = vmatprep.subr.mxu0 0.0
          %1916 = vmatpush1.msra.mxu0 %v1868
          %1917 = vmatprep.subr.mxu0 0.0
          %1918 = vmatpush1.msra.mxu0 %v1870
          %1919 = vmatprep.subr.mxu0 0.0
          %1920 = vmatpush1.msra.mxu0 %v1872
          %1921 = vmatprep.subr.mxu0 0.0
          %1922 = vmatpush1.msra.mxu0 %v1874
          %1923 = vmatprep.subr.mxu0 0.0
          %1924 = vmatpush1.msra.mxu0 %v1876
          %1925 = vmatprep.subr.mxu0 0.0
          %1926 = vmatpush1.msra.mxu0 0.0
          %1927 = vmatprep.subr.mxu0 0.0
          %1928 = vmatpush1.msra.mxu0 0.0
          %1929 = vmatprep.subr.mxu0 0.0
          %1930 = vmatpush1.msra.mxu0 0.0
          %1931 = vmatprep.subr.mxu0 0.0
          %1932 = vmatpush1.msra.mxu0 0.0
          %1933 = vmatprep.subr.mxu0 0.0
          %1934 = vmatpush1.msra.mxu0 0.0
          %1935 = vmatprep.subr.mxu0 0.0
          %1936 = vmatpush1.msra.mxu0 0.0
          %1937 = vmatprep.subr.mxu0 0.0
          %1938 = vmatpush1.msra.mxu0 0.0
          %1939 = vmatprep.subr.mxu0 0.0
          %1940 = vmatpush1.msra.mxu0 0.0
          %1941 = vmatprep.subr.mxu0 0.0
          %1942 = vmatpush1.msra.mxu0 0.0
          %1943 = vmatprep.subr.mxu0 0.0
          %1944 = vmatpush1.msra.mxu0 0.0
          %1945 = vmatprep.subr.mxu0 0.0
          %1946 = vmatpush1.msra.mxu0 0.0
          %1947 = vmatprep.subr.mxu0 0.0
          %1948 = vmatpush1.msra.mxu0 0.0
          %1949 = vmatprep.subr.mxu0 0.0
          %1950 = vmatpush1.msra.mxu0 0.0
          %1951 = vmatprep.subr.mxu0 0.0
          %1952 = vmatpush1.msra.mxu0 0.0
          %1953 = vmatprep.subr.mxu0 0.0
          %1954 = vmatpush1.msra.mxu0 0.0
          %1955 = vmatprep.subr.mxu0 0.0
          %1956 = vmatpush1.msra.mxu0 0.0
          %1957 = vmatprep.mubr.f32.mxu0 0.0
          %1958 = vmatmul.mubr.f32.gmra.mrb[0].mxu0 %v1709
          %v1959 = vpop.f32.mrb[0].mxu0
          %v1960 = vadd.f32 0.0, %v1959
          %v1961 = vpop.f32.mrb[0].mxu0
          %1962 = vmatprep.mubr.f32.mxu0 0.0
          %1963 = vmatmul.mubr.f32.gmra.mrb[0].mxu0 %v1711
          %v1964 = vpop.f32.mrb[0].mxu0
          %v1965 = vadd.f32 0.0, %v1964
          %v1966 = vpop.f32.mrb[0].mxu0
          %1967 = vmatprep.mubr.f32.mxu0 0.0
          %1968 = vmatmul.mubr.f32.gmra.mrb[0].mxu0 %v1713
          %v1969 = vpop.f32.mrb[0].mxu0
          %v1970 = vadd.f32 0.0, %v1969
          %v1971 = vpop.f32.mrb[0].mxu0
          %1972 = vmatprep.mubr.f32.mxu0 0.0
          %1973 = vmatmul.mubr.f32.gmra.mrb[0].mxu0 %v1715
          %v1974 = vpop.f32.mrb[0].mxu0
          %v1975 = vadd.f32 0.0, %v1974
          %v1976 = vpop.f32.mrb[0].mxu0
          %1977 = vmatprep.mubr.f32.mxu0 0.0
          %1978 = vmatmul.mubr.f32.gmra.mrb[0].mxu0 %v1717
          %v1979 = vpop.f32.mrb[0].mxu0
          %v1980 = vadd.f32 0.0, %v1979
          %v1981 = vpop.f32.mrb[0].mxu0
          %1982 = vmatprep.mubr.f32.mxu0 0.0
          %1983 = vmatmul.mubr.f32.gmra.mrb[0].mxu0 %v1719
          %v1984 = vpop.f32.mrb[0].mxu0
          %v1985 = vadd.f32 0.0, %v1984
          %v1986 = vpop.f32.mrb[0].mxu0
          %1987 = vmatprep.mubr.f32.mxu0 0.0
          %1988 = vmatmul.mubr.f32.gmra.mrb[0].mxu0 %v1721
          %v1989 = vpop.f32.mrb[0].mxu0
          %v1990 = vadd.f32 0.0, %v1989
          %v1991 = vpop.f32.mrb[0].mxu0
          %1992 = vmatprep.mubr.f32.mxu0 0.0
          %1993 = vmatmul.mubr.f32.gmra.mrb[0].mxu0 %v1723
          %v1994 = vpop.f32.mrb[0].mxu0
          %v1995 = vadd.f32 0.0, %v1994
          %v1996 = vpop.f32.mrb[0].mxu0
          %1997 = vdwg.mxu0
          %2006 = vrot.lane.b32.xlu0 %v1960, 8
          %v2007 = vpop.permute.xlu0 %2006
          %2008 = vrot.lane.b32.xlu0 %v1965, 8
          %v2009 = vpop.permute.xlu0 %2008
          %2010 = vrot.lane.b32.xlu0 %v1970, 8
          %v2011 = vpop.permute.xlu0 %2010
          %2012 = vrot.lane.b32.xlu0 %v1975, 8
          %v2013 = vpop.permute.xlu0 %2012
          %2014 = vrot.lane.b32.xlu0 %v1980, 8
          %v2015 = vpop.permute.xlu0 %2014
          %2016 = vrot.lane.b32.xlu0 %v1985, 8
          %v2017 = vpop.permute.xlu0 %2016
          %2018 = vrot.lane.b32.xlu0 %v1990, 8
          %v2019 = vpop.permute.xlu0 %2018
          %2020 = vrot.lane.b32.xlu0 %v1995, 8
          %v2021 = vpop.permute.xlu0 %2020
          %v2030 = vadd.f32 %v1821, %v2007
          %v2031 = vadd.f32 %v1822, %v2009
          %v2032 = vadd.f32 %v1823, %v2011
          %v2033 = vadd.f32 %v1824, %v2013
          %v2034 = vadd.f32 %v1825, %v2015
          %v2035 = vadd.f32 %v1826, %v2017
          %v2036 = vadd.f32 %v1827, %v2019
          %v2037 = vadd.f32 %v1828, %v2021
          %vm2038 = vcmask 130112
          %2039 = vst.msk [vmem:[#allocation4] sm:$0xff] %vm2038, %v2030
          %2040 = vst.msk [vmem:[#allocation4 + $0x8] sm:$0xff] %vm2038, %v2031
          %2041 = vst.msk [vmem:[#allocation4 + $0x10] sm:$0xff] %vm2038, %v2032
          %2042 = vst.msk [vmem:[#allocation4 + $0x18] sm:$0xff] %vm2038, %v2033
          %2043 = vst.msk [vmem:[#allocation4 + $0x20] sm:$0xff] %vm2038, %v2034
          %2044 = vst.msk [vmem:[#allocation4 + $0x28] sm:$0xff] %vm2038, %v2035
          %2045 = vst.msk [vmem:[#allocation4 + $0x30] sm:$0xff] %vm2038, %v2036
          %2046 = vst.msk [vmem:[#allocation4 + $0x38] sm:$0xff] %vm2038, %v2037
          %2047 = vst.msk [vmem:[#allocation2] sm:$0xff] %vm1764, %v1628
          %2048 = vst.msk [vmem:[#allocation2 + $0x8] sm:$0xff] %vm1764, %v1629
          %2049 = vst.msk [vmem:[#allocation2 + $0x10] sm:$0xff] %vm1764, %v1630
          %2050 = vst.msk [vmem:[#allocation2 + $0x18] sm:$0xff] %vm1764, %v1631
          %2051 = vst.msk [vmem:[#allocation2 + $0x20] sm:$0xff] %vm1764, %v1632
          %2052 = vst.msk [vmem:[#allocation2 + $0x28] sm:$0xff] %vm1764, %v1633
          %2053 = vst.msk [vmem:[#allocation2 + $0x30] sm:$0xff] %vm1764, %v1634
          %2054 = vst.msk [vmem:[#allocation2 + $0x38] sm:$0xff] %vm1764, %v1635
          %2055 = vset.pattern.permute.xlu0 2
          %2056 = vperm.xlu0 %2055, %v993
          %v2057 = vpop.permute.xlu0 %2056
          %2059 = vset.pattern.permute.xlu0 2
          %2060 = vperm.xlu0 %2059, %v998
          %v2061 = vpop.permute.xlu0 %2060
          %2063 = vset.pattern.permute.xlu0 2
          %2064 = vperm.xlu0 %2063, %v1003
          %v2065 = vpop.permute.xlu0 %2064
          %2067 = vset.pattern.permute.xlu0 2
          %2068 = vperm.xlu0 %2067, %v1008
          %v2069 = vpop.permute.xlu0 %2068
          %2071 = vset.pattern.permute.xlu0 2
          %2072 = vperm.xlu0 %2071, %v1013
          %v2073 = vpop.permute.xlu0 %2072
          %2075 = vset.pattern.permute.xlu0 2
          %2076 = vperm.xlu0 %2075, %v1018
          %v2077 = vpop.permute.xlu0 %2076
          %2079 = vset.pattern.permute.xlu0 2
          %2080 = vperm.xlu0 %2079, %v1023
          %v2081 = vpop.permute.xlu0 %2080
          %2083 = vset.pattern.permute.xlu0 2
          %2084 = vperm.xlu0 %2083, %v1028
          %v2085 = vpop.permute.xlu0 %2084
          %v2087 = vlaneseq
          %v2088 = vshrl.u32 %v2087, 7
          %v2089 = vsub.s32 2, %v2088
          %v2090 = vrot.slane %v907, %v2089
          %v2091 = vadd.f32 %v2057, %v2090
          %v2092 = vadd.f32 %v2061, %v2090
          %v2093 = vadd.f32 %v2065, %v2090
          %v2094 = vadd.f32 %v2069, %v2090
          %v2095 = vadd.f32 %v2073, %v2090
          %v2096 = vadd.f32 %v2077, %v2090
          %v2097 = vadd.f32 %v2081, %v2090
          %v2098 = vadd.f32 %v2085, %v2090
          %vm2099 = vcmp.gt.f32.partialorder %v2091, 0.0
          %vm2100 = vcmp.gt.f32.partialorder %v2092, 0.0
          %vm2101 = vcmp.gt.f32.partialorder %v2093, 0.0
          %vm2102 = vcmp.gt.f32.partialorder %v2094, 0.0
          %vm2103 = vcmp.gt.f32.partialorder %v2095, 0.0
          %vm2104 = vcmp.gt.f32.partialorder %v2096, 0.0
          %vm2105 = vcmp.gt.f32.partialorder %v2097, 0.0
          %vm2106 = vcmp.gt.f32.partialorder %v2098, 0.0
          %v2107 = vmul.f32 %v2091, 0.2
          %v2108 = vmul.f32 %v2092, 0.2
          %v2109 = vmul.f32 %v2093, 0.2
          %v2110 = vmul.f32 %v2094, 0.2
          %v2111 = vmul.f32 %v2095, 0.2
          %v2112 = vmul.f32 %v2096, 0.2
          %v2113 = vmul.f32 %v2097, 0.2
          %v2114 = vmul.f32 %v2098, 0.2
          %v2115 = vsel %vm2099, %v2091, %v2107
          %v2116 = vsel %vm2100, %v2092, %v2108
          %v2117 = vsel %vm2101, %v2093, %v2109
          %v2118 = vsel %vm2102, %v2094, %v2110
          %v2119 = vsel %vm2103, %v2095, %v2111
          %v2120 = vsel %vm2104, %v2096, %v2112
          %v2121 = vsel %vm2105, %v2097, %v2113
          %v2122 = vsel %vm2106, %v2098, %v2114
          %v2123 = vsel %vm1157, %v2115, -1e+30
          %v2124 = vsel %vm1158, %v2116, -1e+30
          %v2125 = vsel %vm1159, %v2117, -1e+30
          %v2126 = vsel %vm1160, %v2118, -1e+30
          %v2127 = vsel %vm1161, %v2119, -1e+30
          %v2128 = vsel %vm1162, %v2120, -1e+30
          %v2129 = vsel %vm1163, %v2121, -1e+30
          %v2130 = vsel %vm1164, %v2122, -1e+30
          %v2131 = vld [vmem:[#allocation2] sm:$0xff]
          %v2132 = vld [vmem:[#allocation2 + $0x8] sm:$0xff]
          %v2133 = vld [vmem:[#allocation2 + $0x10] sm:$0xff]
          %v2134 = vld [vmem:[#allocation2 + $0x18] sm:$0xff]
          %v2135 = vld [vmem:[#allocation2 + $0x20] sm:$0xff]
          %v2136 = vld [vmem:[#allocation2 + $0x28] sm:$0xff]
          %v2137 = vld [vmem:[#allocation2 + $0x30] sm:$0xff]
          %v2138 = vld [vmem:[#allocation2 + $0x38] sm:$0xff]
          %2139 = vmax.xlane.f32.xlu0 %v2123
          %v2140 = vpop.xlane.xlu0 %2139
          %2141 = vmax.xlane.f32.xlu0 %v2124
          %v2142 = vpop.xlane.xlu0 %2141
          %2143 = vmax.xlane.f32.xlu0 %v2125
          %v2144 = vpop.xlane.xlu0 %2143
          %2145 = vmax.xlane.f32.xlu0 %v2126
          %v2146 = vpop.xlane.xlu0 %2145
          %2147 = vmax.xlane.f32.xlu0 %v2127
          %v2148 = vpop.xlane.xlu0 %2147
          %2149 = vmax.xlane.f32.xlu0 %v2128
          %v2150 = vpop.xlane.xlu0 %2149
          %2151 = vmax.xlane.f32.xlu0 %v2129
          %v2152 = vpop.xlane.xlu0 %2151
          %2153 = vmax.xlane.f32.xlu0 %v2130
          %v2154 = vpop.xlane.xlu0 %2153
          %v2155 = vmax.f32 %v2131, %v2140
          %v2156 = vmax.f32 %v2132, %v2142
          %v2157 = vmax.f32 %v2133, %v2144
          %v2158 = vmax.f32 %v2134, %v2146
          %v2159 = vmax.f32 %v2135, %v2148
          %v2160 = vmax.f32 %v2136, %v2150
          %v2161 = vmax.f32 %v2137, %v2152
          %v2162 = vmax.f32 %v2138, %v2154
          %v2163 = vsub.f32 %v2131, %v2155
          %v2164 = vsub.f32 %v2132, %v2156
          %v2165 = vsub.f32 %v2133, %v2157
          %v2166 = vsub.f32 %v2134, %v2158
          %v2167 = vsub.f32 %v2135, %v2159
          %v2168 = vsub.f32 %v2136, %v2160
          %v2169 = vsub.f32 %v2137, %v2161
          %v2170 = vsub.f32 %v2138, %v2162
          %v2171 = vmul.f32 %v2163, 1.442695
          %v2172 = vpow.pop %v2171
          %v2173 = vmul.f32 %v2164, 1.442695
          %v2174 = vpow.pop %v2173
          %v2175 = vmul.f32 %v2165, 1.442695
          %v2176 = vpow.pop %v2175
          %v2177 = vmul.f32 %v2166, 1.442695
          %v2178 = vpow.pop %v2177
          %v2179 = vmul.f32 %v2167, 1.442695
          %v2180 = vpow.pop %v2179
          %v2181 = vmul.f32 %v2168, 1.442695
          %v2182 = vpow.pop %v2181
          %v2183 = vmul.f32 %v2169, 1.442695
          %v2184 = vpow.pop %v2183
          %v2185 = vmul.f32 %v2170, 1.442695
          %v2186 = vpow.pop %v2185
          %2188 = vset.pattern.permute.xlu0 2
          %2189 = vperm.xlu0 %2188, %v2155
          %v2190 = vpop.permute.xlu0 %2189
          %2193 = vset.pattern.permute.xlu0 2
          %2194 = vperm.xlu0 %2193, %v2156
          %v2195 = vpop.permute.xlu0 %2194
          %2198 = vset.pattern.permute.xlu0 2
          %2199 = vperm.xlu0 %2198, %v2157
          %v2200 = vpop.permute.xlu0 %2199
          %2203 = vset.pattern.permute.xlu0 2
          %2204 = vperm.xlu0 %2203, %v2158
          %v2205 = vpop.permute.xlu0 %2204
          %2208 = vset.pattern.permute.xlu0 2
          %2209 = vperm.xlu0 %2208, %v2159
          %v2210 = vpop.permute.xlu0 %2209
          %2213 = vset.pattern.permute.xlu0 2
          %2214 = vperm.xlu0 %2213, %v2160
          %v2215 = vpop.permute.xlu0 %2214
          %2218 = vset.pattern.permute.xlu0 2
          %2219 = vperm.xlu0 %2218, %v2161
          %v2220 = vpop.permute.xlu0 %2219
          %2223 = vset.pattern.permute.xlu0 2
          %2224 = vperm.xlu0 %2223, %v2162
          %v2225 = vpop.permute.xlu0 %2224
          %v2227 = vsub.f32 %v2123, %v2190
          %v2228 = vsub.f32 %v2124, %v2195
          %v2229 = vsub.f32 %v2125, %v2200
          %v2230 = vsub.f32 %v2126, %v2205
          %v2231 = vsub.f32 %v2127, %v2210
          %v2232 = vsub.f32 %v2128, %v2215
          %v2233 = vsub.f32 %v2129, %v2220
          %v2234 = vsub.f32 %v2130, %v2225
          %v2235 = vmul.f32 %v2227, 1.442695
          %v2236 = vpow.pop %v2235
          %v2237 = vmul.f32 %v2228, 1.442695
          %v2238 = vpow.pop %v2237
          %v2239 = vmul.f32 %v2229, 1.442695
          %v2240 = vpow.pop %v2239
          %v2241 = vmul.f32 %v2230, 1.442695
          %v2242 = vpow.pop %v2241
          %v2243 = vmul.f32 %v2231, 1.442695
          %v2244 = vpow.pop %v2243
          %v2245 = vmul.f32 %v2232, 1.442695
          %v2246 = vpow.pop %v2245
          %v2247 = vmul.f32 %v2233, 1.442695
          %v2248 = vpow.pop %v2247
          %v2249 = vmul.f32 %v2234, 1.442695
          %v2250 = vpow.pop %v2249
          %v2251 = vld [vmem:[#allocation3] sm:$0xff]
          %v2252 = vld [vmem:[#allocation3 + $0x8] sm:$0xff]
          %v2253 = vld [vmem:[#allocation3 + $0x10] sm:$0xff]
          %v2254 = vld [vmem:[#allocation3 + $0x18] sm:$0xff]
          %v2255 = vld [vmem:[#allocation3 + $0x20] sm:$0xff]
          %v2256 = vld [vmem:[#allocation3 + $0x28] sm:$0xff]
          %v2257 = vld [vmem:[#allocation3 + $0x30] sm:$0xff]
          %v2258 = vld [vmem:[#allocation3 + $0x38] sm:$0xff]
          %v2259 = vmul.f32 %v2172, %v2251
          %v2260 = vmul.f32 %v2174, %v2252
          %v2261 = vmul.f32 %v2176, %v2253
          %v2262 = vmul.f32 %v2178, %v2254
          %v2263 = vmul.f32 %v2180, %v2255
          %v2264 = vmul.f32 %v2182, %v2256
          %v2265 = vmul.f32 %v2184, %v2257
          %v2266 = vmul.f32 %v2186, %v2258
          %2267 = vadd.xlane.f32.xlu0 %v2236
          %v2268 = vpop.xlane.xlu0 %2267
          %2269 = vadd.xlane.f32.xlu0 %v2238
          %v2270 = vpop.xlane.xlu0 %2269
          %2271 = vadd.xlane.f32.xlu0 %v2240
          %v2272 = vpop.xlane.xlu0 %2271
          %2273 = vadd.xlane.f32.xlu0 %v2242
          %v2274 = vpop.xlane.xlu0 %2273
          %2275 = vadd.xlane.f32.xlu0 %v2244
          %v2276 = vpop.xlane.xlu0 %2275
          %2277 = vadd.xlane.f32.xlu0 %v2246
          %v2278 = vpop.xlane.xlu0 %2277
          %2279 = vadd.xlane.f32.xlu0 %v2248
          %v2280 = vpop.xlane.xlu0 %2279
          %2281 = vadd.xlane.f32.xlu0 %v2250
          %v2282 = vpop.xlane.xlu0 %2281
          %v2283 = vadd.f32 %v2259, %v2268
          %v2284 = vadd.f32 %v2260, %v2270
          %v2285 = vadd.f32 %v2261, %v2272
          %v2286 = vadd.f32 %v2262, %v2274
          %v2287 = vadd.f32 %v2263, %v2276
          %v2288 = vadd.f32 %v2264, %v2278
          %v2289 = vadd.f32 %v2265, %v2280
          %v2290 = vadd.f32 %v2266, %v2282
          %vm2291 = vcmask 23568
          %2292 = vst.msk [vmem:[#allocation3] sm:$0xff] %vm2291, %v2283
          %2293 = vst.msk [vmem:[#allocation3 + $0x8] sm:$0xff] %vm2291, %v2284
          %2294 = vst.msk [vmem:[#allocation3 + $0x10] sm:$0xff] %vm2291, %v2285
          %2295 = vst.msk [vmem:[#allocation3 + $0x18] sm:$0xff] %vm2291, %v2286
          %2296 = vst.msk [vmem:[#allocation3 + $0x20] sm:$0xff] %vm2291, %v2287
          %2297 = vst.msk [vmem:[#allocation3 + $0x28] sm:$0xff] %vm2291, %v2288
          %2298 = vst.msk [vmem:[#allocation3 + $0x30] sm:$0xff] %vm2291, %v2289
          %2299 = vst.msk [vmem:[#allocation3 + $0x38] sm:$0xff] %vm2291, %v2290
          %v2300 = vld [vmem:[#allocation4] sm:$0xff]
          %v2301 = vld [vmem:[#allocation4 + $0x8] sm:$0xff]
          %v2302 = vld [vmem:[#allocation4 + $0x10] sm:$0xff]
          %v2303 = vld [vmem:[#allocation4 + $0x18] sm:$0xff]
          %v2304 = vld [vmem:[#allocation4 + $0x20] sm:$0xff]
          %v2305 = vld [vmem:[#allocation4 + $0x28] sm:$0xff]
          %v2306 = vld [vmem:[#allocation4 + $0x30] sm:$0xff]
          %v2307 = vld [vmem:[#allocation4 + $0x38] sm:$0xff]
          %2309 = vset.pattern.permute.xlu0 2
          %2310 = vperm.xlu0 %2309, %v2172
          %v2311 = vpop.permute.xlu0 %2310
          %2314 = vset.pattern.permute.xlu0 2
          %2315 = vperm.xlu0 %2314, %v2174
          %v2316 = vpop.permute.xlu0 %2315
          %2319 = vset.pattern.permute.xlu0 2
          %2320 = vperm.xlu0 %2319, %v2176
          %v2321 = vpop.permute.xlu0 %2320
          %2324 = vset.pattern.permute.xlu0 2
          %2325 = vperm.xlu0 %2324, %v2178
          %v2326 = vpop.permute.xlu0 %2325
          %2329 = vset.pattern.permute.xlu0 2
          %2330 = vperm.xlu0 %2329, %v2180
          %v2331 = vpop.permute.xlu0 %2330
          %2334 = vset.pattern.permute.xlu0 2
          %2335 = vperm.xlu0 %2334, %v2182
          %v2336 = vpop.permute.xlu0 %2335
          %2339 = vset.pattern.permute.xlu0 2
          %2340 = vperm.xlu0 %2339, %v2184
          %v2341 = vpop.permute.xlu0 %2340
          %2344 = vset.pattern.permute.xlu0 2
          %2345 = vperm.xlu0 %2344, %v2186
          %v2346 = vpop.permute.xlu0 %2345
          %v2348 = vmul.f32 %v2311, %v2300
          %v2349 = vmul.f32 %v2316, %v2301
          %v2350 = vmul.f32 %v2321, %v2302
          %v2351 = vmul.f32 %v2326, %v2303
          %v2352 = vmul.f32 %v2331, %v2304
          %v2353 = vmul.f32 %v2336, %v2305
          %v2354 = vmul.f32 %v2341, %v2306
          %v2355 = vmul.f32 %v2346, %v2307
          %2356 = vrot.lane.b32.xlu0 %v761, 112
          %v2357 = vpop.permute.xlu0 %2356
          %2358 = vrot.lane.b32.xlu0 %v766, 112
          %v2359 = vpop.permute.xlu0 %2358
          %2360 = vrot.lane.b32.xlu0 %v771, 112
          %v2361 = vpop.permute.xlu0 %2360
          %2362 = vrot.lane.b32.xlu0 %v776, 112
          %v2363 = vpop.permute.xlu0 %2362
          %2364 = vrot.lane.b32.xlu0 %v781, 112
          %v2365 = vpop.permute.xlu0 %2364
          %2366 = vrot.lane.b32.xlu0 %v786, 112
          %v2367 = vpop.permute.xlu0 %2366
          %2368 = vrot.lane.b32.xlu0 %v791, 112
          %v2369 = vpop.permute.xlu0 %2368
          %2370 = vrot.lane.b32.xlu0 %v796, 112
          %v2371 = vpop.permute.xlu0 %2370
          %2372 = vrot.lane.b32.xlu0 %v801, 112
          %v2373 = vpop.permute.xlu0 %2372
          %2374 = vrot.lane.b32.xlu0 %v806, 112
          %v2375 = vpop.permute.xlu0 %2374
          %2376 = vrot.lane.b32.xlu0 %v811, 112
          %v2377 = vpop.permute.xlu0 %2376
          %2378 = vrot.lane.b32.xlu0 %v816, 112
          %v2379 = vpop.permute.xlu0 %2378
          %2380 = vrot.lane.b32.xlu0 %v821, 112
          %v2381 = vpop.permute.xlu0 %2380
          %2382 = vrot.lane.b32.xlu0 %v826, 112
          %v2383 = vpop.permute.xlu0 %2382
          %2384 = vrot.lane.b32.xlu0 %v831, 112
          %v2385 = vpop.permute.xlu0 %2384
          %2386 = vrot.lane.b32.xlu0 %v836, 112
          %v2387 = vpop.permute.xlu0 %2386
          %2404 = vmatprep.subr.mxu0 0.0
          %2405 = vmatpush1.msra.mxu0 %v2357
          %2406 = vmatprep.subr.mxu0 0.0
          %2407 = vmatpush1.msra.mxu0 %v2359
          %2408 = vmatprep.subr.mxu0 0.0
          %2409 = vmatpush1.msra.mxu0 %v2361
          %2410 = vmatprep.subr.mxu0 0.0
          %2411 = vmatpush1.msra.mxu0 %v2363
          %2412 = vmatprep.subr.mxu0 0.0
          %2413 = vmatpush1.msra.mxu0 %v2365
          %2414 = vmatprep.subr.mxu0 0.0
          %2415 = vmatpush1.msra.mxu0 %v2367
          %2416 = vmatprep.subr.mxu0 0.0
          %2417 = vmatpush1.msra.mxu0 %v2369
          %2418 = vmatprep.subr.mxu0 0.0
          %2419 = vmatpush1.msra.mxu0 %v2371
          %2420 = vmatprep.subr.mxu0 0.0
          %2421 = vmatpush1.msra.mxu0 %v2373
          %2422 = vmatprep.subr.mxu0 0.0
          %2423 = vmatpush1.msra.mxu0 %v2375
          %2424 = vmatprep.subr.mxu0 0.0
          %2425 = vmatpush1.msra.mxu0 %v2377
          %2426 = vmatprep.subr.mxu0 0.0
          %2427 = vmatpush1.msra.mxu0 %v2379
          %2428 = vmatprep.subr.mxu0 0.0
          %2429 = vmatpush1.msra.mxu0 %v2381
          %2430 = vmatprep.subr.mxu0 0.0
          %2431 = vmatpush1.msra.mxu0 %v2383
          %2432 = vmatprep.subr.mxu0 0.0
          %2433 = vmatpush1.msra.mxu0 %v2385
          %2434 = vmatprep.subr.mxu0 0.0
          %2435 = vmatpush1.msra.mxu0 %v2387
          %2436 = vmatprep.subr.mxu0 0.0
          %2437 = vmatpush1.msra.mxu0 0.0
          %2438 = vmatprep.subr.mxu0 0.0
          %2439 = vmatpush1.msra.mxu0 0.0
          %2440 = vmatprep.subr.mxu0 0.0
          %2441 = vmatpush1.msra.mxu0 0.0
          %2442 = vmatprep.subr.mxu0 0.0
          %2443 = vmatpush1.msra.mxu0 0.0
          %2444 = vmatprep.subr.mxu0 0.0
          %2445 = vmatpush1.msra.mxu0 0.0
          %2446 = vmatprep.subr.mxu0 0.0
          %2447 = vmatpush1.msra.mxu0 0.0
          %2448 = vmatprep.subr.mxu0 0.0
          %2449 = vmatpush1.msra.mxu0 0.0
          %2450 = vmatprep.subr.mxu0 0.0
          %2451 = vmatpush1.msra.mxu0 0.0
          %2452 = vmatprep.subr.mxu0 0.0
          %2453 = vmatpush1.msra.mxu0 0.0
          %2454 = vmatprep.subr.mxu0 0.0
          %2455 = vmatpush1.msra.mxu0 0.0
          %2456 = vmatprep.subr.mxu0 0.0
          %2457 = vmatpush1.msra.mxu0 0.0
          %2458 = vmatprep.subr.mxu0 0.0
          %2459 = vmatpush1.msra.mxu0 0.0
          %2460 = vmatprep.subr.mxu0 0.0
          %2461 = vmatpush1.msra.mxu0 0.0
          %2462 = vmatprep.subr.mxu0 0.0
          %2463 = vmatpush1.msra.mxu0 0.0
          %2464 = vmatprep.subr.mxu0 0.0
          %2465 = vmatpush1.msra.mxu0 0.0
          %2466 = vmatprep.subr.mxu0 0.0
          %2467 = vmatpush1.msra.mxu0 0.0
          %2468 = vmatprep.mubr.f32.mxu0 0.0
          %2469 = vmatmul.mubr.f32.gmra.mrb[0].mxu0 %v2236
          %v2470 = vpop.f32.mrb[0].mxu0
          %v2471 = vadd.f32 0.0, %v2470
          %v2472 = vpop.f32.mrb[0].mxu0
          %2473 = vmatprep.mubr.f32.mxu0 0.0
          %2474 = vmatmul.mubr.f32.gmra.mrb[0].mxu0 %v2238
          %v2475 = vpop.f32.mrb[0].mxu0
          %v2476 = vadd.f32 0.0, %v2475
          %v2477 = vpop.f32.mrb[0].mxu0
          %2478 = vmatprep.mubr.f32.mxu0 0.0
          %2479 = vmatmul.mubr.f32.gmra.mrb[0].mxu0 %v2240
          %v2480 = vpop.f32.mrb[0].mxu0
          %v2481 = vadd.f32 0.0, %v2480
          %v2482 = vpop.f32.mrb[0].mxu0
          %2483 = vmatprep.mubr.f32.mxu0 0.0
          %2484 = vmatmul.mubr.f32.gmra.mrb[0].mxu0 %v2242
          %v2485 = vpop.f32.mrb[0].mxu0
          %v2486 = vadd.f32 0.0, %v2485
          %v2487 = vpop.f32.mrb[0].mxu0
          %2488 = vmatprep.mubr.f32.mxu0 0.0
          %2489 = vmatmul.mubr.f32.gmra.mrb[0].mxu0 %v2244
          %v2490 = vpop.f32.mrb[0].mxu0
          %v2491 = vadd.f32 0.0, %v2490
          %v2492 = vpop.f32.mrb[0].mxu0
          %2493 = vmatprep.mubr.f32.mxu0 0.0
          %2494 = vmatmul.mubr.f32.gmra.mrb[0].mxu0 %v2246
          %v2495 = vpop.f32.mrb[0].mxu0
          %v2496 = vadd.f32 0.0, %v2495
          %v2497 = vpop.f32.mrb[0].mxu0
          %2498 = vmatprep.mubr.f32.mxu0 0.0
          %2499 = vmatmul.mubr.f32.gmra.mrb[0].mxu0 %v2248
          %v2500 = vpop.f32.mrb[0].mxu0
          %v2501 = vadd.f32 0.0, %v2500
          %v2502 = vpop.f32.mrb[0].mxu0
          %2503 = vmatprep.mubr.f32.mxu0 0.0
          %2504 = vmatmul.mubr.f32.gmra.mrb[0].mxu0 %v2250
          %v2505 = vpop.f32.mrb[0].mxu0
          %v2506 = vadd.f32 0.0, %v2505
          %v2507 = vpop.f32.mrb[0].mxu0
          %2508 = vdwg.mxu0
          %2517 = vrot.lane.b32.xlu0 %v2471, 16
          %v2518 = vpop.permute.xlu0 %2517
          %2519 = vrot.lane.b32.xlu0 %v2476, 16
          %v2520 = vpop.permute.xlu0 %2519
          %2521 = vrot.lane.b32.xlu0 %v2481, 16
          %v2522 = vpop.permute.xlu0 %2521
          %2523 = vrot.lane.b32.xlu0 %v2486, 16
          %v2524 = vpop.permute.xlu0 %2523
          %2525 = vrot.lane.b32.xlu0 %v2491, 16
          %v2526 = vpop.permute.xlu0 %2525
          %2527 = vrot.lane.b32.xlu0 %v2496, 16
          %v2528 = vpop.permute.xlu0 %2527
          %2529 = vrot.lane.b32.xlu0 %v2501, 16
          %v2530 = vpop.permute.xlu0 %2529
          %2531 = vrot.lane.b32.xlu0 %v2506, 16
          %v2532 = vpop.permute.xlu0 %2531
          %v2541 = vadd.f32 %v2348, %v2518
          %v2542 = vadd.f32 %v2349, %v2520
          %v2543 = vadd.f32 %v2350, %v2522
          %v2544 = vadd.f32 %v2351, %v2524
          %v2545 = vadd.f32 %v2352, %v2526
          %v2546 = vadd.f32 %v2353, %v2528
          %v2547 = vadd.f32 %v2354, %v2530
          %v2548 = vadd.f32 %v2355, %v2532
          %vm2549 = vcmask 195712
          %2550 = vst.msk [vmem:[#allocation4] sm:$0xff] %vm2549, %v2541
          %2551 = vst.msk [vmem:[#allocation4 + $0x8] sm:$0xff] %vm2549, %v2542
          %2552 = vst.msk [vmem:[#allocation4 + $0x10] sm:$0xff] %vm2549, %v2543
          %2553 = vst.msk [vmem:[#allocation4 + $0x18] sm:$0xff] %vm2549, %v2544
          %2554 = vst.msk [vmem:[#allocation4 + $0x20] sm:$0xff] %vm2549, %v2545
          %2555 = vst.msk [vmem:[#allocation4 + $0x28] sm:$0xff] %vm2549, %v2546
          %2556 = vst.msk [vmem:[#allocation4 + $0x30] sm:$0xff] %vm2549, %v2547
          %2557 = vst.msk [vmem:[#allocation4 + $0x38] sm:$0xff] %vm2549, %v2548
          %2558 = vst.msk [vmem:[#allocation2] sm:$0xff] %vm2291, %v2155
          %2559 = vst.msk [vmem:[#allocation2 + $0x8] sm:$0xff] %vm2291, %v2156
          %2560 = vst.msk [vmem:[#allocation2 + $0x10] sm:$0xff] %vm2291, %v2157
          %2561 = vst.msk [vmem:[#allocation2 + $0x18] sm:$0xff] %vm2291, %v2158
          %2562 = vst.msk [vmem:[#allocation2 + $0x20] sm:$0xff] %vm2291, %v2159
          %2563 = vst.msk [vmem:[#allocation2 + $0x28] sm:$0xff] %vm2291, %v2160
          %2564 = vst.msk [vmem:[#allocation2 + $0x30] sm:$0xff] %vm2291, %v2161
          %2565 = vst.msk [vmem:[#allocation2 + $0x38] sm:$0xff] %vm2291, %v2162
          %2566 = vset.pattern.permute.xlu0 3
          %2567 = vperm.xlu0 %2566, %v993
          %v2568 = vpop.permute.xlu0 %2567
          %2570 = vset.pattern.permute.xlu0 3
          %2571 = vperm.xlu0 %2570, %v998
          %v2572 = vpop.permute.xlu0 %2571
          %2574 = vset.pattern.permute.xlu0 3
          %2575 = vperm.xlu0 %2574, %v1003
          %v2576 = vpop.permute.xlu0 %2575
          %2578 = vset.pattern.permute.xlu0 3
          %2579 = vperm.xlu0 %2578, %v1008
          %v2580 = vpop.permute.xlu0 %2579
          %2582 = vset.pattern.permute.xlu0 3
          %2583 = vperm.xlu0 %2582, %v1013
          %v2584 = vpop.permute.xlu0 %2583
          %2586 = vset.pattern.permute.xlu0 3
          %2587 = vperm.xlu0 %2586, %v1018
          %v2588 = vpop.permute.xlu0 %2587
          %2590 = vset.pattern.permute.xlu0 3
          %2591 = vperm.xlu0 %2590, %v1023
          %v2592 = vpop.permute.xlu0 %2591
          %2594 = vset.pattern.permute.xlu0 3
          %2595 = vperm.xlu0 %2594, %v1028
          %v2596 = vpop.permute.xlu0 %2595
          %v2598 = vlaneseq
          %v2599 = vshrl.u32 %v2598, 7
          %v2600 = vsub.s32 3, %v2599
          %v2601 = vrot.slane %v907, %v2600
          %v2602 = vadd.f32 %v2568, %v2601
          %v2603 = vadd.f32 %v2572, %v2601
          %v2604 = vadd.f32 %v2576, %v2601
          %v2605 = vadd.f32 %v2580, %v2601
          %v2606 = vadd.f32 %v2584, %v2601
          %v2607 = vadd.f32 %v2588, %v2601
          %v2608 = vadd.f32 %v2592, %v2601
          %v2609 = vadd.f32 %v2596, %v2601
          %vm2610 = vcmp.gt.f32.partialorder %v2602, 0.0
          %vm2611 = vcmp.gt.f32.partialorder %v2603, 0.0
          %vm2612 = vcmp.gt.f32.partialorder %v2604, 0.0
          %vm2613 = vcmp.gt.f32.partialorder %v2605, 0.0
          %vm2614 = vcmp.gt.f32.partialorder %v2606, 0.0
          %vm2615 = vcmp.gt.f32.partialorder %v2607, 0.0
          %vm2616 = vcmp.gt.f32.partialorder %v2608, 0.0
          %vm2617 = vcmp.gt.f32.partialorder %v2609, 0.0
          %v2618 = vmul.f32 %v2602, 0.2
          %v2619 = vmul.f32 %v2603, 0.2
          %v2620 = vmul.f32 %v2604, 0.2
          %v2621 = vmul.f32 %v2605, 0.2
          %v2622 = vmul.f32 %v2606, 0.2
          %v2623 = vmul.f32 %v2607, 0.2
          %v2624 = vmul.f32 %v2608, 0.2
          %v2625 = vmul.f32 %v2609, 0.2
          %v2626 = vsel %vm2610, %v2602, %v2618
          %v2627 = vsel %vm2611, %v2603, %v2619
          %v2628 = vsel %vm2612, %v2604, %v2620
          %v2629 = vsel %vm2613, %v2605, %v2621
          %v2630 = vsel %vm2614, %v2606, %v2622
          %v2631 = vsel %vm2615, %v2607, %v2623
          %v2632 = vsel %vm2616, %v2608, %v2624
          %v2633 = vsel %vm2617, %v2609, %v2625
          %v2634 = vsel %vm1157, %v2626, -1e+30
          %v2635 = vsel %vm1158, %v2627, -1e+30
          %v2636 = vsel %vm1159, %v2628, -1e+30
          %v2637 = vsel %vm1160, %v2629, -1e+30
          %v2638 = vsel %vm1161, %v2630, -1e+30
          %v2639 = vsel %vm1162, %v2631, -1e+30
          %v2640 = vsel %vm1163, %v2632, -1e+30
          %v2641 = vsel %vm1164, %v2633, -1e+30
          %v2642 = vld [vmem:[#allocation2] sm:$0xff]
          %v2643 = vld [vmem:[#allocation2 + $0x8] sm:$0xff]
          %v2644 = vld [vmem:[#allocation2 + $0x10] sm:$0xff]
          %v2645 = vld [vmem:[#allocation2 + $0x18] sm:$0xff]
          %v2646 = vld [vmem:[#allocation2 + $0x20] sm:$0xff]
          %v2647 = vld [vmem:[#allocation2 + $0x28] sm:$0xff]
          %v2648 = vld [vmem:[#allocation2 + $0x30] sm:$0xff]
          %v2649 = vld [vmem:[#allocation2 + $0x38] sm:$0xff]
          %2650 = vmax.xlane.f32.xlu0 %v2634
          %v2651 = vpop.xlane.xlu0 %2650
          %2652 = vmax.xlane.f32.xlu0 %v2635
          %v2653 = vpop.xlane.xlu0 %2652
          %2654 = vmax.xlane.f32.xlu0 %v2636
          %v2655 = vpop.xlane.xlu0 %2654
          %2656 = vmax.xlane.f32.xlu0 %v2637
          %v2657 = vpop.xlane.xlu0 %2656
          %2658 = vmax.xlane.f32.xlu0 %v2638
          %v2659 = vpop.xlane.xlu0 %2658
          %2660 = vmax.xlane.f32.xlu0 %v2639
          %v2661 = vpop.xlane.xlu0 %2660
          %2662 = vmax.xlane.f32.xlu0 %v2640
          %v2663 = vpop.xlane.xlu0 %2662
          %2664 = vmax.xlane.f32.xlu0 %v2641
          %v2665 = vpop.xlane.xlu0 %2664
          %v2666 = vmax.f32 %v2642, %v2651
          %v2667 = vmax.f32 %v2643, %v2653
          %v2668 = vmax.f32 %v2644, %v2655
          %v2669 = vmax.f32 %v2645, %v2657
          %v2670 = vmax.f32 %v2646, %v2659
          %v2671 = vmax.f32 %v2647, %v2661
          %v2672 = vmax.f32 %v2648, %v2663
          %v2673 = vmax.f32 %v2649, %v2665
          %v2674 = vsub.f32 %v2642, %v2666
          %v2675 = vsub.f32 %v2643, %v2667
          %v2676 = vsub.f32 %v2644, %v2668
          %v2677 = vsub.f32 %v2645, %v2669
          %v2678 = vsub.f32 %v2646, %v2670
          %v2679 = vsub.f32 %v2647, %v2671
          %v2680 = vsub.f32 %v2648, %v2672
          %v2681 = vsub.f32 %v2649, %v2673
          %v2682 = vmul.f32 %v2674, 1.442695
          %v2683 = vpow.pop %v2682
          %v2684 = vmul.f32 %v2675, 1.442695
          %v2685 = vpow.pop %v2684
          %v2686 = vmul.f32 %v2676, 1.442695
          %v2687 = vpow.pop %v2686
          %v2688 = vmul.f32 %v2677, 1.442695
          %v2689 = vpow.pop %v2688
          %v2690 = vmul.f32 %v2678, 1.442695
          %v2691 = vpow.pop %v2690
          %v2692 = vmul.f32 %v2679, 1.442695
          %v2693 = vpow.pop %v2692
          %v2694 = vmul.f32 %v2680, 1.442695
          %v2695 = vpow.pop %v2694
          %v2696 = vmul.f32 %v2681, 1.442695
          %v2697 = vpow.pop %v2696
          %2699 = vset.pattern.permute.xlu0 3
          %2700 = vperm.xlu0 %2699, %v2666
          %v2701 = vpop.permute.xlu0 %2700
          %2704 = vset.pattern.permute.xlu0 3
          %2705 = vperm.xlu0 %2704, %v2667
          %v2706 = vpop.permute.xlu0 %2705
          %2709 = vset.pattern.permute.xlu0 3
          %2710 = vperm.xlu0 %2709, %v2668
          %v2711 = vpop.permute.xlu0 %2710
          %2714 = vset.pattern.permute.xlu0 3
          %2715 = vperm.xlu0 %2714, %v2669
          %v2716 = vpop.permute.xlu0 %2715
          %2719 = vset.pattern.permute.xlu0 3
          %2720 = vperm.xlu0 %2719, %v2670
          %v2721 = vpop.permute.xlu0 %2720
          %2724 = vset.pattern.permute.xlu0 3
          %2725 = vperm.xlu0 %2724, %v2671
          %v2726 = vpop.permute.xlu0 %2725
          %2729 = vset.pattern.permute.xlu0 3
          %2730 = vperm.xlu0 %2729, %v2672
          %v2731 = vpop.permute.xlu0 %2730
          %2734 = vset.pattern.permute.xlu0 3
          %2735 = vperm.xlu0 %2734, %v2673
          %v2736 = vpop.permute.xlu0 %2735
          %v2738 = vsub.f32 %v2634, %v2701
          %v2739 = vsub.f32 %v2635, %v2706
          %v2740 = vsub.f32 %v2636, %v2711
          %v2741 = vsub.f32 %v2637, %v2716
          %v2742 = vsub.f32 %v2638, %v2721
          %v2743 = vsub.f32 %v2639, %v2726
          %v2744 = vsub.f32 %v2640, %v2731
          %v2745 = vsub.f32 %v2641, %v2736
          %v2746 = vmul.f32 %v2738, 1.442695
          %v2747 = vpow.pop %v2746
          %v2748 = vmul.f32 %v2739, 1.442695
          %v2749 = vpow.pop %v2748
          %v2750 = vmul.f32 %v2740, 1.442695
          %v2751 = vpow.pop %v2750
          %v2752 = vmul.f32 %v2741, 1.442695
          %v2753 = vpow.pop %v2752
          %v2754 = vmul.f32 %v2742, 1.442695
          %v2755 = vpow.pop %v2754
          %v2756 = vmul.f32 %v2743, 1.442695
          %v2757 = vpow.pop %v2756
          %v2758 = vmul.f32 %v2744, 1.442695
          %v2759 = vpow.pop %v2758
          %v2760 = vmul.f32 %v2745, 1.442695
          %v2761 = vpow.pop %v2760
          %v2762 = vld [vmem:[#allocation3] sm:$0xff]
          %v2763 = vld [vmem:[#allocation3 + $0x8] sm:$0xff]
          %v2764 = vld [vmem:[#allocation3 + $0x10] sm:$0xff]
          %v2765 = vld [vmem:[#allocation3 + $0x18] sm:$0xff]
          %v2766 = vld [vmem:[#allocation3 + $0x20] sm:$0xff]
          %v2767 = vld [vmem:[#allocation3 + $0x28] sm:$0xff]
          %v2768 = vld [vmem:[#allocation3 + $0x30] sm:$0xff]
          %v2769 = vld [vmem:[#allocation3 + $0x38] sm:$0xff]
          %v2770 = vmul.f32 %v2683, %v2762
          %v2771 = vmul.f32 %v2685, %v2763
          %v2772 = vmul.f32 %v2687, %v2764
          %v2773 = vmul.f32 %v2689, %v2765
          %v2774 = vmul.f32 %v2691, %v2766
          %v2775 = vmul.f32 %v2693, %v2767
          %v2776 = vmul.f32 %v2695, %v2768
          %v2777 = vmul.f32 %v2697, %v2769
          %2778 = vadd.xlane.f32.xlu0 %v2747
          %v2779 = vpop.xlane.xlu0 %2778
          %2780 = vadd.xlane.f32.xlu0 %v2749
          %v2781 = vpop.xlane.xlu0 %2780
          %2782 = vadd.xlane.f32.xlu0 %v2751
          %v2783 = vpop.xlane.xlu0 %2782
          %2784 = vadd.xlane.f32.xlu0 %v2753
          %v2785 = vpop.xlane.xlu0 %2784
          %2786 = vadd.xlane.f32.xlu0 %v2755
          %v2787 = vpop.xlane.xlu0 %2786
          %2788 = vadd.xlane.f32.xlu0 %v2757
          %v2789 = vpop.xlane.xlu0 %2788
          %2790 = vadd.xlane.f32.xlu0 %v2759
          %v2791 = vpop.xlane.xlu0 %2790
          %2792 = vadd.xlane.f32.xlu0 %v2761
          %v2793 = vpop.xlane.xlu0 %2792
          %v2794 = vadd.f32 %v2770, %v2779
          %v2795 = vadd.f32 %v2771, %v2781
          %v2796 = vadd.f32 %v2772, %v2783
          %v2797 = vadd.f32 %v2773, %v2785
          %v2798 = vadd.f32 %v2774, %v2787
          %v2799 = vadd.f32 %v2775, %v2789
          %v2800 = vadd.f32 %v2776, %v2791
          %v2801 = vadd.f32 %v2777, %v2793
          %vm2802 = vcmask 31768
          %2803 = vst.msk [vmem:[#allocation3] sm:$0xff] %vm2802, %v2794
          %2804 = vst.msk [vmem:[#allocation3 + $0x8] sm:$0xff] %vm2802, %v2795
          %2805 = vst.msk [vmem:[#allocation3 + $0x10] sm:$0xff] %vm2802, %v2796
          %2806 = vst.msk [vmem:[#allocation3 + $0x18] sm:$0xff] %vm2802, %v2797
          %2807 = vst.msk [vmem:[#allocation3 + $0x20] sm:$0xff] %vm2802, %v2798
          %2808 = vst.msk [vmem:[#allocation3 + $0x28] sm:$0xff] %vm2802, %v2799
          %2809 = vst.msk [vmem:[#allocation3 + $0x30] sm:$0xff] %vm2802, %v2800
          %2810 = vst.msk [vmem:[#allocation3 + $0x38] sm:$0xff] %vm2802, %v2801
          %v2811 = vld [vmem:[#allocation4] sm:$0xff]
          %v2812 = vld [vmem:[#allocation4 + $0x8] sm:$0xff]
          %v2813 = vld [vmem:[#allocation4 + $0x10] sm:$0xff]
          %v2814 = vld [vmem:[#allocation4 + $0x18] sm:$0xff]
          %v2815 = vld [vmem:[#allocation4 + $0x20] sm:$0xff]
          %v2816 = vld [vmem:[#allocation4 + $0x28] sm:$0xff]
          %v2817 = vld [vmem:[#allocation4 + $0x30] sm:$0xff]
          %v2818 = vld [vmem:[#allocation4 + $0x38] sm:$0xff]
          %2820 = vset.pattern.permute.xlu0 3
          %2821 = vperm.xlu0 %2820, %v2683
          %v2822 = vpop.permute.xlu0 %2821
          %2825 = vset.pattern.permute.xlu0 3
          %2826 = vperm.xlu0 %2825, %v2685
          %v2827 = vpop.permute.xlu0 %2826
          %2830 = vset.pattern.permute.xlu0 3
          %2831 = vperm.xlu0 %2830, %v2687
          %v2832 = vpop.permute.xlu0 %2831
          %2835 = vset.pattern.permute.xlu0 3
          %2836 = vperm.xlu0 %2835, %v2689
          %v2837 = vpop.permute.xlu0 %2836
          %2840 = vset.pattern.permute.xlu0 3
          %2841 = vperm.xlu0 %2840, %v2691
          %v2842 = vpop.permute.xlu0 %2841
          %2845 = vset.pattern.permute.xlu0 3
          %2846 = vperm.xlu0 %2845, %v2693
          %v2847 = vpop.permute.xlu0 %2846
          %2850 = vset.pattern.permute.xlu0 3
          %2851 = vperm.xlu0 %2850, %v2695
          %v2852 = vpop.permute.xlu0 %2851
          %2855 = vset.pattern.permute.xlu0 3
          %2856 = vperm.xlu0 %2855, %v2697
          %v2857 = vpop.permute.xlu0 %2856
          %v2859 = vmul.f32 %v2822, %v2811
          %v2860 = vmul.f32 %v2827, %v2812
          %v2861 = vmul.f32 %v2832, %v2813
          %v2862 = vmul.f32 %v2837, %v2814
          %v2863 = vmul.f32 %v2842, %v2815
          %v2864 = vmul.f32 %v2847, %v2816
          %v2865 = vmul.f32 %v2852, %v2817
          %v2866 = vmul.f32 %v2857, %v2818
          %2867 = vrot.lane.b32.xlu0 %v761, 104
          %v2868 = vpop.permute.xlu0 %2867
          %2869 = vrot.lane.b32.xlu0 %v766, 104
          %v2870 = vpop.permute.xlu0 %2869
          %2871 = vrot.lane.b32.xlu0 %v771, 104
          %v2872 = vpop.permute.xlu0 %2871
          %2873 = vrot.lane.b32.xlu0 %v776, 104
          %v2874 = vpop.permute.xlu0 %2873
          %2875 = vrot.lane.b32.xlu0 %v781, 104
          %v2876 = vpop.permute.xlu0 %2875
          %2877 = vrot.lane.b32.xlu0 %v786, 104
          %v2878 = vpop.permute.xlu0 %2877
          %2879 = vrot.lane.b32.xlu0 %v791, 104
          %v2880 = vpop.permute.xlu0 %2879
          %2881 = vrot.lane.b32.xlu0 %v796, 104
          %v2882 = vpop.permute.xlu0 %2881
          %2883 = vrot.lane.b32.xlu0 %v801, 104
          %v2884 = vpop.permute.xlu0 %2883
          %2885 = vrot.lane.b32.xlu0 %v806, 104
          %v2886 = vpop.permute.xlu0 %2885
          %2887 = vrot.lane.b32.xlu0 %v811, 104
          %v2888 = vpop.permute.xlu0 %2887
          %2889 = vrot.lane.b32.xlu0 %v816, 104
          %v2890 = vpop.permute.xlu0 %2889
          %2891 = vrot.lane.b32.xlu0 %v821, 104
          %v2892 = vpop.permute.xlu0 %2891
          %2893 = vrot.lane.b32.xlu0 %v826, 104
          %v2894 = vpop.permute.xlu0 %2893
          %2895 = vrot.lane.b32.xlu0 %v831, 104
          %v2896 = vpop.permute.xlu0 %2895
          %2897 = vrot.lane.b32.xlu0 %v836, 104
          %v2898 = vpop.permute.xlu0 %2897
          %2915 = vmatprep.subr.mxu0 0.0
          %2916 = vmatpush1.msra.mxu0 %v2868
          %2917 = vmatprep.subr.mxu0 0.0
          %2918 = vmatpush1.msra.mxu0 %v2870
          %2919 = vmatprep.subr.mxu0 0.0
          %2920 = vmatpush1.msra.mxu0 %v2872
          %2921 = vmatprep.subr.mxu0 0.0
          %2922 = vmatpush1.msra.mxu0 %v2874
          %2923 = vmatprep.subr.mxu0 0.0
          %2924 = vmatpush1.msra.mxu0 %v2876
          %2925 = vmatprep.subr.mxu0 0.0
          %2926 = vmatpush1.msra.mxu0 %v2878
          %2927 = vmatprep.subr.mxu0 0.0
          %2928 = vmatpush1.msra.mxu0 %v2880
          %2929 = vmatprep.subr.mxu0 0.0
          %2930 = vmatpush1.msra.mxu0 %v2882
          %2931 = vmatprep.subr.mxu0 0.0
          %2932 = vmatpush1.msra.mxu0 %v2884
          %2933 = vmatprep.subr.mxu0 0.0
          %2934 = vmatpush1.msra.mxu0 %v2886
          %2935 = vmatprep.subr.mxu0 0.0
          %2936 = vmatpush1.msra.mxu0 %v2888
          %2937 = vmatprep.subr.mxu0 0.0
          %2938 = vmatpush1.msra.mxu0 %v2890
          %2939 = vmatprep.subr.mxu0 0.0
          %2940 = vmatpush1.msra.mxu0 %v2892
          %2941 = vmatprep.subr.mxu0 0.0
          %2942 = vmatpush1.msra.mxu0 %v2894
          %2943 = vmatprep.subr.mxu0 0.0
          %2944 = vmatpush1.msra.mxu0 %v2896
          %2945 = vmatprep.subr.mxu0 0.0
          %2946 = vmatpush1.msra.mxu0 %v2898
          %2947 = vmatprep.subr.mxu0 0.0
          %2948 = vmatpush1.msra.mxu0 0.0
          %2949 = vmatprep.subr.mxu0 0.0
          %2950 = vmatpush1.msra.mxu0 0.0
          %2951 = vmatprep.subr.mxu0 0.0
          %2952 = vmatpush1.msra.mxu0 0.0
          %2953 = vmatprep.subr.mxu0 0.0
          %2954 = vmatpush1.msra.mxu0 0.0
          %2955 = vmatprep.subr.mxu0 0.0
          %2956 = vmatpush1.msra.mxu0 0.0
          %2957 = vmatprep.subr.mxu0 0.0
          %2958 = vmatpush1.msra.mxu0 0.0
          %2959 = vmatprep.subr.mxu0 0.0
          %2960 = vmatpush1.msra.mxu0 0.0
          %2961 = vmatprep.subr.mxu0 0.0
          %2962 = vmatpush1.msra.mxu0 0.0
          %2963 = vmatprep.subr.mxu0 0.0
          %2964 = vmatpush1.msra.mxu0 0.0
          %2965 = vmatprep.subr.mxu0 0.0
          %2966 = vmatpush1.msra.mxu0 0.0
          %2967 = vmatprep.subr.mxu0 0.0
          %2968 = vmatpush1.msra.mxu0 0.0
          %2969 = vmatprep.subr.mxu0 0.0
          %2970 = vmatpush1.msra.mxu0 0.0
          %2971 = vmatprep.subr.mxu0 0.0
          %2972 = vmatpush1.msra.mxu0 0.0
          %2973 = vmatprep.subr.mxu0 0.0
          %2974 = vmatpush1.msra.mxu0 0.0
          %2975 = vmatprep.subr.mxu0 0.0
          %2976 = vmatpush1.msra.mxu0 0.0
          %2977 = vmatprep.subr.mxu0 0.0
          %2978 = vmatpush1.msra.mxu0 0.0
          %2979 = vmatprep.mubr.f32.mxu0 0.0
          %2980 = vmatmul.mubr.f32.gmra.mrb[0].mxu0 %v2747
          %v2981 = vpop.f32.mrb[0].mxu0
          %v2982 = vadd.f32 0.0, %v2981
          %v2983 = vpop.f32.mrb[0].mxu0
          %2984 = vmatprep.mubr.f32.mxu0 0.0
          %2985 = vmatmul.mubr.f32.gmra.mrb[0].mxu0 %v2749
          %v2986 = vpop.f32.mrb[0].mxu0
          %v2987 = vadd.f32 0.0, %v2986
          %v2988 = vpop.f32.mrb[0].mxu0
          %2989 = vmatprep.mubr.f32.mxu0 0.0
          %2990 = vmatmul.mubr.f32.gmra.mrb[0].mxu0 %v2751
          %v2991 = vpop.f32.mrb[0].mxu0
          %v2992 = vadd.f32 0.0, %v2991
          %v2993 = vpop.f32.mrb[0].mxu0
          %2994 = vmatprep.mubr.f32.mxu0 0.0
          %2995 = vmatmul.mubr.f32.gmra.mrb[0].mxu0 %v2753
          %v2996 = vpop.f32.mrb[0].mxu0
          %v2997 = vadd.f32 0.0, %v2996
          %v2998 = vpop.f32.mrb[0].mxu0
          %2999 = vmatprep.mubr.f32.mxu0 0.0
          %3000 = vmatmul.mubr.f32.gmra.mrb[0].mxu0 %v2755
          %v3001 = vpop.f32.mrb[0].mxu0
          %v3002 = vadd.f32 0.0, %v3001
          %v3003 = vpop.f32.mrb[0].mxu0
          %3004 = vmatprep.mubr.f32.mxu0 0.0
          %3005 = vmatmul.mubr.f32.gmra.mrb[0].mxu0 %v2757
          %v3006 = vpop.f32.mrb[0].mxu0
          %v3007 = vadd.f32 0.0, %v3006
          %v3008 = vpop.f32.mrb[0].mxu0
          %3009 = vmatprep.mubr.f32.mxu0 0.0
          %3010 = vmatmul.mubr.f32.gmra.mrb[0].mxu0 %v2759
          %v3011 = vpop.f32.mrb[0].mxu0
          %v3012 = vadd.f32 0.0, %v3011
          %v3013 = vpop.f32.mrb[0].mxu0
          %3014 = vmatprep.mubr.f32.mxu0 0.0
          %3015 = vmatmul.mubr.f32.gmra.mrb[0].mxu0 %v2761
          %v3016 = vpop.f32.mrb[0].mxu0
          %v3017 = vadd.f32 0.0, %v3016
          %v3018 = vpop.f32.mrb[0].mxu0
          %3019 = vdwg.mxu0
          %3028 = vrot.lane.b32.xlu0 %v2982, 24
          %v3029 = vpop.permute.xlu0 %3028
          %3030 = vrot.lane.b32.xlu0 %v2987, 24
          %v3031 = vpop.permute.xlu0 %3030
          %3032 = vrot.lane.b32.xlu0 %v2992, 24
          %v3033 = vpop.permute.xlu0 %3032
          %3034 = vrot.lane.b32.xlu0 %v2997, 24
          %v3035 = vpop.permute.xlu0 %3034
          %3036 = vrot.lane.b32.xlu0 %v3002, 24
          %v3037 = vpop.permute.xlu0 %3036
          %3038 = vrot.lane.b32.xlu0 %v3007, 24
          %v3039 = vpop.permute.xlu0 %3038
          %3040 = vrot.lane.b32.xlu0 %v3012, 24
          %v3041 = vpop.permute.xlu0 %3040
          %3042 = vrot.lane.b32.xlu0 %v3017, 24
          %v3043 = vpop.permute.xlu0 %3042
          %v3052 = vadd.f32 %v2859, %v3029
          %v3053 = vadd.f32 %v2860, %v3031
          %v3054 = vadd.f32 %v2861, %v3033
          %v3055 = vadd.f32 %v2862, %v3035
          %v3056 = vadd.f32 %v2863, %v3037
          %v3057 = vadd.f32 %v2864, %v3039
          %v3058 = vadd.f32 %v2865, %v3041
          %v3059 = vadd.f32 %v2866, %v3043
          %vm3060 = vcmask 261312
          %3061 = vst.msk [vmem:[#allocation4] sm:$0xff] %vm3060, %v3052
          %3062 = vst.msk [vmem:[#allocation4 + $0x8] sm:$0xff] %vm3060, %v3053
          %3063 = vst.msk [vmem:[#allocation4 + $0x10] sm:$0xff] %vm3060, %v3054
          %3064 = vst.msk [vmem:[#allocation4 + $0x18] sm:$0xff] %vm3060, %v3055
          %3065 = vst.msk [vmem:[#allocation4 + $0x20] sm:$0xff] %vm3060, %v3056
          %3066 = vst.msk [vmem:[#allocation4 + $0x28] sm:$0xff] %vm3060, %v3057
          %3067 = vst.msk [vmem:[#allocation4 + $0x30] sm:$0xff] %vm3060, %v3058
          %3068 = vst.msk [vmem:[#allocation4 + $0x38] sm:$0xff] %vm3060, %v3059
          %3069 = vst.msk [vmem:[#allocation2] sm:$0xff] %vm2802, %v2666
          %3070 = vst.msk [vmem:[#allocation2 + $0x8] sm:$0xff] %vm2802, %v2667
          %3071 = vst.msk [vmem:[#allocation2 + $0x10] sm:$0xff] %vm2802, %v2668
          %3072 = vst.msk [vmem:[#allocation2 + $0x18] sm:$0xff] %vm2802, %v2669
          %3073 = vst.msk [vmem:[#allocation2 + $0x20] sm:$0xff] %vm2802, %v2670
          %3074 = vst.msk [vmem:[#allocation2 + $0x28] sm:$0xff] %vm2802, %v2671
          %3075 = vst.msk [vmem:[#allocation2 + $0x30] sm:$0xff] %vm2802, %v2672
          %3076 = vst.msk [vmem:[#allocation2 + $0x38] sm:$0xff] %vm2802, %v2673
        $region126: #{tpu_custom_call.1} parent=93 // pred_fallthru
          _
        %p3077 = scmp.eq.s32.totalorder %s46, 1
        // Predicated region
        $region127: #{tpu_custom_call.1} parent=93 // pred_check
          %p3078 = pneg %p3077
        $region128: #{tpu_custom_call.1} parent=93 // pred_check_branch
          %3080 = sbr.rel (%p3078) target = $region130
        $region129: #{tpu_custom_call.1} parent=93 // pred_region
          %v3081 = vld [vmem:[#allocation3] sm:$0xff]
          %v3082 = vld [vmem:[#allocation3 + $0x8] sm:$0xff]
          %v3083 = vld [vmem:[#allocation3 + $0x10] sm:$0xff]
          %v3084 = vld [vmem:[#allocation3 + $0x18] sm:$0xff]
          %v3085 = vld [vmem:[#allocation3 + $0x20] sm:$0xff]
          %v3086 = vld [vmem:[#allocation3 + $0x28] sm:$0xff]
          %v3087 = vld [vmem:[#allocation3 + $0x30] sm:$0xff]
          %v3088 = vld [vmem:[#allocation3 + $0x38] sm:$0xff]
          %v3089 = vmax.f32 %v3081, 1e-20
          %v3090 = vmax.f32 %v3082, 1e-20
          %v3091 = vmax.f32 %v3083, 1e-20
          %v3092 = vmax.f32 %v3084, 1e-20
          %v3093 = vmax.f32 %v3085, 1e-20
          %v3094 = vmax.f32 %v3086, 1e-20
          %v3095 = vmax.f32 %v3087, 1e-20
          %v3096 = vmax.f32 %v3088, 1e-20
          %v3097 = vrcp.pop %v3089
          %v3098 = vrcp.pop %v3090
          %v3099 = vrcp.pop %v3091
          %v3100 = vrcp.pop %v3092
          %v3101 = vrcp.pop %v3093
          %v3102 = vrcp.pop %v3094
          %v3103 = vrcp.pop %v3095
          %v3104 = vrcp.pop %v3096
          %v3105 = vld [vmem:[%s8] sm:$0xff]
          %vm3106 = vcmask 64512
          %v3108 = vsel %vm3106, %v3097, 0
          %v3111 = vsel %vm3106, %v3098, 0
          %v3114 = vsel %vm3106, %v3099, 0
          %v3117 = vsel %vm3106, %v3100, 0
          %v3120 = vsel %vm3106, %v3101, 0
          %v3123 = vsel %vm3106, %v3102, 0
          %v3126 = vsel %vm3106, %v3103, 0
          %v3129 = vsel %vm3106, %v3104, 0
          %3131 = vmatprep.subr.mxu0 0.0
          %3132 = vmatpush1.msra.mxu0 %v3105
          %3133 = vmatprep.subr.mxu0 0.0
          %3134 = vmatpush1.msra.mxu0 0.0
          %3135 = vmatprep.subr.mxu0 0.0
          %3136 = vmatpush1.msra.mxu0 0.0
          %3137 = vmatprep.subr.mxu0 0.0
          %3138 = vmatpush1.msra.mxu0 0.0
          %3139 = vmatprep.subr.mxu0 0.0
          %3140 = vmatpush1.msra.mxu0 0.0
          %3141 = vmatprep.subr.mxu0 0.0
          %3142 = vmatpush1.msra.mxu0 0.0
          %3143 = vmatprep.subr.mxu0 0.0
          %3144 = vmatpush1.msra.mxu0 0.0
          %3145 = vmatprep.subr.mxu0 0.0
          %3146 = vmatpush1.msra.mxu0 0.0
          %3147 = vmatprep.subr.mxu0 0.0
          %3148 = vmatpush1.msra.mxu0 0.0
          %3149 = vmatprep.subr.mxu0 0.0
          %3150 = vmatpush1.msra.mxu0 0.0
          %3151 = vmatprep.subr.mxu0 0.0
          %3152 = vmatpush1.msra.mxu0 0.0
          %3153 = vmatprep.subr.mxu0 0.0
          %3154 = vmatpush1.msra.mxu0 0.0
          %3155 = vmatprep.subr.mxu0 0.0
          %3156 = vmatpush1.msra.mxu0 0.0
          %3157 = vmatprep.subr.mxu0 0.0
          %3158 = vmatpush1.msra.mxu0 0.0
          %3159 = vmatprep.subr.mxu0 0.0
          %3160 = vmatpush1.msra.mxu0 0.0
          %3161 = vmatprep.subr.mxu0 0.0
          %3162 = vmatpush1.msra.mxu0 0.0
          %3163 = vmatprep.subr.mxu0 0.0
          %3164 = vmatpush1.msra.mxu0 0.0
          %3165 = vmatprep.subr.mxu0 0.0
          %3166 = vmatpush1.msra.mxu0 0.0
          %3167 = vmatprep.subr.mxu0 0.0
          %3168 = vmatpush1.msra.mxu0 0.0
          %3169 = vmatprep.subr.mxu0 0.0
          %3170 = vmatpush1.msra.mxu0 0.0
          %3171 = vmatprep.subr.mxu0 0.0
          %3172 = vmatpush1.msra.mxu0 0.0
          %3173 = vmatprep.subr.mxu0 0.0
          %3174 = vmatpush1.msra.mxu0 0.0
          %3175 = vmatprep.subr.mxu0 0.0
          %3176 = vmatpush1.msra.mxu0 0.0
          %3177 = vmatprep.subr.mxu0 0.0
          %3178 = vmatpush1.msra.mxu0 0.0
          %3179 = vmatprep.subr.mxu0 0.0
          %3180 = vmatpush1.msra.mxu0 0.0
          %3181 = vmatprep.subr.mxu0 0.0
          %3182 = vmatpush1.msra.mxu0 0.0
          %3183 = vmatprep.subr.mxu0 0.0
          %3184 = vmatpush1.msra.mxu0 0.0
          %3185 = vmatprep.subr.mxu0 0.0
          %3186 = vmatpush1.msra.mxu0 0.0
          %3187 = vmatprep.subr.mxu0 0.0
          %3188 = vmatpush1.msra.mxu0 0.0
          %3189 = vmatprep.subr.mxu0 0.0
          %3190 = vmatpush1.msra.mxu0 0.0
          %3191 = vmatprep.subr.mxu0 0.0
          %3192 = vmatpush1.msra.mxu0 0.0
          %3193 = vmatprep.subr.mxu0 0.0
          %3194 = vmatpush1.msra.mxu0 0.0
          %3195 = vmatprep.mubr.f32.mxu0 0.0
          %3196 = vmatmul.mubr.f32.gmra.mrb[0].mxu0 %v3108
          %v3197 = vpop.f32.mrb[0].mxu0
          %v3198 = vadd.f32 0.0, %v3197
          %v3199 = vpop.f32.mrb[0].mxu0
          %3200 = vmatprep.mubr.f32.mxu0 0.0
          %3201 = vmatmul.mubr.f32.gmra.mrb[0].mxu0 %v3111
          %v3202 = vpop.f32.mrb[0].mxu0
          %v3203 = vadd.f32 0.0, %v3202
          %v3204 = vpop.f32.mrb[0].mxu0
          %3205 = vmatprep.mubr.f32.mxu0 0.0
          %3206 = vmatmul.mubr.f32.gmra.mrb[0].mxu0 %v3114
          %v3207 = vpop.f32.mrb[0].mxu0
          %v3208 = vadd.f32 0.0, %v3207
          %v3209 = vpop.f32.mrb[0].mxu0
          %3210 = vmatprep.mubr.f32.mxu0 0.0
          %3211 = vmatmul.mubr.f32.gmra.mrb[0].mxu0 %v3117
          %v3212 = vpop.f32.mrb[0].mxu0
          %v3213 = vadd.f32 0.0, %v3212
          %v3214 = vpop.f32.mrb[0].mxu0
          %3215 = vmatprep.mubr.f32.mxu0 0.0
          %3216 = vmatmul.mubr.f32.gmra.mrb[0].mxu0 %v3120
          %v3217 = vpop.f32.mrb[0].mxu0
          %v3218 = vadd.f32 0.0, %v3217
          %v3219 = vpop.f32.mrb[0].mxu0
          %3220 = vmatprep.mubr.f32.mxu0 0.0
          %3221 = vmatmul.mubr.f32.gmra.mrb[0].mxu0 %v3123
          %v3222 = vpop.f32.mrb[0].mxu0
          %v3223 = vadd.f32 0.0, %v3222
          %v3224 = vpop.f32.mrb[0].mxu0
          %3225 = vmatprep.mubr.f32.mxu0 0.0
          %3226 = vmatmul.mubr.f32.gmra.mrb[0].mxu0 %v3126
          %v3227 = vpop.f32.mrb[0].mxu0
          %v3228 = vadd.f32 0.0, %v3227
          %v3229 = vpop.f32.mrb[0].mxu0
          %3230 = vmatprep.mubr.f32.mxu0 0.0
          %3231 = vmatmul.mubr.f32.gmra.mrb[0].mxu0 %v3129
          %v3232 = vpop.f32.mrb[0].mxu0
          %v3233 = vadd.f32 0.0, %v3232
          %v3234 = vpop.f32.mrb[0].mxu0
          %3235 = vdwg.mxu0
          %v3236 = vld [vmem:[#allocation4] sm:$0xff]
          %v3237 = vld [vmem:[#allocation4 + $0x8] sm:$0xff]
          %v3238 = vld [vmem:[#allocation4 + $0x10] sm:$0xff]
          %v3239 = vld [vmem:[#allocation4 + $0x18] sm:$0xff]
          %v3240 = vld [vmem:[#allocation4 + $0x20] sm:$0xff]
          %v3241 = vld [vmem:[#allocation4 + $0x28] sm:$0xff]
          %v3242 = vld [vmem:[#allocation4 + $0x30] sm:$0xff]
          %v3243 = vld [vmem:[#allocation4 + $0x38] sm:$0xff]
          %v3244 = vmul.f32 %v3236, %v3198
          %v3245 = vmul.f32 %v3237, %v3203
          %v3246 = vmul.f32 %v3238, %v3208
          %v3247 = vmul.f32 %v3239, %v3213
          %v3248 = vmul.f32 %v3240, %v3218
          %v3249 = vmul.f32 %v3241, %v3223
          %v3250 = vmul.f32 %v3242, %v3228
          %v3251 = vmul.f32 %v3243, %v3233
          %v3252 = vld [vmem:[#allocation15] sm:$0xff]
          %v3253 = vld [vmem:[#allocation15 + $0x8] sm:$0xff]
          %v3254 = vld [vmem:[#allocation15 + $0x10] sm:$0xff]
          %v3255 = vld [vmem:[#allocation15 + $0x18] sm:$0xff]
          %v3256 = vld [vmem:[#allocation15 + $0x20] sm:$0xff]
          %v3257 = vld [vmem:[#allocation15 + $0x28] sm:$0xff]
          %v3258 = vld [vmem:[#allocation15 + $0x30] sm:$0xff]
          %v3259 = vld [vmem:[#allocation15 + $0x38] sm:$0xff]
          %v3260 = vld [vmem:[#allocation15 + $0x40] sm:$0xff]
          %v3261 = vld [vmem:[#allocation15 + $0x48] sm:$0xff]
          %v3262 = vld [vmem:[#allocation15 + $0x50] sm:$0xff]
          %v3263 = vld [vmem:[#allocation15 + $0x58] sm:$0xff]
          %v3264 = vld [vmem:[#allocation15 + $0x60] sm:$0xff]
          %v3265 = vld [vmem:[#allocation15 + $0x68] sm:$0xff]
          %v3266 = vld [vmem:[#allocation15 + $0x70] sm:$0xff]
          %v3267 = vld [vmem:[#allocation15 + $0x78] sm:$0xff]
          %v3268 = vld [vmem:[%s520] sm:$0xff]
          %v3269 = vld [vmem:[%s520 + $0x8] sm:$0xff]
          %v3270 = vld [vmem:[%s520 + $0x10] sm:$0xff]
          %v3271 = vld [vmem:[%s520 + $0x18] sm:$0xff]
          %v3272 = vld [vmem:[%s520 + $0x20] sm:$0xff]
          %v3273 = vld [vmem:[%s520 + $0x28] sm:$0xff]
          %v3274 = vld [vmem:[%s520 + $0x30] sm:$0xff]
          %v3275 = vld [vmem:[%s520 + $0x38] sm:$0xff]
          %v3276 = vld [vmem:[#allocation17] sm:$0xff]
          %v3277 = vld [vmem:[#allocation17 + $0x8] sm:$0xff]
          %v3278 = vld [vmem:[#allocation17 + $0x10] sm:$0xff]
          %v3279 = vld [vmem:[#allocation17 + $0x18] sm:$0xff]
          %v3280 = vld [vmem:[#allocation17 + $0x20] sm:$0xff]
          %v3281 = vld [vmem:[#allocation17 + $0x28] sm:$0xff]
          %v3282 = vld [vmem:[#allocation17 + $0x30] sm:$0xff]
          %v3283 = vld [vmem:[#allocation17 + $0x38] sm:$0xff]
          %v3284 = vld [vmem:[#allocation17 + $0x40] sm:$0xff]
          %v3285 = vld [vmem:[#allocation17 + $0x48] sm:$0xff]
          %v3286 = vld [vmem:[#allocation17 + $0x50] sm:$0xff]
          %v3287 = vld [vmem:[#allocation17 + $0x58] sm:$0xff]
          %v3288 = vld [vmem:[#allocation17 + $0x60] sm:$0xff]
          %v3289 = vld [vmem:[#allocation17 + $0x68] sm:$0xff]
          %v3290 = vld [vmem:[#allocation17 + $0x70] sm:$0xff]
          %v3291 = vld [vmem:[#allocation17 + $0x78] sm:$0xff]
          %3292 = vmatprep.subr.mxu0 0.0
          %3293 = vmatpush1.msra.mxu0 %v3276
          %3294 = vmatprep.subr.mxu0 0.0
          %3295 = vmatpush1.msra.mxu0 %v3277
          %3296 = vmatprep.subr.mxu0 0.0
          %3297 = vmatpush1.msra.mxu0 %v3278
          %3298 = vmatprep.subr.mxu0 0.0
          %3299 = vmatpush1.msra.mxu0 %v3279
          %3300 = vmatprep.subr.mxu0 0.0
          %3301 = vmatpush1.msra.mxu0 %v3280
          %3302 = vmatprep.subr.mxu0 0.0
          %3303 = vmatpush1.msra.mxu0 %v3281
          %3304 = vmatprep.subr.mxu0 0.0
          %3305 = vmatpush1.msra.mxu0 %v3282
          %3306 = vmatprep.subr.mxu0 0.0
          %3307 = vmatpush1.msra.mxu0 %v3283
          %3308 = vmatprep.subr.mxu0 0.0
          %3309 = vmatpush1.msra.mxu0 %v3284
          %3310 = vmatprep.subr.mxu0 0.0
          %3311 = vmatpush1.msra.mxu0 %v3285
          %3312 = vmatprep.subr.mxu0 0.0
          %3313 = vmatpush1.msra.mxu0 %v3286
          %3314 = vmatprep.subr.mxu0 0.0
          %3315 = vmatpush1.msra.mxu0 %v3287
          %3316 = vmatprep.subr.mxu0 0.0
          %3317 = vmatpush1.msra.mxu0 %v3288
          %3318 = vmatprep.subr.mxu0 0.0
          %3319 = vmatpush1.msra.mxu0 %v3289
          %3320 = vmatprep.subr.mxu0 0.0
          %3321 = vmatpush1.msra.mxu0 %v3290
          %3322 = vmatprep.subr.mxu0 0.0
          %3323 = vmatpush1.msra.mxu0 %v3291
          %3324 = vmatprep.subr.mxu0 0.0
          %3325 = vmatpush1.msra.mxu0 0.0
          %3326 = vmatprep.subr.mxu0 0.0
          %3327 = vmatpush1.msra.mxu0 0.0
          %3328 = vmatprep.subr.mxu0 0.0
          %3329 = vmatpush1.msra.mxu0 0.0
          %3330 = vmatprep.subr.mxu0 0.0
          %3331 = vmatpush1.msra.mxu0 0.0
          %3332 = vmatprep.subr.mxu0 0.0
          %3333 = vmatpush1.msra.mxu0 0.0
          %3334 = vmatprep.subr.mxu0 0.0
          %3335 = vmatpush1.msra.mxu0 0.0
          %3336 = vmatprep.subr.mxu0 0.0
          %3337 = vmatpush1.msra.mxu0 0.0
          %3338 = vmatprep.subr.mxu0 0.0
          %3339 = vmatpush1.msra.mxu0 0.0
          %3340 = vmatprep.subr.mxu0 0.0
          %3341 = vmatpush1.msra.mxu0 0.0
          %3342 = vmatprep.subr.mxu0 0.0
          %3343 = vmatpush1.msra.mxu0 0.0
          %3344 = vmatprep.subr.mxu0 0.0
          %3345 = vmatpush1.msra.mxu0 0.0
          %3346 = vmatprep.subr.mxu0 0.0
          %3347 = vmatpush1.msra.mxu0 0.0
          %3348 = vmatprep.subr.mxu0 0.0
          %3349 = vmatpush1.msra.mxu0 0.0
          %3350 = vmatprep.subr.mxu0 0.0
          %3351 = vmatpush1.msra.mxu0 0.0
          %3352 = vmatprep.subr.mxu0 0.0
          %3353 = vmatpush1.msra.mxu0 0.0
          %3354 = vmatprep.subr.mxu0 0.0
          %3355 = vmatpush1.msra.mxu0 0.0
          %3356 = vmatprep.mubr.f32.mxu0 0.0
          %3357 = vmatmul.mubr.f32.gmra.mrb[0].mxu0 %v3268
          %v3358 = vpop.f32.mrb[0].mxu0
          %v3359 = vadd.f32 0.0, %v3358
          %v3360 = vpop.f32.mrb[0].mxu0
          %3361 = vmatprep.mubr.f32.mxu0 0.0
          %3362 = vmatmul.mubr.f32.gmra.mrb[0].mxu0 %v3269
          %v3363 = vpop.f32.mrb[0].mxu0
          %v3364 = vadd.f32 0.0, %v3363
          %v3365 = vpop.f32.mrb[0].mxu0
          %3366 = vmatprep.mubr.f32.mxu0 0.0
          %3367 = vmatmul.mubr.f32.gmra.mrb[0].mxu0 %v3270
          %v3368 = vpop.f32.mrb[0].mxu0
          %v3369 = vadd.f32 0.0, %v3368
          %v3370 = vpop.f32.mrb[0].mxu0
          %3371 = vmatprep.mubr.f32.mxu0 0.0
          %3372 = vmatmul.mubr.f32.gmra.mrb[0].mxu0 %v3271
          %v3373 = vpop.f32.mrb[0].mxu0
          %v3374 = vadd.f32 0.0, %v3373
          %v3375 = vpop.f32.mrb[0].mxu0
          %3376 = vmatprep.mubr.f32.mxu0 0.0
          %3377 = vmatmul.mubr.f32.gmra.mrb[0].mxu0 %v3272
          %v3378 = vpop.f32.mrb[0].mxu0
          %v3379 = vadd.f32 0.0, %v3378
          %v3380 = vpop.f32.mrb[0].mxu0
          %3381 = vmatprep.mubr.f32.mxu0 0.0
          %3382 = vmatmul.mubr.f32.gmra.mrb[0].mxu0 %v3273
          %v3383 = vpop.f32.mrb[0].mxu0
          %v3384 = vadd.f32 0.0, %v3383
          %v3385 = vpop.f32.mrb[0].mxu0
          %3386 = vmatprep.mubr.f32.mxu0 0.0
          %3387 = vmatmul.mubr.f32.gmra.mrb[0].mxu0 %v3274
          %v3388 = vpop.f32.mrb[0].mxu0
          %v3389 = vadd.f32 0.0, %v3388
          %v3390 = vpop.f32.mrb[0].mxu0
          %3391 = vmatprep.mubr.f32.mxu0 0.0
          %3392 = vmatmul.mubr.f32.gmra.mrb[0].mxu0 %v3275
          %v3393 = vpop.f32.mrb[0].mxu0
          %v3394 = vadd.f32 0.0, %v3393
          %v3395 = vpop.f32.mrb[0].mxu0
          %3396 = vdwg.mxu0
          %3397 = vmatprep.subr.mxu0 0.0
          %3398 = vmatpush1.msra.mxu0 %v3252
          %3399 = vmatprep.subr.mxu0 0.0
          %3400 = vmatpush1.msra.mxu0 %v3253
          %3401 = vmatprep.subr.mxu0 0.0
          %3402 = vmatpush1.msra.mxu0 %v3254
          %3403 = vmatprep.subr.mxu0 0.0
          %3404 = vmatpush1.msra.mxu0 %v3255
          %3405 = vmatprep.subr.mxu0 0.0
          %3406 = vmatpush1.msra.mxu0 %v3256
          %3407 = vmatprep.subr.mxu0 0.0
          %3408 = vmatpush1.msra.mxu0 %v3257
          %3409 = vmatprep.subr.mxu0 0.0
          %3410 = vmatpush1.msra.mxu0 %v3258
          %3411 = vmatprep.subr.mxu0 0.0
          %3412 = vmatpush1.msra.mxu0 %v3259
          %3413 = vmatprep.subr.mxu0 0.0
          %3414 = vmatpush1.msra.mxu0 %v3260
          %3415 = vmatprep.subr.mxu0 0.0
          %3416 = vmatpush1.msra.mxu0 %v3261
          %3417 = vmatprep.subr.mxu0 0.0
          %3418 = vmatpush1.msra.mxu0 %v3262
          %3419 = vmatprep.subr.mxu0 0.0
          %3420 = vmatpush1.msra.mxu0 %v3263
          %3421 = vmatprep.subr.mxu0 0.0
          %3422 = vmatpush1.msra.mxu0 %v3264
          %3423 = vmatprep.subr.mxu0 0.0
          %3424 = vmatpush1.msra.mxu0 %v3265
          %3425 = vmatprep.subr.mxu0 0.0
          %3426 = vmatpush1.msra.mxu0 %v3266
          %3427 = vmatprep.subr.mxu0 0.0
          %3428 = vmatpush1.msra.mxu0 %v3267
          %3429 = vmatprep.subr.mxu0 0.0
          %3430 = vmatpush1.msra.mxu0 0.0
          %3431 = vmatprep.subr.mxu0 0.0
          %3432 = vmatpush1.msra.mxu0 0.0
          %3433 = vmatprep.subr.mxu0 0.0
          %3434 = vmatpush1.msra.mxu0 0.0
          %3435 = vmatprep.subr.mxu0 0.0
          %3436 = vmatpush1.msra.mxu0 0.0
          %3437 = vmatprep.subr.mxu0 0.0
          %3438 = vmatpush1.msra.mxu0 0.0
          %3439 = vmatprep.subr.mxu0 0.0
          %3440 = vmatpush1.msra.mxu0 0.0
          %3441 = vmatprep.subr.mxu0 0.0
          %3442 = vmatpush1.msra.mxu0 0.0
          %3443 = vmatprep.subr.mxu0 0.0
          %3444 = vmatpush1.msra.mxu0 0.0
          %3445 = vmatprep.subr.mxu0 0.0
          %3446 = vmatpush1.msra.mxu0 0.0
          %3447 = vmatprep.subr.mxu0 0.0
          %3448 = vmatpush1.msra.mxu0 0.0
          %3449 = vmatprep.subr.mxu0 0.0
          %3450 = vmatpush1.msra.mxu0 0.0
          %3451 = vmatprep.subr.mxu0 0.0
          %3452 = vmatpush1.msra.mxu0 0.0
          %3453 = vmatprep.subr.mxu0 0.0
          %3454 = vmatpush1.msra.mxu0 0.0
          %3455 = vmatprep.subr.mxu0 0.0
          %3456 = vmatpush1.msra.mxu0 0.0
          %3457 = vmatprep.subr.mxu0 0.0
          %3458 = vmatpush1.msra.mxu0 0.0
          %3459 = vmatprep.subr.mxu0 0.0
          %3460 = vmatpush1.msra.mxu0 0.0
          %3461 = vmatprep.mubr.f32.mxu0 0.0
          %3462 = vmatmul.mubr.f32.gmra.mrb[0].mxu0 %v3244
          %v3463 = vpop.f32.mrb[0].mxu0
          %v3464 = vadd.f32 %v3359, %v3463
          %v3465 = vpop.f32.mrb[0].mxu0
          %3466 = vmatprep.mubr.f32.mxu0 0.0
          %3467 = vmatmul.mubr.f32.gmra.mrb[0].mxu0 %v3245
          %v3468 = vpop.f32.mrb[0].mxu0
          %v3469 = vadd.f32 %v3364, %v3468
          %v3470 = vpop.f32.mrb[0].mxu0
          %3471 = vmatprep.mubr.f32.mxu0 0.0
          %3472 = vmatmul.mubr.f32.gmra.mrb[0].mxu0 %v3246
          %v3473 = vpop.f32.mrb[0].mxu0
          %v3474 = vadd.f32 %v3369, %v3473
          %v3475 = vpop.f32.mrb[0].mxu0
          %3476 = vmatprep.mubr.f32.mxu0 0.0
          %3477 = vmatmul.mubr.f32.gmra.mrb[0].mxu0 %v3247
          %v3478 = vpop.f32.mrb[0].mxu0
          %v3479 = vadd.f32 %v3374, %v3478
          %v3480 = vpop.f32.mrb[0].mxu0
          %3481 = vmatprep.mubr.f32.mxu0 0.0
          %3482 = vmatmul.mubr.f32.gmra.mrb[0].mxu0 %v3248
          %v3483 = vpop.f32.mrb[0].mxu0
          %v3484 = vadd.f32 %v3379, %v3483
          %v3485 = vpop.f32.mrb[0].mxu0
          %3486 = vmatprep.mubr.f32.mxu0 0.0
          %3487 = vmatmul.mubr.f32.gmra.mrb[0].mxu0 %v3249
          %v3488 = vpop.f32.mrb[0].mxu0
          %v3489 = vadd.f32 %v3384, %v3488
          %v3490 = vpop.f32.mrb[0].mxu0
          %3491 = vmatprep.mubr.f32.mxu0 0.0
          %3492 = vmatmul.mubr.f32.gmra.mrb[0].mxu0 %v3250
          %v3493 = vpop.f32.mrb[0].mxu0
          %v3494 = vadd.f32 %v3389, %v3493
          %v3495 = vpop.f32.mrb[0].mxu0
          %3496 = vmatprep.mubr.f32.mxu0 0.0
          %3497 = vmatmul.mubr.f32.gmra.mrb[0].mxu0 %v3251
          %v3498 = vpop.f32.mrb[0].mxu0
          %v3499 = vadd.f32 %v3394, %v3498
          %v3500 = vpop.f32.mrb[0].mxu0
          %3501 = vdwg.mxu0
          %v3502 = vld [vmem:[%s11] sm:$0x1]
          %v3504 = vlaneseq
          %v3505 = vshrl.u32 %v3504, 7
          %v3506 = vsub.s32 0, %v3505
          %v3507 = vrot.slane %v3502, %v3506
          %v3509 = vadd.f32 %v3464, %v3507
          %v3510 = vadd.f32 %v3469, %v3507
          %v3511 = vadd.f32 %v3474, %v3507
          %v3512 = vadd.f32 %v3479, %v3507
          %v3513 = vadd.f32 %v3484, %v3507
          %v3514 = vadd.f32 %v3489, %v3507
          %v3515 = vadd.f32 %v3494, %v3507
          %v3516 = vadd.f32 %v3499, %v3507
          %vm3517 = vcmp.gt.f32.partialorder %v3509, 0.0
          %vm3518 = vcmp.gt.f32.partialorder %v3510, 0.0
          %vm3519 = vcmp.gt.f32.partialorder %v3511, 0.0
          %vm3520 = vcmp.gt.f32.partialorder %v3512, 0.0
          %vm3521 = vcmp.gt.f32.partialorder %v3513, 0.0
          %vm3522 = vcmp.gt.f32.partialorder %v3514, 0.0
          %vm3523 = vcmp.gt.f32.partialorder %v3515, 0.0
          %vm3524 = vcmp.gt.f32.partialorder %v3516, 0.0
          %v3525 = vmin.f32 %v3509, 0.0
          %v3526 = vmin.f32 %v3510, 0.0
          %v3527 = vmin.f32 %v3511, 0.0
          %v3528 = vmin.f32 %v3512, 0.0
          %v3529 = vmin.f32 %v3513, 0.0
          %v3530 = vmin.f32 %v3514, 0.0
          %v3531 = vmin.f32 %v3515, 0.0
          %v3532 = vmin.f32 %v3516, 0.0
          %v3533 = vmul.f32 %v3525, 1.442695
          %v3534 = vpow.pop %v3533
          %v3535 = vmul.f32 %v3526, 1.442695
          %v3536 = vpow.pop %v3535
          %v3537 = vmul.f32 %v3527, 1.442695
          %v3538 = vpow.pop %v3537
          %v3539 = vmul.f32 %v3528, 1.442695
          %v3540 = vpow.pop %v3539
          %v3541 = vmul.f32 %v3529, 1.442695
          %v3542 = vpow.pop %v3541
          %v3543 = vmul.f32 %v3530, 1.442695
          %v3544 = vpow.pop %v3543
          %v3545 = vmul.f32 %v3531, 1.442695
          %v3546 = vpow.pop %v3545
          %v3547 = vmul.f32 %v3532, 1.442695
          %v3548 = vpow.pop %v3547
          %v3549 = vsub.f32 %v3534, 1.0
          %v3550 = vsub.f32 %v3536, 1.0
          %v3551 = vsub.f32 %v3538, 1.0
          %v3552 = vsub.f32 %v3540, 1.0
          %v3553 = vsub.f32 %v3542, 1.0
          %v3554 = vsub.f32 %v3544, 1.0
          %v3555 = vsub.f32 %v3546, 1.0
          %v3556 = vsub.f32 %v3548, 1.0
          %v3557 = vsel %vm3517, %v3509, %v3549
          %v3558 = vsel %vm3518, %v3510, %v3550
          %v3559 = vsel %vm3519, %v3511, %v3551
          %v3560 = vsel %vm3520, %v3512, %v3552
          %v3561 = vsel %vm3521, %v3513, %v3553
          %v3562 = vsel %vm3522, %v3514, %v3554
          %v3563 = vsel %vm3523, %v3515, %v3555
          %v3564 = vsel %vm3524, %v3516, %v3556
          %3565 = vst [vmem:[%s593] sm:$0xff] %v3557
          %3566 = vst [vmem:[%s593 + $0x8] sm:$0xff] %v3558
          %3567 = vst [vmem:[%s593 + $0x10] sm:$0xff] %v3559
          %3568 = vst [vmem:[%s593 + $0x18] sm:$0xff] %v3560
          %3569 = vst [vmem:[%s593 + $0x20] sm:$0xff] %v3561
          %3570 = vst [vmem:[%s593 + $0x28] sm:$0xff] %v3562
          %3571 = vst [vmem:[%s593 + $0x30] sm:$0xff] %v3563
          %3572 = vst [vmem:[%s593 + $0x38] sm:$0xff] %v3564
        $region130: #{tpu_custom_call.1} parent=93 // pred_fallthru
          _
        %s3573 = sand.u32 %s320, 1
        %s3574 = scalar_lea.sflag [#allocation10], %s3573
        %s3575 = sand.u32 %s320, 1
        %s3576 = smul.addr %s3575, 64
        %s3577 = scalar_lea.vmem [#allocation18], %s3576
        // Predicated region
        $region131: #{tpu_custom_call.1} parent=93 // pred_check
          %p3578 = pneg %p330
        $region132: #{tpu_custom_call.1} parent=93 // pred_check_branch
          %3580 = sbr.rel (%p3578) target = $region134
        $region133: #{tpu_custom_call.1} parent=93 // pred_region
          %s3581 = smul.u32 8, %s45
          %s3583 = ssub.s32 1024, 1024
          %3584 = vsyncadd %s3574, %s3583
          %s3585 = smul.addr %s3581, 128
          %s3586 = scalar_lea.hbm %s12, %s3585
          %s3587 = sshll.u32 %s3577, 4
          %s3588 = int_to_ptr.vmem [resolvable:$true] %s3587
          %3593 = dma.vmem_to_hbm [thread:$0]  %s3588, 1024, %s3586, %s3574, 128, 128, 8
        $region134: #{tpu_custom_call.1} parent=93 // pred_fallthru
          _
      $region94: #{tpu_custom_call.1} parent=5 // pred_fallthru
        _
      %p3594 = scmp.le.s32.totalorder 2, %s36
      // Predicated region
      $region135: #{tpu_custom_call.1} parent=5 // pred_check
        %p3595 = pneg %p3594
      $region136: #{tpu_custom_call.1} parent=5 // pred_check_branch
        %3597 = sbr.rel (%p3595) target = $region138
      $region137: #{tpu_custom_call.1} parent=5 // pred_region
        %s3598 = ssub.s32 %s36, 2
        // Predicated region
        $region139: #{tpu_custom_call.1} parent=137 // pred_check
          %p3599 = pneg %p336
        $region140: #{tpu_custom_call.1} parent=137 // pred_check_branch
          %3601 = sbr.rel (%p3599) target = $region142
        $region141: #{tpu_custom_call.1} parent=137 // pred_region
          %s3602 = sand.u32 %s321, 1
          %s3603 = scalar_lea.sflag [#allocation10], %s3602
          %s3604 = sand.u32 %s321, 1
          %s3605 = smul.addr %s3604, 64
          %s3606 = scalar_lea.vmem [#allocation18], %s3605
          %3607 = dma.done %s3603, 1024
        $region142: #{tpu_custom_call.1} parent=137 // pred_fallthru
          _
      $region138: #{tpu_custom_call.1} parent=5 // pred_fallthru
        _
    $region6: #{tpu_custom_call.1} parent=1 // loop_footer
      %s40 = sadd.s32 1, %s36
    $region7: #{tpu_custom_call.1} parent=1 // loop_footer_branch
      %35 = sbr.rel target = $region3
    $region8: #{tpu_custom_call.1} parent=1 // loop_exit
      _
    %3608 = vsyncpa [#allocation9], 1
    %s3609 = scalar_lea.sflag [#allocation9], 1
    %3610 = vsyncpa %s3609, 1
    %3611 = vsyncpa [#allocation12], 1
    %s3612 = scalar_lea.sflag [#allocation12], 1
    %3613 = vsyncpa %s3612, 1
    %3614 = vsyncpa [#allocation16], 1
    %3615 = vsyncpa [#allocation10], 1
    %s3616 = scalar_lea.sflag [#allocation10], 1
    %3617 = vsyncpa %s3616, 1

</llo_original>
